<compile_context>
chip_gen: v7x
topology: tpu7x:2x2x1
jax: 0.10.0
libtpu: 0.0.40
codegen_flags: <defaults>
</compile_context>

<pallas_src>
import functools

import jax
import jax.numpy as jnp
from jax.experimental import pallas as pl
from jax.experimental.pallas import tpu as pltpu

NEG_SLOPE = 0.01            # nn.LeakyReLU default
EPS = 1e-5                  # BatchNorm default eps
C_PAD = 128                 # channel dim padded 120 -> 128 (lane-dense)
C_IN = 4                    # real input channels
H_IN = 32                   # input height implied by the flatten(120)
SLAB0 = 64                  # rows per sample at layer 0 (even, >= H_IN+1, /2^4 even)
BASE = 8                    # first data row (row BASE-1 stays zero = top pad)
TAIL = 8                    # spare zero rows at the end of the slab buffer
POOL_FLAGS = (True, True, True, False, True, False, True)   # a0..a6
COMPUTE_DTYPE = jnp.bfloat16                                 # matmul operand dtype


def _layer_schedule():
    """(slab, height, pool) per conv layer; slab halves exactly when pooling."""
    sched = []
    s, h = SLAB0, H_IN
    for pool in POOL_FLAGS:
        sched.append((s, h, pool))
        if pool:
            s //= 2
            h //= 2
    return tuple(sched), s, h       # final slab = 2, final height = 1


# ----------------------------------------------------------------------------
# Fused kernel: TB samples per grid step through the whole network
# ----------------------------------------------------------------------------
def _make_kernel(tb):
    schedule, s_final, _ = _layer_schedule()

    def kernel(x_ref, wc_ref, sc_ref, bc_ref, w1_ref, s1_ref, b1_ref,
               w2_ref, b2_ref, o_ref, buf_ref):
        # x_ref : (tb, 32, 4) f32      channels-last samples (no lane padding)
        # wc_ref: (21, 128, 128) bf16  conv weights, row = 3*layer + tap
        # sc/bc : (7, 1, 128) f32      folded BN scale / bias per conv layer
        # w1    : (128,128) bf16 ; s1,b1: (1,128) f32   head Linear(120,120)+BN1d
        # w2    : (1,128) f32 ; b2: (1,1) f32           final Linear(120,1)
        # o_ref : (tb, 128) f32        scalar broadcast along lanes (lane 0 used)
        # buf_ref: (BASE + tb*SLAB0 + TAIL, 128) f32 slab scratch.
        #   sample s of the current layer occupies rows BASE + s*S .. + S-1:
        #   rows 0..H-1 = data, remaining rows (and row BASE-1) stay zero and
        #   provide the Conv2d padding=(1,0).

        # Single zero-fill per grid step (pad rows / pad lanes / stale state).
        buf_ref[...] = jnp.zeros_like(buf_ref)

        # Scatter the tb samples into their layer-0 slabs.
        for s in range(tb):
            buf_ref[pl.ds(BASE + s * SLAB0, H_IN), 0:C_IN] = x_ref[s]

        for layer, (S, H, pool) in enumerate(schedule):
            M = tb * S
            # Conv2d((3,1), pad=(1,0)) = 3 shifted-window matmuls over ALL samples
            # at once (zero rows between slabs supply the padding).
            acc = jnp.dot(buf_ref[pl.ds(BASE - 1, M), :].astype(COMPUTE_DTYPE),
                          wc_ref[3 * layer + 0], preferred_element_type=jnp.float32)
            acc += jnp.dot(buf_ref[pl.ds(BASE, M), :].astype(COMPUTE_DTYPE),
                           wc_ref[3 * layer + 1], preferred_element_type=jnp.float32)
            acc += jnp.dot(buf_ref[pl.ds(BASE + 1, M), :].astype(COMPUTE_DTYPE),
                           wc_ref[3 * layer + 2], preferred_element_type=jnp.float32)
            y = acc * sc_ref[layer] + bc_ref[layer]          # folded BatchNorm2d
            y = jnp.where(y > 0, y, NEG_SLOPE * y)           # LeakyReLU
            # Zero the between-slab rows so they keep acting as conv padding.
            row = jax.lax.broadcasted_iota(jnp.int32, (M, 1), 0)
            y = jnp.where((row & (S - 1)) < H, y, 0.0)       # S is a power of 2
            buf_ref[pl.ds(BASE, M), :] = y                   # aligned bulk store
            if pool:                                         # MaxPool2d((2,1))
                m2 = M // 2
                pooled = jnp.maximum(buf_ref[pl.ds(BASE, m2, stride=2), :],
                                     buf_ref[pl.ds(BASE + 1, m2, stride=2), :])
                buf_ref[pl.ds(BASE, m2), :] = pooled         # slab halves with S
            # Dropout = identity in eval mode.

        # Head: flatten(120) -> Linear(120,120) + BN1d + LeakyReLU -> Linear(120,1)
        feat = buf_ref[pl.ds(BASE, tb, stride=s_final), :].astype(COMPUTE_DTYPE)
        h = jnp.dot(feat, w1_ref[...], preferred_element_type=jnp.float32)
        h = h * s1_ref[...] + b1_ref[...]
        h = jnp.where(h > 0, h, NEG_SLOPE * h)
        out = jnp.sum(h * w2_ref[...], axis=1, keepdims=True) + b2_ref[...]
        o_ref[...] = jnp.broadcast_to(out, o_ref.shape)      # lane-dense store

    return kernel


# ----------------------------------------------------------------------------
# Parameter packing (pad channels to 128, stack conv taps, bf16 matmul weights)
# ----------------------------------------------------------------------------
def _pad_to(x, size, axis):
    pad = [(0, 0)] * x.ndim
    pad[axis] = (0, size - x.shape[axis])
    return jnp.pad(x, pad)


def pack_params(params):
    wc, sc, bc = [], [], []
    for w, scale, bias in params["convs"]:
        wc.append(_pad_to(_pad_to(w, C_PAD, 1), C_PAD, 2))      # (3, 128, 128)
        sc.append(_pad_to(scale, C_PAD, 0).reshape(1, C_PAD))
        bc.append(_pad_to(bias, C_PAD, 0).reshape(1, C_PAD))
    w1, s1, b1, w2, b2 = params["head"]
    return dict(
        wc=jnp.concatenate(wc, axis=0).astype(COMPUTE_DTYPE),   # (21, 128, 128)
        sc=jnp.stack(sc), bc=jnp.stack(bc),                     # (7, 1, 128) f32
        w1=_pad_to(_pad_to(w1, C_PAD, 0), C_PAD, 1).astype(COMPUTE_DTYPE),
        s1=_pad_to(s1, C_PAD, 0).reshape(1, C_PAD),
        b1=_pad_to(b1, C_PAD, 0).reshape(1, C_PAD),
        w2=_pad_to(w2, C_PAD, 0).reshape(1, C_PAD),
        b2=b2.reshape(1, 1),
    )


def _full_spec(a):
    n = a.ndim
    return pl.BlockSpec(a.shape, lambda b: (0,) * n)     # resident, never re-fetched


# ----------------------------------------------------------------------------
# Forward pass: one pallas_call, grid over batch tiles ("parallel")
# ----------------------------------------------------------------------------
def cnn8_forward(x_nchw, packed, batch_tile=8):
    B, C, H, W = x_nchw.shape
    assert (C, H, W) == (C_IN, H_IN, 1), "CNN_8 requires NCHW input (B, 4, 32, 1)"
    tb = max(1, min(batch_tile, B))
    b_pad = pl.cdiv(B, tb) * tb
    x = jnp.transpose(x_nchw[..., 0], (0, 2, 1)).astype(jnp.float32)    # (B, 32, 4)
    if b_pad != B:
        x = jnp.pad(x, ((0, b_pad - B), (0, 0), (0, 0)))
    rows = BASE + tb * SLAB0 + TAIL

    out = pl.pallas_call(
        _make_kernel(tb),
        grid=(b_pad // tb,),
        out_shape=jax.ShapeDtypeStruct((b_pad, C_PAD), jnp.float32),
        in_specs=[
            pl.BlockSpec((tb, H_IN, C_IN), lambda b: (b, 0, 0)),
            _full_spec(packed["wc"]), _full_spec(packed["sc"]), _full_spec(packed["bc"]),
            _full_spec(packed["w1"]), _full_spec(packed["s1"]), _full_spec(packed["b1"]),
            _full_spec(packed["w2"]), _full_spec(packed["b2"]),
        ],
        out_specs=pl.BlockSpec((tb, C_PAD), lambda b: (b, 0)),
        scratch_shapes=[pltpu.VMEM((rows, C_PAD), jnp.float32)],
        compiler_params=pltpu.CompilerParams(dimension_semantics=("parallel",)),
    )(x, packed["wc"], packed["sc"], packed["bc"],
      packed["w1"], packed["s1"], packed["b1"], packed["w2"], packed["b2"])
    return out[:B, :1]                                                  # (B, 1)


# ----------------------------------------------------------------------------
# Deterministic synthetic parameters (shapes follow the nn.Module __init__)
# ----------------------------------------------------------------------------
def _make_conv_bn(key, cin, cout):
    ks = jax.random.split(key, 6)
    w = jax.random.normal(ks[0], (3, cin, cout), jnp.float32) / jnp.sqrt(3.0 * cin)
    conv_b = 0.05 * jax.random.normal(ks[1], (cout,), jnp.float32)
    gamma = 1.0 + 0.1 * jax.random.normal(ks[2], (cout,), jnp.float32)
    beta = 0.05 * jax.random.normal(ks[3], (cout,), jnp.float32)
    run_mean = 0.05 * jax.random.normal(ks[4], (cout,), jnp.float32)
    run_var = 0.5 + jax.random.uniform(ks[5], (cout,), jnp.float32)
    scale = gamma / jnp.sqrt(run_var + EPS)
    bias = (conv_b - run_mean) * scale + beta
    return w, scale, bias


def init_params(key):
    keys = jax.random.split(key, 9)
    conv_io = [(4, 120)] + [(120, 120)] * 6                    # a0 .. a6
    convs = [_make_conv_bn(k, ci, co) for k, (ci, co) in zip(keys[:7], conv_io)]

    kh = jax.random.split(keys[7], 6)
    w1 = jax.random.normal(kh[0], (120, 120), jnp.float32) / jnp.sqrt(120.0)
    lin_b1 = 0.05 * jax.random.normal(kh[1], (120,), jnp.float32)
    gamma = 1.0 + 0.1 * jax.random.normal(kh[2], (120,), jnp.float32)
    beta = 0.05 * jax.random.normal(kh[3], (120,), jnp.float32)
    run_mean = 0.05 * jax.random.normal(kh[4], (120,), jnp.float32)
    run_var = 0.5 + jax.random.uniform(kh[5], (120,), jnp.float32)
    s1 = gamma / jnp.sqrt(run_var + EPS)
    b1 = (lin_b1 - run_mean) * s1 + beta

    kl = jax.random.split(keys[8], 2)
    w2 = jax.random.normal(kl[0], (120,), jnp.float32) / jnp.sqrt(120.0)
    b2 = 0.05 * jax.random.normal(kl[1], (1,), jnp.float32)
    return {"convs": convs, "head": (w1, s1, b1, w2, b2)}


# ----------------------------------------------------------------------------
# Pure-JAX reference (same bf16-operand / f32-accumulate matmul precision)
# ----------------------------------------------------------------------------
def cnn8_reference(x_nchw, params):
    x = jnp.transpose(x_nchw[..., 0], (0, 2, 1)).astype(jnp.float32)   # (B, 32, 4)
    for (w, scale, bias), pool in zip(params["convs"], POOL_FLAGS):
        B, H, _ = x.shape
        xp = jnp.pad(x, ((0, 0), (1, 1), (0, 0)))
        acc = sum(jnp.einsum("bhc,cd->bhd",
                             xp[:, k:k + H, :].astype(COMPUTE_DTYPE),
                             w[k].astype(COMPUTE_DTYPE),
                             preferred_element_type=jnp.float32)
                  for k in range(3))
        y = acc * scale + bias
        y = jnp.where(y > 0, y, NEG_SLOPE * y)
        if pool:
            y = jnp.maximum(y[:, 0::2, :], y[:, 1::2, :])
        x = y
    w1, s1, b1, w2, b2 = params["head"]
    feat = x.reshape(x.shape[0], -1)                                    # (B, 120)
    h = jnp.dot(feat.astype(COMPUTE_DTYPE), w1.astype(COMPUTE_DTYPE),
                preferred_element_type=jnp.float32)
    h = h * s1 + b1
    h = jnp.where(h > 0, h, NEG_SLOPE * h)
    return jnp.sum(h * w2[None, :], axis=1, keepdims=True) + b2[None, :]


if __name__ == "__main__":
    key = jax.random.PRNGKey(0)
    kx, kp = jax.random.split(key)
    x = jax.random.normal(kx, (2, C_IN, H_IN, 1), jnp.float32)   # NCHW, W must be 1
    params = init_params(kp)
    packed = pack_params(params)

    fwd = jax.jit(functools.partial(cnn8_forward, batch_tile=8))
    out = fwd(x, packed)
    jax.block_until_ready(out)
    assert out.shape == (2, 1) and out.dtype == jnp.float32

    ref = cnn8_reference(x, params)
    assert bool(jnp.allclose(out, ref, rtol=1e-2, atol=1e-2)), (out, ref)
    print("KERNEL_OK")
</pallas_src>

<mosaic_0001>
module attributes {stable_mosaic.version = 11 : i64} {
  func.func @kernel(%arg0: i32, %arg1: memref<2x32x4xf32, #tpu.memory_space<vmem>>, %arg2: memref<21x128x128xbf16, #tpu.memory_space<vmem>>, %arg3: memref<7x1x128xf32, #tpu.memory_space<vmem>>, %arg4: memref<7x1x128xf32, #tpu.memory_space<vmem>>, %arg5: memref<128x128xbf16, #tpu.memory_space<vmem>>, %arg6: memref<1x128xf32, #tpu.memory_space<vmem>>, %arg7: memref<1x128xf32, #tpu.memory_space<vmem>>, %arg8: memref<1x128xf32, #tpu.memory_space<vmem>>, %arg9: memref<1x1xf32, #tpu.memory_space<vmem>>, %arg10: memref<2x128xf32, #tpu.memory_space<vmem>>, %arg11: memref<144x128xf32, #tpu.memory_space<vmem>>) attributes {dimension_semantics = [#tpu.dimension_semantics<parallel>], iteration_bounds = array<i64: 1>, scalar_prefetch = 0 : i64, scratch_operands = 1 : i64, tpu.core_type = #tpu.core_type<tc>, window_params = [{transform_indices = @transform_0, window_bounds = array<i64: 2, 32, 4>}, {pipeline_mode = #tpu.pipeline_mode<synchronous>, transform_indices = @transform_1, window_bounds = array<i64: 21, 128, 128>}, {pipeline_mode = #tpu.pipeline_mode<synchronous>, transform_indices = @transform_2, window_bounds = array<i64: 7, 1, 128>}, {pipeline_mode = #tpu.pipeline_mode<synchronous>, transform_indices = @transform_3, window_bounds = array<i64: 7, 1, 128>}, {pipeline_mode = #tpu.pipeline_mode<synchronous>, transform_indices = @transform_4, window_bounds = array<i64: 128, 128>}, {pipeline_mode = #tpu.pipeline_mode<synchronous>, transform_indices = @transform_5, window_bounds = array<i64: 1, 128>}, {pipeline_mode = #tpu.pipeline_mode<synchronous>, transform_indices = @transform_6, window_bounds = array<i64: 1, 128>}, {pipeline_mode = #tpu.pipeline_mode<synchronous>, transform_indices = @transform_7, window_bounds = array<i64: 1, 128>}, {pipeline_mode = #tpu.pipeline_mode<synchronous>, transform_indices = @transform_8, window_bounds = array<i64: 1, 1>}, {transform_indices = @transform_9, window_bounds = array<i64: 2, 128>}]} {
    %cst = arith.constant 0.000000e+00 : f32
    %0 = vector.broadcast %cst : f32 to vector<144x128xf32>
    %c0 = arith.constant 0 : index
    %c0_0 = arith.constant 0 : index
    %1 = vector.load %arg11[%c0, %c0_0] : memref<144x128xf32, #tpu.memory_space<vmem>>, vector<144x128xf32>
    tpu.vector_store %arg11[%c0, %c0_0], %0 {strides = array<i32>} : memref<144x128xf32, #tpu.memory_space<vmem>>, vector<144x128xf32>,
    %c0_1 = arith.constant 0 : index
    %c0_2 = arith.constant 0 : index
    %c0_3 = arith.constant 0 : index
    %2 = vector.load %arg1[%c0_1, %c0_2, %c0_3] : memref<2x32x4xf32, #tpu.memory_space<vmem>>, vector<1x32x4xf32>
    %3 = vector.shape_cast %2 : vector<1x32x4xf32> to vector<32x4xf32>
    %c8 = arith.constant 8 : index
    %c0_4 = arith.constant 0 : index
    %4 = vector.load %arg11[%c8, %c0_4] : memref<144x128xf32, #tpu.memory_space<vmem>>, vector<32x4xf32>
    tpu.vector_store %arg11[%c8, %c0_4], %3 {strides = array<i32>} : memref<144x128xf32, #tpu.memory_space<vmem>>, vector<32x4xf32>,
    %c1 = arith.constant 1 : index
    %c0_5 = arith.constant 0 : index
    %c0_6 = arith.constant 0 : index
    %5 = vector.load %arg1[%c1, %c0_5, %c0_6] : memref<2x32x4xf32, #tpu.memory_space<vmem>>, vector<1x32x4xf32>
    %6 = vector.shape_cast %5 : vector<1x32x4xf32> to vector<32x4xf32>
    %c72 = arith.constant 72 : index
    %c0_7 = arith.constant 0 : index
    %7 = vector.load %arg11[%c72, %c0_7] : memref<144x128xf32, #tpu.memory_space<vmem>>, vector<32x4xf32>
    tpu.vector_store %arg11[%c72, %c0_7], %6 {strides = array<i32>} : memref<144x128xf32, #tpu.memory_space<vmem>>, vector<32x4xf32>,
    %c7 = arith.constant 7 : index
    %c0_8 = arith.constant 0 : index
    %8 = vector.load %arg11[%c7, %c0_8] : memref<144x128xf32, #tpu.memory_space<vmem>>, vector<128x128xf32>
    %9 = arith.truncf %8 : vector<128x128xf32> to vector<128x128xbf16>
    %c0_9 = arith.constant 0 : index
    %c0_10 = arith.constant 0 : index
    %c0_11 = arith.constant 0 : index
    %10 = vector.load %arg2[%c0_9, %c0_10, %c0_11] : memref<21x128x128xbf16, #tpu.memory_space<vmem>>, vector<1x128x128xbf16>
    %11 = vector.shape_cast %10 : vector<1x128x128xbf16> to vector<128x128xbf16>
    %cst_12 = arith.constant dense<0.000000e+00> : vector<128x128xf32>
    %12 = tpu.matmul %9, %11, %cst_12 {dimension_numbers = #tpu.dot_dimension_numbers<[1], [0], [0], [1], [0, 0, 1, 1], [], []>} : vector<128x128xbf16>, vector<128x128xbf16>, vector<128x128xf32> -> vector<128x128xf32>
    %c8_13 = arith.constant 8 : index
    %c0_14 = arith.constant 0 : index
    %13 = vector.load %arg11[%c8_13, %c0_14] : memref<144x128xf32, #tpu.memory_space<vmem>>, vector<128x128xf32>
    %14 = arith.truncf %13 : vector<128x128xf32> to vector<128x128xbf16>
    %c1_15 = arith.constant 1 : index
    %c0_16 = arith.constant 0 : index
    %c0_17 = arith.constant 0 : index
    %15 = vector.load %arg2[%c1_15, %c0_16, %c0_17] : memref<21x128x128xbf16, #tpu.memory_space<vmem>>, vector<1x128x128xbf16>
    %16 = vector.shape_cast %15 : vector<1x128x128xbf16> to vector<128x128xbf16>
    %cst_18 = arith.constant dense<0.000000e+00> : vector<128x128xf32>
    %17 = tpu.matmul %14, %16, %cst_18 {dimension_numbers = #tpu.dot_dimension_numbers<[1], [0], [0], [1], [0, 0, 1, 1], [], []>} : vector<128x128xbf16>, vector<128x128xbf16>, vector<128x128xf32> -> vector<128x128xf32>
    %18 = arith.addf %12, %17 : vector<128x128xf32>
    %c9 = arith.constant 9 : index
    %c0_19 = arith.constant 0 : index
    %19 = vector.load %arg11[%c9, %c0_19] : memref<144x128xf32, #tpu.memory_space<vmem>>, vector<128x128xf32>
    %20 = arith.truncf %19 : vector<128x128xf32> to vector<128x128xbf16>
    %c2 = arith.constant 2 : index
    %c0_20 = arith.constant 0 : index
    %c0_21 = arith.constant 0 : index
    %21 = vector.load %arg2[%c2, %c0_20, %c0_21] : memref<21x128x128xbf16, #tpu.memory_space<vmem>>, vector<1x128x128xbf16>
    %22 = vector.shape_cast %21 : vector<1x128x128xbf16> to vector<128x128xbf16>
    %cst_22 = arith.constant dense<0.000000e+00> : vector<128x128xf32>
    %23 = tpu.matmul %20, %22, %cst_22 {dimension_numbers = #tpu.dot_dimension_numbers<[1], [0], [0], [1], [0, 0, 1, 1], [], []>} : vector<128x128xbf16>, vector<128x128xbf16>, vector<128x128xf32> -> vector<128x128xf32>
    %24 = arith.addf %18, %23 : vector<128x128xf32>
    %c0_23 = arith.constant 0 : index
    %c0_24 = arith.constant 0 : index
    %c0_25 = arith.constant 0 : index
    %25 = vector.load %arg3[%c0_23, %c0_24, %c0_25] : memref<7x1x128xf32, #tpu.memory_space<vmem>>, vector<1x1x128xf32>
    %26 = vector.shape_cast %25 : vector<1x1x128xf32> to vector<1x128xf32>
    %27 = vector.broadcast %26 : vector<1x128xf32> to vector<128x128xf32>
    %28 = arith.mulf %24, %27 : vector<128x128xf32>
    %c0_26 = arith.constant 0 : index
    %c0_27 = arith.constant 0 : index
    %c0_28 = arith.constant 0 : index
    %29 = vector.load %arg4[%c0_26, %c0_27, %c0_28] : memref<7x1x128xf32, #tpu.memory_space<vmem>>, vector<1x1x128xf32>
    %30 = vector.shape_cast %29 : vector<1x1x128xf32> to vector<1x128xf32>
    %31 = vector.broadcast %30 : vector<1x128xf32> to vector<128x128xf32>
    %32 = arith.addf %28, %31 : vector<128x128xf32>
    %cst_29 = arith.constant 0.000000e+00 : f32
    %33 = vector.broadcast %cst_29 : f32 to vector<128x128xf32>
    %34 = arith.cmpf ogt, %32, %33 : vector<128x128xf32>
    %cst_30 = arith.constant 0.00999999977 : f32
    %35 = vector.broadcast %cst_30 : f32 to vector<128x128xf32>
    %36 = arith.mulf %35, %32 : vector<128x128xf32>
    %37 = arith.select %34, %32, %36 : vector<128x128xi1>, vector<128x128xf32>
    %38 = tpu.iota {dimensions = array<i32: 0>} : vector<128x1xi32>
    %c63_i32 = arith.constant 63 : i32
    %39 = vector.broadcast %c63_i32 : i32 to vector<128x1xi32>
    %40 = arith.andi %38, %39 : vector<128x1xi32>
    %c32_i32 = arith.constant 32 : i32
    %41 = vector.broadcast %c32_i32 : i32 to vector<128x1xi32>
    %42 = arith.cmpi slt, %40, %41 : vector<128x1xi32>
    %cst_31 = arith.constant 0.000000e+00 : f32
    %43 = vector.shape_cast %42 : vector<128x1xi1> to vector<128x1xi1>
    %44 = vector.broadcast %43 : vector<128x1xi1> to vector<128x128xi1>
    %45 = vector.broadcast %cst_31 : f32 to vector<128x128xf32>
    %46 = arith.select %44, %37, %45 : vector<128x128xi1>, vector<128x128xf32>
    %c8_32 = arith.constant 8 : index
    %c0_33 = arith.constant 0 : index
    %47 = vector.load %arg11[%c8_32, %c0_33] : memref<144x128xf32, #tpu.memory_space<vmem>>, vector<128x128xf32>
    tpu.vector_store %arg11[%c8_32, %c0_33], %46 {strides = array<i32>} : memref<144x128xf32, #tpu.memory_space<vmem>>, vector<128x128xf32>,
    %c8_34 = arith.constant 8 : index
    %c0_35 = arith.constant 0 : index
    %48 = tpu.strided_load %arg11[%c8_34, %c0_35] {strides = array<i32: 2, 1>} : memref<144x128xf32, #tpu.memory_space<vmem>>, vector<64x128xf32>
    %c9_36 = arith.constant 9 : index
    %c0_37 = arith.constant 0 : index
    %49 = tpu.strided_load %arg11[%c9_36, %c0_37] {strides = array<i32: 2, 1>} : memref<144x128xf32, #tpu.memory_space<vmem>>, vector<64x128xf32>
    %50 = arith.maximumf %48, %49 : vector<64x128xf32>
    %c8_38 = arith.constant 8 : index
    %c0_39 = arith.constant 0 : index
    %51 = vector.load %arg11[%c8_38, %c0_39] : memref<144x128xf32, #tpu.memory_space<vmem>>, vector<64x128xf32>
    tpu.vector_store %arg11[%c8_38, %c0_39], %50 {strides = array<i32>} : memref<144x128xf32, #tpu.memory_space<vmem>>, vector<64x128xf32>,
    %c7_40 = arith.constant 7 : index
    %c0_41 = arith.constant 0 : index
    %52 = vector.load %arg11[%c7_40, %c0_41] : memref<144x128xf32, #tpu.memory_space<vmem>>, vector<64x128xf32>
    %53 = arith.truncf %52 : vector<64x128xf32> to vector<64x128xbf16>
    %c3 = arith.constant 3 : index
    %c0_42 = arith.constant 0 : index
    %c0_43 = arith.constant 0 : index
    %54 = vector.load %arg2[%c3, %c0_42, %c0_43] : memref<21x128x128xbf16, #tpu.memory_space<vmem>>, vector<1x128x128xbf16>
    %55 = vector.shape_cast %54 : vector<1x128x128xbf16> to vector<128x128xbf16>
    %cst_44 = arith.constant dense<0.000000e+00> : vector<64x128xf32>
    %56 = tpu.matmul %53, %55, %cst_44 {dimension_numbers = #tpu.dot_dimension_numbers<[1], [0], [0], [1], [0, 0, 1, 1], [], []>} : vector<64x128xbf16>, vector<128x128xbf16>, vector<64x128xf32> -> vector<64x128xf32>
    %c8_45 = arith.constant 8 : index
    %c0_46 = arith.constant 0 : index
    %57 = vector.load %arg11[%c8_45, %c0_46] : memref<144x128xf32, #tpu.memory_space<vmem>>, vector<64x128xf32>
    %58 = arith.truncf %57 : vector<64x128xf32> to vector<64x128xbf16>
    %c4 = arith.constant 4 : index
    %c0_47 = arith.constant 0 : index
    %c0_48 = arith.constant 0 : index
    %59 = vector.load %arg2[%c4, %c0_47, %c0_48] : memref<21x128x128xbf16, #tpu.memory_space<vmem>>, vector<1x128x128xbf16>
    %60 = vector.shape_cast %59 : vector<1x128x128xbf16> to vector<128x128xbf16>
    %cst_49 = arith.constant dense<0.000000e+00> : vector<64x128xf32>
    %61 = tpu.matmul %58, %60, %cst_49 {dimension_numbers = #tpu.dot_dimension_numbers<[1], [0], [0], [1], [0, 0, 1, 1], [], []>} : vector<64x128xbf16>, vector<128x128xbf16>, vector<64x128xf32> -> vector<64x128xf32>
    %62 = arith.addf %56, %61 : vector<64x128xf32>
    %c9_50 = arith.constant 9 : index
    %c0_51 = arith.constant 0 : index
    %63 = vector.load %arg11[%c9_50, %c0_51] : memref<144x128xf32, #tpu.memory_space<vmem>>, vector<64x128xf32>
    %64 = arith.truncf %63 : vector<64x128xf32> to vector<64x128xbf16>
    %c5 = arith.constant 5 : index
    %c0_52 = arith.constant 0 : index
    %c0_53 = arith.constant 0 : index
    %65 = vector.load %arg2[%c5, %c0_52, %c0_53] : memref<21x128x128xbf16, #tpu.memory_space<vmem>>, vector<1x128x128xbf16>
    %66 = vector.shape_cast %65 : vector<1x128x128xbf16> to vector<128x128xbf16>
    %cst_54 = arith.constant dense<0.000000e+00> : vector<64x128xf32>
    %67 = tpu.matmul %64, %66, %cst_54 {dimension_numbers = #tpu.dot_dimension_numbers<[1], [0], [0], [1], [0, 0, 1, 1], [], []>} : vector<64x128xbf16>, vector<128x128xbf16>, vector<64x128xf32> -> vector<64x128xf32>
    %68 = arith.addf %62, %67 : vector<64x128xf32>
    %c1_55 = arith.constant 1 : index
    %c0_56 = arith.constant 0 : index
    %c0_57 = arith.constant 0 : index
    %69 = vector.load %arg3[%c1_55, %c0_56, %c0_57] : memref<7x1x128xf32, #tpu.memory_space<vmem>>, vector<1x1x128xf32>
    %70 = vector.shape_cast %69 : vector<1x1x128xf32> to vector<1x128xf32>
    %71 = vector.broadcast %70 : vector<1x128xf32> to vector<64x128xf32>
    %72 = arith.mulf %68, %71 : vector<64x128xf32>
    %c1_58 = arith.constant 1 : index
    %c0_59 = arith.constant 0 : index
    %c0_60 = arith.constant 0 : index
    %73 = vector.load %arg4[%c1_58, %c0_59, %c0_60] : memref<7x1x128xf32, #tpu.memory_space<vmem>>, vector<1x1x128xf32>
    %74 = vector.shape_cast %73 : vector<1x1x128xf32> to vector<1x128xf32>
    %75 = vector.broadcast %74 : vector<1x128xf32> to vector<64x128xf32>
    %76 = arith.addf %72, %75 : vector<64x128xf32>
    %cst_61 = arith.constant 0.000000e+00 : f32
    %77 = vector.broadcast %cst_61 : f32 to vector<64x128xf32>
    %78 = arith.cmpf ogt, %76, %77 : vector<64x128xf32>
    %cst_62 = arith.constant 0.00999999977 : f32
    %79 = vector.broadcast %cst_62 : f32 to vector<64x128xf32>
    %80 = arith.mulf %79, %76 : vector<64x128xf32>
    %81 = arith.select %78, %76, %80 : vector<64x128xi1>, vector<64x128xf32>
    %82 = tpu.iota {dimensions = array<i32: 0>} : vector<64x1xi32>
    %c31_i32 = arith.constant 31 : i32
    %83 = vector.broadcast %c31_i32 : i32 to vector<64x1xi32>
    %84 = arith.andi %82, %83 : vector<64x1xi32>
    %c16_i32 = arith.constant 16 : i32
    %85 = vector.broadcast %c16_i32 : i32 to vector<64x1xi32>
    %86 = arith.cmpi slt, %84, %85 : vector<64x1xi32>
    %cst_63 = arith.constant 0.000000e+00 : f32
    %87 = vector.shape_cast %86 : vector<64x1xi1> to vector<64x1xi1>
    %88 = vector.broadcast %87 : vector<64x1xi1> to vector<64x128xi1>
    %89 = vector.broadcast %cst_63 : f32 to vector<64x128xf32>
    %90 = arith.select %88, %81, %89 : vector<64x128xi1>, vector<64x128xf32>
    %c8_64 = arith.constant 8 : index
    %c0_65 = arith.constant 0 : index
    %91 = vector.load %arg11[%c8_64, %c0_65] : memref<144x128xf32, #tpu.memory_space<vmem>>, vector<64x128xf32>
    tpu.vector_store %arg11[%c8_64, %c0_65], %90 {strides = array<i32>} : memref<144x128xf32, #tpu.memory_space<vmem>>, vector<64x128xf32>,
    %c8_66 = arith.constant 8 : index
    %c0_67 = arith.constant 0 : index
    %92 = tpu.strided_load %arg11[%c8_66, %c0_67] {strides = array<i32: 2, 1>} : memref<144x128xf32, #tpu.memory_space<vmem>>, vector<32x128xf32>
    %c9_68 = arith.constant 9 : index
    %c0_69 = arith.constant 0 : index
    %93 = tpu.strided_load %arg11[%c9_68, %c0_69] {strides = array<i32: 2, 1>} : memref<144x128xf32, #tpu.memory_space<vmem>>, vector<32x128xf32>
    %94 = arith.maximumf %92, %93 : vector<32x128xf32>
    %c8_70 = arith.constant 8 : index
    %c0_71 = arith.constant 0 : index
    %95 = vector.load %arg11[%c8_70, %c0_71] : memref<144x128xf32, #tpu.memory_space<vmem>>, vector<32x128xf32>
    tpu.vector_store %arg11[%c8_70, %c0_71], %94 {strides = array<i32>} : memref<144x128xf32, #tpu.memory_space<vmem>>, vector<32x128xf32>,
    %c7_72 = arith.constant 7 : index
    %c0_73 = arith.constant 0 : index
    %96 = vector.load %arg11[%c7_72, %c0_73] : memref<144x128xf32, #tpu.memory_space<vmem>>, vector<32x128xf32>
    %97 = arith.truncf %96 : vector<32x128xf32> to vector<32x128xbf16>
    %c6 = arith.constant 6 : index
    %c0_74 = arith.constant 0 : index
    %c0_75 = arith.constant 0 : index
    %98 = vector.load %arg2[%c6, %c0_74, %c0_75] : memref<21x128x128xbf16, #tpu.memory_space<vmem>>, vector<1x128x128xbf16>
    %99 = vector.shape_cast %98 : vector<1x128x128xbf16> to vector<128x128xbf16>
    %cst_76 = arith.constant dense<0.000000e+00> : vector<32x128xf32>
    %100 = tpu.matmul %97, %99, %cst_76 {dimension_numbers = #tpu.dot_dimension_numbers<[1], [0], [0], [1], [0, 0, 1, 1], [], []>} : vector<32x128xbf16>, vector<128x128xbf16>, vector<32x128xf32> -> vector<32x128xf32>
    %c8_77 = arith.constant 8 : index
    %c0_78 = arith.constant 0 : index
    %101 = vector.load %arg11[%c8_77, %c0_78] : memref<144x128xf32, #tpu.memory_space<vmem>>, vector<32x128xf32>
    %102 = arith.truncf %101 : vector<32x128xf32> to vector<32x128xbf16>
    %c7_79 = arith.constant 7 : index
    %c0_80 = arith.constant 0 : index
    %c0_81 = arith.constant 0 : index
    %103 = vector.load %arg2[%c7_79, %c0_80, %c0_81] : memref<21x128x128xbf16, #tpu.memory_space<vmem>>, vector<1x128x128xbf16>
    %104 = vector.shape_cast %103 : vector<1x128x128xbf16> to vector<128x128xbf16>
    %cst_82 = arith.constant dense<0.000000e+00> : vector<32x128xf32>
    %105 = tpu.matmul %102, %104, %cst_82 {dimension_numbers = #tpu.dot_dimension_numbers<[1], [0], [0], [1], [0, 0, 1, 1], [], []>} : vector<32x128xbf16>, vector<128x128xbf16>, vector<32x128xf32> -> vector<32x128xf32>
    %106 = arith.addf %100, %105 : vector<32x128xf32>
    %c9_83 = arith.constant 9 : index
    %c0_84 = arith.constant 0 : index
    %107 = vector.load %arg11[%c9_83, %c0_84] : memref<144x128xf32, #tpu.memory_space<vmem>>, vector<32x128xf32>
    %108 = arith.truncf %107 : vector<32x128xf32> to vector<32x128xbf16>
    %c8_85 = arith.constant 8 : index
    %c0_86 = arith.constant 0 : index
    %c0_87 = arith.constant 0 : index
    %109 = vector.load %arg2[%c8_85, %c0_86, %c0_87] : memref<21x128x128xbf16, #tpu.memory_space<vmem>>, vector<1x128x128xbf16>
    %110 = vector.shape_cast %109 : vector<1x128x128xbf16> to vector<128x128xbf16>
    %cst_88 = arith.constant dense<0.000000e+00> : vector<32x128xf32>
    %111 = tpu.matmul %108, %110, %cst_88 {dimension_numbers = #tpu.dot_dimension_numbers<[1], [0], [0], [1], [0, 0, 1, 1], [], []>} : vector<32x128xbf16>, vector<128x128xbf16>, vector<32x128xf32> -> vector<32x128xf32>
    %112 = arith.addf %106, %111 : vector<32x128xf32>
    %c2_89 = arith.constant 2 : index
    %c0_90 = arith.constant 0 : index
    %c0_91 = arith.constant 0 : index
    %113 = vector.load %arg3[%c2_89, %c0_90, %c0_91] : memref<7x1x128xf32, #tpu.memory_space<vmem>>, vector<1x1x128xf32>
    %114 = vector.shape_cast %113 : vector<1x1x128xf32> to vector<1x128xf32>
    %115 = vector.broadcast %114 : vector<1x128xf32> to vector<32x128xf32>
    %116 = arith.mulf %112, %115 : vector<32x128xf32>
    %c2_92 = arith.constant 2 : index
    %c0_93 = arith.constant 0 : index
    %c0_94 = arith.constant 0 : index
    %117 = vector.load %arg4[%c2_92, %c0_93, %c0_94] : memref<7x1x128xf32, #tpu.memory_space<vmem>>, vector<1x1x128xf32>
    %118 = vector.shape_cast %117 : vector<1x1x128xf32> to vector<1x128xf32>
    %119 = vector.broadcast %118 : vector<1x128xf32> to vector<32x128xf32>
    %120 = arith.addf %116, %119 : vector<32x128xf32>
    %cst_95 = arith.constant 0.000000e+00 : f32
    %121 = vector.broadcast %cst_95 : f32 to vector<32x128xf32>
    %122 = arith.cmpf ogt, %120, %121 : vector<32x128xf32>
    %cst_96 = arith.constant 0.00999999977 : f32
    %123 = vector.broadcast %cst_96 : f32 to vector<32x128xf32>
    %124 = arith.mulf %123, %120 : vector<32x128xf32>
    %125 = arith.select %122, %120, %124 : vector<32x128xi1>, vector<32x128xf32>
    %126 = tpu.iota {dimensions = array<i32: 0>} : vector<32x1xi32>
    %c15_i32 = arith.constant 15 : i32
    %127 = vector.broadcast %c15_i32 : i32 to vector<32x1xi32>
    %128 = arith.andi %126, %127 : vector<32x1xi32>
    %c8_i32 = arith.constant 8 : i32
    %129 = vector.broadcast %c8_i32 : i32 to vector<32x1xi32>
    %130 = arith.cmpi slt, %128, %129 : vector<32x1xi32>
    %cst_97 = arith.constant 0.000000e+00 : f32
    %131 = vector.shape_cast %130 : vector<32x1xi1> to vector<32x1xi1>
    %132 = vector.broadcast %131 : vector<32x1xi1> to vector<32x128xi1>
    %133 = vector.broadcast %cst_97 : f32 to vector<32x128xf32>
    %134 = arith.select %132, %125, %133 : vector<32x128xi1>, vector<32x128xf32>
    %c8_98 = arith.constant 8 : index
    %c0_99 = arith.constant 0 : index
    %135 = vector.load %arg11[%c8_98, %c0_99] : memref<144x128xf32, #tpu.memory_space<vmem>>, vector<32x128xf32>
    tpu.vector_store %arg11[%c8_98, %c0_99], %134 {strides = array<i32>} : memref<144x128xf32, #tpu.memory_space<vmem>>, vector<32x128xf32>,
    %c8_100 = arith.constant 8 : index
    %c0_101 = arith.constant 0 : index
    %136 = tpu.strided_load %arg11[%c8_100, %c0_101] {strides = array<i32: 2, 1>} : memref<144x128xf32, #tpu.memory_space<vmem>>, vector<16x128xf32>
    %c9_102 = arith.constant 9 : index
    %c0_103 = arith.constant 0 : index
    %137 = tpu.strided_load %arg11[%c9_102, %c0_103] {strides = array<i32: 2, 1>} : memref<144x128xf32, #tpu.memory_space<vmem>>, vector<16x128xf32>
    %138 = arith.maximumf %136, %137 : vector<16x128xf32>
    %c8_104 = arith.constant 8 : index
    %c0_105 = arith.constant 0 : index
    %139 = vector.load %arg11[%c8_104, %c0_105] : memref<144x128xf32, #tpu.memory_space<vmem>>, vector<16x128xf32>
    tpu.vector_store %arg11[%c8_104, %c0_105], %138 {strides = array<i32>} : memref<144x128xf32, #tpu.memory_space<vmem>>, vector<16x128xf32>,
    %c7_106 = arith.constant 7 : index
    %c0_107 = arith.constant 0 : index
    %140 = vector.load %arg11[%c7_106, %c0_107] : memref<144x128xf32, #tpu.memory_space<vmem>>, vector<16x128xf32>
    %141 = arith.truncf %140 : vector<16x128xf32> to vector<16x128xbf16>
    %c9_108 = arith.constant 9 : index
    %c0_109 = arith.constant 0 : index
    %c0_110 = arith.constant 0 : index
    %142 = vector.load %arg2[%c9_108, %c0_109, %c0_110] : memref<21x128x128xbf16, #tpu.memory_space<vmem>>, vector<1x128x128xbf16>
    %143 = vector.shape_cast %142 : vector<1x128x128xbf16> to vector<128x128xbf16>
    %cst_111 = arith.constant dense<0.000000e+00> : vector<16x128xf32>
    %144 = tpu.matmul %141, %143, %cst_111 {dimension_numbers = #tpu.dot_dimension_numbers<[1], [0], [0], [1], [0, 0, 1, 1], [], []>} : vector<16x128xbf16>, vector<128x128xbf16>, vector<16x128xf32> -> vector<16x128xf32>
    %c8_112 = arith.constant 8 : index
    %c0_113 = arith.constant 0 : index
    %145 = vector.load %arg11[%c8_112, %c0_113] : memref<144x128xf32, #tpu.memory_space<vmem>>, vector<16x128xf32>
    %146 = arith.truncf %145 : vector<16x128xf32> to vector<16x128xbf16>
    %c10 = arith.constant 10 : index
    %c0_114 = arith.constant 0 : index
    %c0_115 = arith.constant 0 : index
    %147 = vector.load %arg2[%c10, %c0_114, %c0_115] : memref<21x128x128xbf16, #tpu.memory_space<vmem>>, vector<1x128x128xbf16>
    %148 = vector.shape_cast %147 : vector<1x128x128xbf16> to vector<128x128xbf16>
    %cst_116 = arith.constant dense<0.000000e+00> : vector<16x128xf32>
    %149 = tpu.matmul %146, %148, %cst_116 {dimension_numbers = #tpu.dot_dimension_numbers<[1], [0], [0], [1], [0, 0, 1, 1], [], []>} : vector<16x128xbf16>, vector<128x128xbf16>, vector<16x128xf32> -> vector<16x128xf32>
    %150 = arith.addf %144, %149 : vector<16x128xf32>
    %c9_117 = arith.constant 9 : index
    %c0_118 = arith.constant 0 : index
    %151 = vector.load %arg11[%c9_117, %c0_118] : memref<144x128xf32, #tpu.memory_space<vmem>>, vector<16x128xf32>
    %152 = arith.truncf %151 : vector<16x128xf32> to vector<16x128xbf16>
    %c11 = arith.constant 11 : index
    %c0_119 = arith.constant 0 : index
    %c0_120 = arith.constant 0 : index
    %153 = vector.load %arg2[%c11, %c0_119, %c0_120] : memref<21x128x128xbf16, #tpu.memory_space<vmem>>, vector<1x128x128xbf16>
    %154 = vector.shape_cast %153 : vector<1x128x128xbf16> to vector<128x128xbf16>
    %cst_121 = arith.constant dense<0.000000e+00> : vector<16x128xf32>
    %155 = tpu.matmul %152, %154, %cst_121 {dimension_numbers = #tpu.dot_dimension_numbers<[1], [0], [0], [1], [0, 0, 1, 1], [], []>} : vector<16x128xbf16>, vector<128x128xbf16>, vector<16x128xf32> -> vector<16x128xf32>
    %156 = arith.addf %150, %155 : vector<16x128xf32>
    %c3_122 = arith.constant 3 : index
    %c0_123 = arith.constant 0 : index
    %c0_124 = arith.constant 0 : index
    %157 = vector.load %arg3[%c3_122, %c0_123, %c0_124] : memref<7x1x128xf32, #tpu.memory_space<vmem>>, vector<1x1x128xf32>
    %158 = vector.shape_cast %157 : vector<1x1x128xf32> to vector<1x128xf32>
    %159 = vector.broadcast %158 : vector<1x128xf32> to vector<16x128xf32>
    %160 = arith.mulf %156, %159 : vector<16x128xf32>
    %c3_125 = arith.constant 3 : index
    %c0_126 = arith.constant 0 : index
    %c0_127 = arith.constant 0 : index
    %161 = vector.load %arg4[%c3_125, %c0_126, %c0_127] : memref<7x1x128xf32, #tpu.memory_space<vmem>>, vector<1x1x128xf32>
    %162 = vector.shape_cast %161 : vector<1x1x128xf32> to vector<1x128xf32>
    %163 = vector.broadcast %162 : vector<1x128xf32> to vector<16x128xf32>
    %164 = arith.addf %160, %163 : vector<16x128xf32>
    %cst_128 = arith.constant 0.000000e+00 : f32
    %165 = vector.broadcast %cst_128 : f32 to vector<16x128xf32>
    %166 = arith.cmpf ogt, %164, %165 : vector<16x128xf32>
    %cst_129 = arith.constant 0.00999999977 : f32
    %167 = vector.broadcast %cst_129 : f32 to vector<16x128xf32>
    %168 = arith.mulf %167, %164 : vector<16x128xf32>
    %169 = arith.select %166, %164, %168 : vector<16x128xi1>, vector<16x128xf32>
    %170 = tpu.iota {dimensions = array<i32: 0>} : vector<16x1xi32>
    %c7_i32 = arith.constant 7 : i32
    %171 = vector.broadcast %c7_i32 : i32 to vector<16x1xi32>
    %172 = arith.andi %170, %171 : vector<16x1xi32>
    %c4_i32 = arith.constant 4 : i32
    %173 = vector.broadcast %c4_i32 : i32 to vector<16x1xi32>
    %174 = arith.cmpi slt, %172, %173 : vector<16x1xi32>
    %cst_130 = arith.constant 0.000000e+00 : f32
    %175 = vector.shape_cast %174 : vector<16x1xi1> to vector<16x1xi1>
    %176 = vector.broadcast %175 : vector<16x1xi1> to vector<16x128xi1>
    %177 = vector.broadcast %cst_130 : f32 to vector<16x128xf32>
    %178 = arith.select %176, %169, %177 : vector<16x128xi1>, vector<16x128xf32>
    %c8_131 = arith.constant 8 : index
    %c0_132 = arith.constant 0 : index
    %179 = vector.load %arg11[%c8_131, %c0_132] : memref<144x128xf32, #tpu.memory_space<vmem>>, vector<16x128xf32>
    tpu.vector_store %arg11[%c8_131, %c0_132], %178 {strides = array<i32>} : memref<144x128xf32, #tpu.memory_space<vmem>>, vector<16x128xf32>,
    %c7_133 = arith.constant 7 : index
    %c0_134 = arith.constant 0 : index
    %180 = vector.load %arg11[%c7_133, %c0_134] : memref<144x128xf32, #tpu.memory_space<vmem>>, vector<16x128xf32>
    %181 = arith.truncf %180 : vector<16x128xf32> to vector<16x128xbf16>
    %c12 = arith.constant 12 : index
    %c0_135 = arith.constant 0 : index
    %c0_136 = arith.constant 0 : index
    %182 = vector.load %arg2[%c12, %c0_135, %c0_136] : memref<21x128x128xbf16, #tpu.memory_space<vmem>>, vector<1x128x128xbf16>
    %183 = vector.shape_cast %182 : vector<1x128x128xbf16> to vector<128x128xbf16>
    %cst_137 = arith.constant dense<0.000000e+00> : vector<16x128xf32>
    %184 = tpu.matmul %181, %183, %cst_137 {dimension_numbers = #tpu.dot_dimension_numbers<[1], [0], [0], [1], [0, 0, 1, 1], [], []>} : vector<16x128xbf16>, vector<128x128xbf16>, vector<16x128xf32> -> vector<16x128xf32>
    %c8_138 = arith.constant 8 : index
    %c0_139 = arith.constant 0 : index
    %185 = vector.load %arg11[%c8_138, %c0_139] : memref<144x128xf32, #tpu.memory_space<vmem>>, vector<16x128xf32>
    %186 = arith.truncf %185 : vector<16x128xf32> to vector<16x128xbf16>
    %c13 = arith.constant 13 : index
    %c0_140 = arith.constant 0 : index
    %c0_141 = arith.constant 0 : index
    %187 = vector.load %arg2[%c13, %c0_140, %c0_141] : memref<21x128x128xbf16, #tpu.memory_space<vmem>>, vector<1x128x128xbf16>
    %188 = vector.shape_cast %187 : vector<1x128x128xbf16> to vector<128x128xbf16>
    %cst_142 = arith.constant dense<0.000000e+00> : vector<16x128xf32>
    %189 = tpu.matmul %186, %188, %cst_142 {dimension_numbers = #tpu.dot_dimension_numbers<[1], [0], [0], [1], [0, 0, 1, 1], [], []>} : vector<16x128xbf16>, vector<128x128xbf16>, vector<16x128xf32> -> vector<16x128xf32>
    %190 = arith.addf %184, %189 : vector<16x128xf32>
    %c9_143 = arith.constant 9 : index
    %c0_144 = arith.constant 0 : index
    %191 = vector.load %arg11[%c9_143, %c0_144] : memref<144x128xf32, #tpu.memory_space<vmem>>, vector<16x128xf32>
    %192 = arith.truncf %191 : vector<16x128xf32> to vector<16x128xbf16>
    %c14 = arith.constant 14 : index
    %c0_145 = arith.constant 0 : index
    %c0_146 = arith.constant 0 : index
    %193 = vector.load %arg2[%c14, %c0_145, %c0_146] : memref<21x128x128xbf16, #tpu.memory_space<vmem>>, vector<1x128x128xbf16>
    %194 = vector.shape_cast %193 : vector<1x128x128xbf16> to vector<128x128xbf16>
    %cst_147 = arith.constant dense<0.000000e+00> : vector<16x128xf32>
    %195 = tpu.matmul %192, %194, %cst_147 {dimension_numbers = #tpu.dot_dimension_numbers<[1], [0], [0], [1], [0, 0, 1, 1], [], []>} : vector<16x128xbf16>, vector<128x128xbf16>, vector<16x128xf32> -> vector<16x128xf32>
    %196 = arith.addf %190, %195 : vector<16x128xf32>
    %c4_148 = arith.constant 4 : index
    %c0_149 = arith.constant 0 : index
    %c0_150 = arith.constant 0 : index
    %197 = vector.load %arg3[%c4_148, %c0_149, %c0_150] : memref<7x1x128xf32, #tpu.memory_space<vmem>>, vector<1x1x128xf32>
    %198 = vector.shape_cast %197 : vector<1x1x128xf32> to vector<1x128xf32>
    %199 = vector.broadcast %198 : vector<1x128xf32> to vector<16x128xf32>
    %200 = arith.mulf %196, %199 : vector<16x128xf32>
    %c4_151 = arith.constant 4 : index
    %c0_152 = arith.constant 0 : index
    %c0_153 = arith.constant 0 : index
    %201 = vector.load %arg4[%c4_151, %c0_152, %c0_153] : memref<7x1x128xf32, #tpu.memory_space<vmem>>, vector<1x1x128xf32>
    %202 = vector.shape_cast %201 : vector<1x1x128xf32> to vector<1x128xf32>
    %203 = vector.broadcast %202 : vector<1x128xf32> to vector<16x128xf32>
    %204 = arith.addf %200, %203 : vector<16x128xf32>
    %cst_154 = arith.constant 0.000000e+00 : f32
    %205 = vector.broadcast %cst_154 : f32 to vector<16x128xf32>
    %206 = arith.cmpf ogt, %204, %205 : vector<16x128xf32>
    %cst_155 = arith.constant 0.00999999977 : f32
    %207 = vector.broadcast %cst_155 : f32 to vector<16x128xf32>
    %208 = arith.mulf %207, %204 : vector<16x128xf32>
    %209 = arith.select %206, %204, %208 : vector<16x128xi1>, vector<16x128xf32>
    %210 = tpu.iota {dimensions = array<i32: 0>} : vector<16x1xi32>
    %c7_i32_156 = arith.constant 7 : i32
    %211 = vector.broadcast %c7_i32_156 : i32 to vector<16x1xi32>
    %212 = arith.andi %210, %211 : vector<16x1xi32>
    %c4_i32_157 = arith.constant 4 : i32
    %213 = vector.broadcast %c4_i32_157 : i32 to vector<16x1xi32>
    %214 = arith.cmpi slt, %212, %213 : vector<16x1xi32>
    %cst_158 = arith.constant 0.000000e+00 : f32
    %215 = vector.shape_cast %214 : vector<16x1xi1> to vector<16x1xi1>
    %216 = vector.broadcast %215 : vector<16x1xi1> to vector<16x128xi1>
    %217 = vector.broadcast %cst_158 : f32 to vector<16x128xf32>
    %218 = arith.select %216, %209, %217 : vector<16x128xi1>, vector<16x128xf32>
    %c8_159 = arith.constant 8 : index
    %c0_160 = arith.constant 0 : index
    %219 = vector.load %arg11[%c8_159, %c0_160] : memref<144x128xf32, #tpu.memory_space<vmem>>, vector<16x128xf32>
    tpu.vector_store %arg11[%c8_159, %c0_160], %218 {strides = array<i32>} : memref<144x128xf32, #tpu.memory_space<vmem>>, vector<16x128xf32>,
    %c8_161 = arith.constant 8 : index
    %c0_162 = arith.constant 0 : index
    %220 = tpu.strided_load %arg11[%c8_161, %c0_162] {strides = array<i32: 2, 1>} : memref<144x128xf32, #tpu.memory_space<vmem>>, vector<8x128xf32>
    %c9_163 = arith.constant 9 : index
    %c0_164 = arith.constant 0 : index
    %221 = tpu.strided_load %arg11[%c9_163, %c0_164] {strides = array<i32: 2, 1>} : memref<144x128xf32, #tpu.memory_space<vmem>>, vector<8x128xf32>
    %222 = arith.maximumf %220, %221 : vector<8x128xf32>
    %c8_165 = arith.constant 8 : index
    %c0_166 = arith.constant 0 : index
    %223 = vector.load %arg11[%c8_165, %c0_166] : memref<144x128xf32, #tpu.memory_space<vmem>>, vector<8x128xf32>
    tpu.vector_store %arg11[%c8_165, %c0_166], %222 {strides = array<i32>} : memref<144x128xf32, #tpu.memory_space<vmem>>, vector<8x128xf32>,
    %c7_167 = arith.constant 7 : index
    %c0_168 = arith.constant 0 : index
    %224 = vector.load %arg11[%c7_167, %c0_168] : memref<144x128xf32, #tpu.memory_space<vmem>>, vector<8x128xf32>
    %225 = arith.truncf %224 : vector<8x128xf32> to vector<8x128xbf16>
    %c15 = arith.constant 15 : index
    %c0_169 = arith.constant 0 : index
    %c0_170 = arith.constant 0 : index
    %226 = vector.load %arg2[%c15, %c0_169, %c0_170] : memref<21x128x128xbf16, #tpu.memory_space<vmem>>, vector<1x128x128xbf16>
    %227 = vector.shape_cast %226 : vector<1x128x128xbf16> to vector<128x128xbf16>
    %cst_171 = arith.constant dense<0.000000e+00> : vector<8x128xf32>
    %228 = tpu.matmul %225, %227, %cst_171 {dimension_numbers = #tpu.dot_dimension_numbers<[1], [0], [0], [1], [0, 0, 1, 1], [], []>} : vector<8x128xbf16>, vector<128x128xbf16>, vector<8x128xf32> -> vector<8x128xf32>
    %c8_172 = arith.constant 8 : index
    %c0_173 = arith.constant 0 : index
    %229 = vector.load %arg11[%c8_172, %c0_173] : memref<144x128xf32, #tpu.memory_space<vmem>>, vector<8x128xf32>
    %230 = arith.truncf %229 : vector<8x128xf32> to vector<8x128xbf16>
    %c16 = arith.constant 16 : index
    %c0_174 = arith.constant 0 : index
    %c0_175 = arith.constant 0 : index
    %231 = vector.load %arg2[%c16, %c0_174, %c0_175] : memref<21x128x128xbf16, #tpu.memory_space<vmem>>, vector<1x128x128xbf16>
    %232 = vector.shape_cast %231 : vector<1x128x128xbf16> to vector<128x128xbf16>
    %cst_176 = arith.constant dense<0.000000e+00> : vector<8x128xf32>
    %233 = tpu.matmul %230, %232, %cst_176 {dimension_numbers = #tpu.dot_dimension_numbers<[1], [0], [0], [1], [0, 0, 1, 1], [], []>} : vector<8x128xbf16>, vector<128x128xbf16>, vector<8x128xf32> -> vector<8x128xf32>
    %234 = arith.addf %228, %233 : vector<8x128xf32>
    %c9_177 = arith.constant 9 : index
    %c0_178 = arith.constant 0 : index
    %235 = vector.load %arg11[%c9_177, %c0_178] : memref<144x128xf32, #tpu.memory_space<vmem>>, vector<8x128xf32>
    %236 = arith.truncf %235 : vector<8x128xf32> to vector<8x128xbf16>
    %c17 = arith.constant 17 : index
    %c0_179 = arith.constant 0 : index
    %c0_180 = arith.constant 0 : index
    %237 = vector.load %arg2[%c17, %c0_179, %c0_180] : memref<21x128x128xbf16, #tpu.memory_space<vmem>>, vector<1x128x128xbf16>
    %238 = vector.shape_cast %237 : vector<1x128x128xbf16> to vector<128x128xbf16>
    %cst_181 = arith.constant dense<0.000000e+00> : vector<8x128xf32>
    %239 = tpu.matmul %236, %238, %cst_181 {dimension_numbers = #tpu.dot_dimension_numbers<[1], [0], [0], [1], [0, 0, 1, 1], [], []>} : vector<8x128xbf16>, vector<128x128xbf16>, vector<8x128xf32> -> vector<8x128xf32>
    %240 = arith.addf %234, %239 : vector<8x128xf32>
    %c5_182 = arith.constant 5 : index
    %c0_183 = arith.constant 0 : index
    %c0_184 = arith.constant 0 : index
    %241 = vector.load %arg3[%c5_182, %c0_183, %c0_184] : memref<7x1x128xf32, #tpu.memory_space<vmem>>, vector<1x1x128xf32>
    %242 = vector.shape_cast %241 : vector<1x1x128xf32> to vector<1x128xf32>
    %243 = vector.broadcast %242 : vector<1x128xf32> to vector<8x128xf32>
    %244 = arith.mulf %240, %243 : vector<8x128xf32>
    %c5_185 = arith.constant 5 : index
    %c0_186 = arith.constant 0 : index
    %c0_187 = arith.constant 0 : index
    %245 = vector.load %arg4[%c5_185, %c0_186, %c0_187] : memref<7x1x128xf32, #tpu.memory_space<vmem>>, vector<1x1x128xf32>
    %246 = vector.shape_cast %245 : vector<1x1x128xf32> to vector<1x128xf32>
    %247 = vector.broadcast %246 : vector<1x128xf32> to vector<8x128xf32>
    %248 = arith.addf %244, %247 : vector<8x128xf32>
    %cst_188 = arith.constant 0.000000e+00 : f32
    %249 = vector.broadcast %cst_188 : f32 to vector<8x128xf32>
    %250 = arith.cmpf ogt, %248, %249 : vector<8x128xf32>
    %cst_189 = arith.constant 0.00999999977 : f32
    %251 = vector.broadcast %cst_189 : f32 to vector<8x128xf32>
    %252 = arith.mulf %251, %248 : vector<8x128xf32>
    %253 = arith.select %250, %248, %252 : vector<8x128xi1>, vector<8x128xf32>
    %254 = tpu.iota {dimensions = array<i32: 0>} : vector<8x1xi32>
    %c3_i32 = arith.constant 3 : i32
    %255 = vector.broadcast %c3_i32 : i32 to vector<8x1xi32>
    %256 = arith.andi %254, %255 : vector<8x1xi32>
    %c2_i32 = arith.constant 2 : i32
    %257 = vector.broadcast %c2_i32 : i32 to vector<8x1xi32>
    %258 = arith.cmpi slt, %256, %257 : vector<8x1xi32>
    %cst_190 = arith.constant 0.000000e+00 : f32
    %259 = vector.shape_cast %258 : vector<8x1xi1> to vector<8x1xi1>
    %260 = vector.broadcast %259 : vector<8x1xi1> to vector<8x128xi1>
    %261 = vector.broadcast %cst_190 : f32 to vector<8x128xf32>
    %262 = arith.select %260, %253, %261 : vector<8x128xi1>, vector<8x128xf32>
    %c8_191 = arith.constant 8 : index
    %c0_192 = arith.constant 0 : index
    %263 = vector.load %arg11[%c8_191, %c0_192] : memref<144x128xf32, #tpu.memory_space<vmem>>, vector<8x128xf32>
    tpu.vector_store %arg11[%c8_191, %c0_192], %262 {strides = array<i32>} : memref<144x128xf32, #tpu.memory_space<vmem>>, vector<8x128xf32>,
    %c7_193 = arith.constant 7 : index
    %c0_194 = arith.constant 0 : index
    %264 = vector.load %arg11[%c7_193, %c0_194] : memref<144x128xf32, #tpu.memory_space<vmem>>, vector<8x128xf32>
    %265 = arith.truncf %264 : vector<8x128xf32> to vector<8x128xbf16>
    %c18 = arith.constant 18 : index
    %c0_195 = arith.constant 0 : index
    %c0_196 = arith.constant 0 : index
    %266 = vector.load %arg2[%c18, %c0_195, %c0_196] : memref<21x128x128xbf16, #tpu.memory_space<vmem>>, vector<1x128x128xbf16>
    %267 = vector.shape_cast %266 : vector<1x128x128xbf16> to vector<128x128xbf16>
    %cst_197 = arith.constant dense<0.000000e+00> : vector<8x128xf32>
    %268 = tpu.matmul %265, %267, %cst_197 {dimension_numbers = #tpu.dot_dimension_numbers<[1], [0], [0], [1], [0, 0, 1, 1], [], []>} : vector<8x128xbf16>, vector<128x128xbf16>, vector<8x128xf32> -> vector<8x128xf32>
    %c8_198 = arith.constant 8 : index
    %c0_199 = arith.constant 0 : index
    %269 = vector.load %arg11[%c8_198, %c0_199] : memref<144x128xf32, #tpu.memory_space<vmem>>, vector<8x128xf32>
    %270 = arith.truncf %269 : vector<8x128xf32> to vector<8x128xbf16>
    %c19 = arith.constant 19 : index
    %c0_200 = arith.constant 0 : index
    %c0_201 = arith.constant 0 : index
    %271 = vector.load %arg2[%c19, %c0_200, %c0_201] : memref<21x128x128xbf16, #tpu.memory_space<vmem>>, vector<1x128x128xbf16>
    %272 = vector.shape_cast %271 : vector<1x128x128xbf16> to vector<128x128xbf16>
    %cst_202 = arith.constant dense<0.000000e+00> : vector<8x128xf32>
    %273 = tpu.matmul %270, %272, %cst_202 {dimension_numbers = #tpu.dot_dimension_numbers<[1], [0], [0], [1], [0, 0, 1, 1], [], []>} : vector<8x128xbf16>, vector<128x128xbf16>, vector<8x128xf32> -> vector<8x128xf32>
    %274 = arith.addf %268, %273 : vector<8x128xf32>
    %c9_203 = arith.constant 9 : index
    %c0_204 = arith.constant 0 : index
    %275 = vector.load %arg11[%c9_203, %c0_204] : memref<144x128xf32, #tpu.memory_space<vmem>>, vector<8x128xf32>
    %276 = arith.truncf %275 : vector<8x128xf32> to vector<8x128xbf16>
    %c20 = arith.constant 20 : index
    %c0_205 = arith.constant 0 : index
    %c0_206 = arith.constant 0 : index
    %277 = vector.load %arg2[%c20, %c0_205, %c0_206] : memref<21x128x128xbf16, #tpu.memory_space<vmem>>, vector<1x128x128xbf16>
    %278 = vector.shape_cast %277 : vector<1x128x128xbf16> to vector<128x128xbf16>
    %cst_207 = arith.constant dense<0.000000e+00> : vector<8x128xf32>
    %279 = tpu.matmul %276, %278, %cst_207 {dimension_numbers = #tpu.dot_dimension_numbers<[1], [0], [0], [1], [0, 0, 1, 1], [], []>} : vector<8x128xbf16>, vector<128x128xbf16>, vector<8x128xf32> -> vector<8x128xf32>
    %280 = arith.addf %274, %279 : vector<8x128xf32>
    %c6_208 = arith.constant 6 : index
    %c0_209 = arith.constant 0 : index
    %c0_210 = arith.constant 0 : index
    %281 = vector.load %arg3[%c6_208, %c0_209, %c0_210] : memref<7x1x128xf32, #tpu.memory_space<vmem>>, vector<1x1x128xf32>
    %282 = vector.shape_cast %281 : vector<1x1x128xf32> to vector<1x128xf32>
    %283 = vector.broadcast %282 : vector<1x128xf32> to vector<8x128xf32>
    %284 = arith.mulf %280, %283 : vector<8x128xf32>
    %c6_211 = arith.constant 6 : index
    %c0_212 = arith.constant 0 : index
    %c0_213 = arith.constant 0 : index
    %285 = vector.load %arg4[%c6_211, %c0_212, %c0_213] : memref<7x1x128xf32, #tpu.memory_space<vmem>>, vector<1x1x128xf32>
    %286 = vector.shape_cast %285 : vector<1x1x128xf32> to vector<1x128xf32>
    %287 = vector.broadcast %286 : vector<1x128xf32> to vector<8x128xf32>
    %288 = arith.addf %284, %287 : vector<8x128xf32>
    %cst_214 = arith.constant 0.000000e+00 : f32
    %289 = vector.broadcast %cst_214 : f32 to vector<8x128xf32>
    %290 = arith.cmpf ogt, %288, %289 : vector<8x128xf32>
    %cst_215 = arith.constant 0.00999999977 : f32
    %291 = vector.broadcast %cst_215 : f32 to vector<8x128xf32>
    %292 = arith.mulf %291, %288 : vector<8x128xf32>
    %293 = arith.select %290, %288, %292 : vector<8x128xi1>, vector<8x128xf32>
    %294 = tpu.iota {dimensions = array<i32: 0>} : vector<8x1xi32>
    %c3_i32_216 = arith.constant 3 : i32
    %295 = vector.broadcast %c3_i32_216 : i32 to vector<8x1xi32>
    %296 = arith.andi %294, %295 : vector<8x1xi32>
    %c2_i32_217 = arith.constant 2 : i32
    %297 = vector.broadcast %c2_i32_217 : i32 to vector<8x1xi32>
    %298 = arith.cmpi slt, %296, %297 : vector<8x1xi32>
    %cst_218 = arith.constant 0.000000e+00 : f32
    %299 = vector.shape_cast %298 : vector<8x1xi1> to vector<8x1xi1>
    %300 = vector.broadcast %299 : vector<8x1xi1> to vector<8x128xi1>
    %301 = vector.broadcast %cst_218 : f32 to vector<8x128xf32>
    %302 = arith.select %300, %293, %301 : vector<8x128xi1>, vector<8x128xf32>
    %c8_219 = arith.constant 8 : index
    %c0_220 = arith.constant 0 : index
    %303 = vector.load %arg11[%c8_219, %c0_220] : memref<144x128xf32, #tpu.memory_space<vmem>>, vector<8x128xf32>
    tpu.vector_store %arg11[%c8_219, %c0_220], %302 {strides = array<i32>} : memref<144x128xf32, #tpu.memory_space<vmem>>, vector<8x128xf32>,
    %c8_221 = arith.constant 8 : index
    %c0_222 = arith.constant 0 : index
    %304 = tpu.strided_load %arg11[%c8_221, %c0_222] {strides = array<i32: 2, 1>} : memref<144x128xf32, #tpu.memory_space<vmem>>, vector<4x128xf32>
    %c9_223 = arith.constant 9 : index
    %c0_224 = arith.constant 0 : index
    %305 = tpu.strided_load %arg11[%c9_223, %c0_224] {strides = array<i32: 2, 1>} : memref<144x128xf32, #tpu.memory_space<vmem>>, vector<4x128xf32>
    %306 = arith.maximumf %304, %305 : vector<4x128xf32>
    %c8_225 = arith.constant 8 : index
    %c0_226 = arith.constant 0 : index
    %307 = vector.load %arg11[%c8_225, %c0_226] : memref<144x128xf32, #tpu.memory_space<vmem>>, vector<4x128xf32>
    tpu.vector_store %arg11[%c8_225, %c0_226], %306 {strides = array<i32>} : memref<144x128xf32, #tpu.memory_space<vmem>>, vector<4x128xf32>,
    %c8_227 = arith.constant 8 : index
    %c0_228 = arith.constant 0 : index
    %308 = tpu.strided_load %arg11[%c8_227, %c0_228] {strides = array<i32: 2, 1>} : memref<144x128xf32, #tpu.memory_space<vmem>>, vector<2x128xf32>
    %309 = arith.truncf %308 : vector<2x128xf32> to vector<2x128xbf16>
    %c0_229 = arith.constant 0 : index
    %c0_230 = arith.constant 0 : index
    %310 = vector.load %arg5[%c0_229, %c0_230] : memref<128x128xbf16, #tpu.memory_space<vmem>>, vector<128x128xbf16>
    %cst_231 = arith.constant dense<0.000000e+00> : vector<2x128xf32>
    %311 = tpu.matmul %309, %310, %cst_231 {dimension_numbers = #tpu.dot_dimension_numbers<[1], [0], [0], [1], [0, 0, 1, 1], [], []>} : vector<2x128xbf16>, vector<128x128xbf16>, vector<2x128xf32> -> vector<2x128xf32>
    %c0_232 = arith.constant 0 : index
    %c0_233 = arith.constant 0 : index
    %312 = vector.load %arg6[%c0_232, %c0_233] : memref<1x128xf32, #tpu.memory_space<vmem>>, vector<1x128xf32>
    %313 = vector.broadcast %312 : vector<1x128xf32> to vector<2x128xf32>
    %314 = arith.mulf %311, %313 : vector<2x128xf32>
    %c0_234 = arith.constant 0 : index
    %c0_235 = arith.constant 0 : index
    %315 = vector.load %arg7[%c0_234, %c0_235] : memref<1x128xf32, #tpu.memory_space<vmem>>, vector<1x128xf32>
    %316 = vector.broadcast %315 : vector<1x128xf32> to vector<2x128xf32>
    %317 = arith.addf %314, %316 : vector<2x128xf32>
    %cst_236 = arith.constant 0.000000e+00 : f32
    %318 = vector.broadcast %cst_236 : f32 to vector<2x128xf32>
    %319 = arith.cmpf ogt, %317, %318 : vector<2x128xf32>
    %cst_237 = arith.constant 0.00999999977 : f32
    %320 = vector.broadcast %cst_237 : f32 to vector<2x128xf32>
    %321 = arith.mulf %320, %317 : vector<2x128xf32>
    %322 = arith.select %319, %317, %321 : vector<2x128xi1>, vector<2x128xf32>
    %c0_238 = arith.constant 0 : index
    %c0_239 = arith.constant 0 : index
    %323 = vector.load %arg8[%c0_238, %c0_239] : memref<1x128xf32, #tpu.memory_space<vmem>>, vector<1x128xf32>
    %324 = vector.broadcast %323 : vector<1x128xf32> to vector<2x128xf32>
    %325 = arith.mulf %322, %324 : vector<2x128xf32>
    %cst_240 = arith.constant dense<0.000000e+00> : vector<2xf32>
    %326 = vector.multi_reduction <add>, %325, %cst_240 [1] : vector<2x128xf32> to vector<2xf32>
    %327 = vector.shape_cast %326 : vector<2xf32> to vector<2x1xf32>
    %c0_241 = arith.constant 0 : index
    %c0_242 = arith.constant 0 : index
    %328 = vector.load %arg9[%c0_241, %c0_242] : memref<1x1xf32, #tpu.memory_space<vmem>>, vector<1x1xf32>
    %329 = vector.broadcast %328 : vector<1x1xf32> to vector<2x1xf32>
    %330 = arith.addf %327, %329 : vector<2x1xf32>
    %331 = vector.shape_cast %330 : vector<2x1xf32> to vector<2x1xf32>
    %332 = vector.broadcast %331 : vector<2x1xf32> to vector<2x128xf32>
    %c0_243 = arith.constant 0 : index
    %c0_244 = arith.constant 0 : index
    %333 = vector.load %arg10[%c0_243, %c0_244] : memref<2x128xf32, #tpu.memory_space<vmem>>, vector<2x128xf32>
    tpu.vector_store %arg10[%c0_243, %c0_244], %332 {strides = array<i32>} : memref<2x128xf32, #tpu.memory_space<vmem>>, vector<2x128xf32>,
    return
  }
  func.func @transform_0(%arg0: i32) -> (i32, i32, i32) {
    %c0_i32 = arith.constant 0 : i32
    %c0_i32_0 = arith.constant 0 : i32
    %c0_i32_1 = arith.constant 0 : i32
    return %arg0, %c0_i32, %c0_i32_0 : i32, i32, i32
  }
  func.func @transform_1(%arg0: i32) -> (i32, i32, i32) {
    %c0_i32 = arith.constant 0 : i32
    %c0_i32_0 = arith.constant 0 : i32
    %c0_i32_1 = arith.constant 0 : i32
    %c0_i32_2 = arith.constant 0 : i32
    return %c0_i32, %c0_i32_0, %c0_i32_1 : i32, i32, i32
  }
  func.func @transform_2(%arg0: i32) -> (i32, i32, i32) {
    %c0_i32 = arith.constant 0 : i32
    %c0_i32_0 = arith.constant 0 : i32
    %c0_i32_1 = arith.constant 0 : i32
    %c0_i32_2 = arith.constant 0 : i32
    return %c0_i32, %c0_i32_0, %c0_i32_1 : i32, i32, i32
  }
  func.func @transform_3(%arg0: i32) -> (i32, i32, i32) {
    %c0_i32 = arith.constant 0 : i32
    %c0_i32_0 = arith.constant 0 : i32
    %c0_i32_1 = arith.constant 0 : i32
    %c0_i32_2 = arith.constant 0 : i32
    return %c0_i32, %c0_i32_0, %c0_i32_1 : i32, i32, i32
  }
  func.func @transform_4(%arg0: i32) -> (i32, i32) {
    %c0_i32 = arith.constant 0 : i32
    %c0_i32_0 = arith.constant 0 : i32
    %c0_i32_1 = arith.constant 0 : i32
    return %c0_i32, %c0_i32_0 : i32, i32
  }
  func.func @transform_5(%arg0: i32) -> (i32, i32) {
    %c0_i32 = arith.constant 0 : i32
    %c0_i32_0 = arith.constant 0 : i32
    %c0_i32_1 = arith.constant 0 : i32
    return %c0_i32, %c0_i32_0 : i32, i32
  }
  func.func @transform_6(%arg0: i32) -> (i32, i32) {
    %c0_i32 = arith.constant 0 : i32
    %c0_i32_0 = arith.constant 0 : i32
    %c0_i32_1 = arith.constant 0 : i32
    return %c0_i32, %c0_i32_0 : i32, i32
  }
  func.func @transform_7(%arg0: i32) -> (i32, i32) {
    %c0_i32 = arith.constant 0 : i32
    %c0_i32_0 = arith.constant 0 : i32
    %c0_i32_1 = arith.constant 0 : i32
    return %c0_i32, %c0_i32_0 : i32, i32
  }
  func.func @transform_8(%arg0: i32) -> (i32, i32) {
    %c0_i32 = arith.constant 0 : i32
    %c0_i32_0 = arith.constant 0 : i32
    %c0_i32_1 = arith.constant 0 : i32
    return %c0_i32, %c0_i32_0 : i32, i32
  }
  func.func @transform_9(%arg0: i32) -> (i32, i32) {
    %c0_i32 = arith.constant 0 : i32
    %c0_i32_0 = arith.constant 0 : i32
    return %arg0, %c0_i32 : i32, i32
  }
}

</mosaic_0001>

<llo_original>
// kernel: cnn8_forward.1
$region0: #{cnn8_forward.1}
  #allocation0 [shape = 'u32[]', space=smem, size = 0x4, offset = 0x4, fixed_abs, tag = 'smem constant byte address 0x4 - core index']
  #allocation1 [shape = 'u32[144,128]{1,0:T(1,128)}', space=vmem, size = 0x12000, scoped, tag = 'internal scratch']
  #allocation2 [shape = 'f32[144,128]{1,0:T(8,128)}', space=vmem, size = 0x12000, scoped, tag = 'scratch operand']
  #allocation3 [shape = 'f32[1,1]{1,0:T(1,128)S(1)}', space=vmem, size = 0x200, scoped, tag = 'scoped memory for cnn8_forward.1']
  %s0 = inlined_call_operand.vmem [shape: f32[2,32,4], index: 0, kind: input, shape index: {}]
  %s1 = inlined_call_operand.hbm [shape: bf16[21,128,128], index: 1, kind: input, shape index: {}]
  %s2 = inlined_call_operand.vmem [shape: f32[7,1,128], index: 2, kind: input, shape index: {}]
  %s3 = inlined_call_operand.vmem [shape: f32[7,1,128], index: 3, kind: input, shape index: {}]
  %s4 = inlined_call_operand.vmem [shape: bf16[128,128], index: 4, kind: input, shape index: {}]
  %s5 = inlined_call_operand.vmem [shape: f32[1,128], index: 5, kind: input, shape index: {}]
  %s6 = inlined_call_operand.vmem [shape: f32[1,128], index: 6, kind: input, shape index: {}]
  %s7 = inlined_call_operand.vmem [shape: f32[1,128], index: 7, kind: input, shape index: {}]
  %s8 = inlined_call_operand.<no memory space> [shape: f32[1,1], index: 8, kind: input, shape index: {}]
  %s9 = inlined_call_operand.vmem [shape: f32[2,128], index: 9, kind: output, shape index: {}]
  %s10 = sld [smem:[#allocation0]]
  $region50: #{cnn8_forward.1} parent=0
    _
  %s12 = ssub.s32 1, %s10
  %s13 = scalar_select 0, %s12, %s10
  %v14 = vstv %s8
  %15 = vst [vmem:[#allocation3] sm:$0x1] %v14
  $region1: #{cnn8_forward.1} parent=0
    #allocation4 [shape = 'u8[688128]{0}', space=vmem, size = 0xa8000, scoped, tag = 'input window, operand 1, single buffered']
    #allocation5 [shape = 's32[1]{0}', space=sflag, size = 0x4, scoped, tag = 'scoped memory for cnn8_forward.1']
    %16 = vsyncpa [#allocation5], 0
    // Predicated region
    $region2: #{cnn8_forward.1} parent=1 // pred_check
      _
    $region3: #{cnn8_forward.1} parent=1 // pred_check_branch
      %18 = sbr.rel (0) target = $region5
    $region4: #{cnn8_forward.1} parent=1 // pred_region
      _
    $region5: #{cnn8_forward.1} parent=1 // pred_fallthru
      _
    // Predicated region
    $region6: #{cnn8_forward.1} parent=1 // pred_check
      _
    $region7: #{cnn8_forward.1} parent=1 // pred_check_branch
      %20 = sbr.rel (0) target = $region9
    $region8: #{cnn8_forward.1} parent=1 // pred_region
      %s22 = ssub.s32 21504, 21504
      %23 = vsyncadd [#allocation5], %s22
      %s24 = sshll.u32 [#allocation4], 4
      %s25 = int_to_ptr.vmem [resolvable:$true] %s24
      %30 = dma.hbm_to_vmem [thread:$0]  %s1, 21504, %s25, [#allocation5], 64, 64, 4
    $region9: #{cnn8_forward.1} parent=1 // pred_fallthru
      _
    // Predicated region
    $region10: #{cnn8_forward.1} parent=1 // pred_check
      _
    $region11: #{cnn8_forward.1} parent=1 // pred_check_branch
      %32 = sbr.rel (0) target = $region13
    $region12: #{cnn8_forward.1} parent=1 // pred_region
      _
    $region13: #{cnn8_forward.1} parent=1 // pred_fallthru
      _
    // Predicated region
    $region14: #{cnn8_forward.1} parent=1 // pred_check
      _
    $region15: #{cnn8_forward.1} parent=1 // pred_check_branch
      %34 = sbr.rel (0) target = $region17
    $region16: #{cnn8_forward.1} parent=1 // pred_region
      _
    $region17: #{cnn8_forward.1} parent=1 // pred_fallthru
      _
    // Predicated region
    $region18: #{cnn8_forward.1} parent=1 // pred_check
      _
    $region19: #{cnn8_forward.1} parent=1 // pred_check_branch
      %36 = sbr.rel (0) target = $region21
    $region20: #{cnn8_forward.1} parent=1 // pred_region
      _
    $region21: #{cnn8_forward.1} parent=1 // pred_fallthru
      _
    // Predicated region
    $region22: #{cnn8_forward.1} parent=1 // pred_check
      _
    $region23: #{cnn8_forward.1} parent=1 // pred_check_branch
      %38 = sbr.rel (0) target = $region25
    $region24: #{cnn8_forward.1} parent=1 // pred_region
      _
    $region25: #{cnn8_forward.1} parent=1 // pred_fallthru
      _
    // Predicated region
    $region26: #{cnn8_forward.1} parent=1 // pred_check
      _
    $region27: #{cnn8_forward.1} parent=1 // pred_check_branch
      %40 = sbr.rel (0) target = $region29
    $region28: #{cnn8_forward.1} parent=1 // pred_region
      _
    $region29: #{cnn8_forward.1} parent=1 // pred_fallthru
      _
    // Predicated region
    $region30: #{cnn8_forward.1} parent=1 // pred_check
      _
    $region31: #{cnn8_forward.1} parent=1 // pred_check_branch
      %42 = sbr.rel (0) target = $region33
    $region32: #{cnn8_forward.1} parent=1 // pred_region
      _
    $region33: #{cnn8_forward.1} parent=1 // pred_fallthru
      _
    // Predicated region
    $region34: #{cnn8_forward.1} parent=1 // pred_check
      _
    $region35: #{cnn8_forward.1} parent=1 // pred_check_branch
      %44 = sbr.rel (0) target = $region37
    $region36: #{cnn8_forward.1} parent=1 // pred_region
      _
    $region37: #{cnn8_forward.1} parent=1 // pred_fallthru
      _
    // Predicated region
    $region38: #{cnn8_forward.1} parent=1 // pred_check
      _
    $region39: #{cnn8_forward.1} parent=1 // pred_check_branch
      %46 = sbr.rel (0) target = $region41
    $region40: #{cnn8_forward.1} parent=1 // pred_region
      %47 = dma.done [#allocation5], 21504
    $region41: #{cnn8_forward.1} parent=1 // pred_fallthru
      _
    %49 = vst [vmem:[#allocation2] sm:$0xff] 0.0
    %50 = vst [vmem:[#allocation2 + $0x8] sm:$0xff] 0.0
    %51 = vst [vmem:[#allocation2 + $0x10] sm:$0xff] 0.0
    %52 = vst [vmem:[#allocation2 + $0x18] sm:$0xff] 0.0
    %53 = vst [vmem:[#allocation2 + $0x20] sm:$0xff] 0.0
    %54 = vst [vmem:[#allocation2 + $0x28] sm:$0xff] 0.0
    %55 = vst [vmem:[#allocation2 + $0x30] sm:$0xff] 0.0
    %56 = vst [vmem:[#allocation2 + $0x38] sm:$0xff] 0.0
    %57 = vst [vmem:[#allocation2 + $0x40] sm:$0xff] 0.0
    %58 = vst [vmem:[#allocation2 + $0x48] sm:$0xff] 0.0
    %59 = vst [vmem:[#allocation2 + $0x50] sm:$0xff] 0.0
    %60 = vst [vmem:[#allocation2 + $0x58] sm:$0xff] 0.0
    %61 = vst [vmem:[#allocation2 + $0x60] sm:$0xff] 0.0
    %62 = vst [vmem:[#allocation2 + $0x68] sm:$0xff] 0.0
    %63 = vst [vmem:[#allocation2 + $0x70] sm:$0xff] 0.0
    %64 = vst [vmem:[#allocation2 + $0x78] sm:$0xff] 0.0
    %65 = vst [vmem:[#allocation2 + $0x80] sm:$0xff] 0.0
    %66 = vst [vmem:[#allocation2 + $0x88] sm:$0xff] 0.0
    %v67 = vld [vmem:[%s0] sm:$0xff]
    %v68 = vld [vmem:[%s0 + $0x8] sm:$0xff]
    %v69 = vld [vmem:[%s0 + $0x10] sm:$0xff]
    %v70 = vld [vmem:[%s0 + $0x18] sm:$0xff]
    %vm71 = vcmask 31744
    %72 = vst.msk [vmem:[#allocation2 + $0x8] sm:$0xff] %vm71, %v67
    %73 = vst.msk [vmem:[#allocation2 + $0x10] sm:$0xff] %vm71, %v68
    %74 = vst.msk [vmem:[#allocation2 + $0x18] sm:$0xff] %vm71, %v69
    %75 = vst.msk [vmem:[#allocation2 + $0x20] sm:$0xff] %vm71, %v70
    %s76 = scalar_lea.vmem %s0, 32
    %v77 = vld [vmem:[%s76] sm:$0xff]
    %v78 = vld [vmem:[%s76 + $0x8] sm:$0xff]
    %v79 = vld [vmem:[%s76 + $0x10] sm:$0xff]
    %v80 = vld [vmem:[%s76 + $0x18] sm:$0xff]
    %81 = vst.msk [vmem:[#allocation2 + $0x48] sm:$0xff] %vm71, %v77
    %82 = vst.msk [vmem:[#allocation2 + $0x50] sm:$0xff] %vm71, %v78
    %83 = vst.msk [vmem:[#allocation2 + $0x58] sm:$0xff] %vm71, %v79
    %84 = vst.msk [vmem:[#allocation2 + $0x60] sm:$0xff] %vm71, %v80
    %v85 = vld [vmem:[#allocation2 + $0x7] sm:$0xff]
    %v86 = vld [vmem:[#allocation2 + $0xf] sm:$0xff]
    %v87 = vld [vmem:[#allocation2 + $0x17] sm:$0xff]
    %v88 = vld [vmem:[#allocation2 + $0x1f] sm:$0xff]
    %v89 = vld [vmem:[#allocation2 + $0x27] sm:$0xff]
    %v90 = vld [vmem:[#allocation2 + $0x2f] sm:$0xff]
    %v91 = vld [vmem:[#allocation2 + $0x37] sm:$0xff]
    %v92 = vld [vmem:[#allocation2 + $0x3f] sm:$0xff]
    %v93 = vld [vmem:[#allocation2 + $0x47] sm:$0xff]
    %v94 = vld [vmem:[#allocation2 + $0x4f] sm:$0xff]
    %v95 = vld [vmem:[#allocation2 + $0x57] sm:$0xff]
    %v96 = vld [vmem:[#allocation2 + $0x5f] sm:$0xff]
    %v97 = vld [vmem:[#allocation2 + $0x67] sm:$0xff]
    %v98 = vld [vmem:[#allocation2 + $0x6f] sm:$0xff]
    %v99 = vld [vmem:[#allocation2 + $0x77] sm:$0xff]
    %v100 = vld [vmem:[#allocation2 + $0x7f] sm:$0xff]
    %v101 = vpack.c.bf16 %v86, %v85
    %v102 = vpack.c.bf16 %v88, %v87
    %v103 = vpack.c.bf16 %v90, %v89
    %v104 = vpack.c.bf16 %v92, %v91
    %v105 = vpack.c.bf16 %v94, %v93
    %v106 = vpack.c.bf16 %v96, %v95
    %v107 = vpack.c.bf16 %v98, %v97
    %v108 = vpack.c.bf16 %v100, %v99
    %v109 = vld [vmem:[#allocation4] sm:$0xf]
    %v110 = vld [vmem:[#allocation4 + $0x4] sm:$0xf]
    %v111 = vld [vmem:[#allocation4 + $0x8] sm:$0xf]
    %v112 = vld [vmem:[#allocation4 + $0xc] sm:$0xf]
    %v113 = vld [vmem:[#allocation4 + $0x10] sm:$0xf]
    %v114 = vld [vmem:[#allocation4 + $0x14] sm:$0xf]
    %v115 = vld [vmem:[#allocation4 + $0x18] sm:$0xf]
    %v116 = vld [vmem:[#allocation4 + $0x1c] sm:$0xf]
    %v117 = vld [vmem:[#allocation4 + $0x20] sm:$0xf]
    %v118 = vld [vmem:[#allocation4 + $0x24] sm:$0xf]
    %v119 = vld [vmem:[#allocation4 + $0x28] sm:$0xf]
    %v120 = vld [vmem:[#allocation4 + $0x2c] sm:$0xf]
    %v121 = vld [vmem:[#allocation4 + $0x30] sm:$0xf]
    %v122 = vld [vmem:[#allocation4 + $0x34] sm:$0xf]
    %v123 = vld [vmem:[#allocation4 + $0x38] sm:$0xf]
    %v124 = vld [vmem:[#allocation4 + $0x3c] sm:$0xf]
    %v125 = vld [vmem:[#allocation2 + $0x8] sm:$0xff]
    %v126 = vld [vmem:[#allocation2 + $0x10] sm:$0xff]
    %v127 = vld [vmem:[#allocation2 + $0x18] sm:$0xff]
    %v128 = vld [vmem:[#allocation2 + $0x20] sm:$0xff]
    %v129 = vld [vmem:[#allocation2 + $0x28] sm:$0xff]
    %v130 = vld [vmem:[#allocation2 + $0x30] sm:$0xff]
    %v131 = vld [vmem:[#allocation2 + $0x38] sm:$0xff]
    %v132 = vld [vmem:[#allocation2 + $0x40] sm:$0xff]
    %v133 = vld [vmem:[#allocation2 + $0x48] sm:$0xff]
    %v134 = vld [vmem:[#allocation2 + $0x50] sm:$0xff]
    %v135 = vld [vmem:[#allocation2 + $0x58] sm:$0xff]
    %v136 = vld [vmem:[#allocation2 + $0x60] sm:$0xff]
    %v137 = vld [vmem:[#allocation2 + $0x68] sm:$0xff]
    %v138 = vld [vmem:[#allocation2 + $0x70] sm:$0xff]
    %v139 = vld [vmem:[#allocation2 + $0x78] sm:$0xff]
    %v140 = vld [vmem:[#allocation2 + $0x80] sm:$0xff]
    %v141 = vpack.c.bf16 %v126, %v125
    %v142 = vpack.c.bf16 %v128, %v127
    %v143 = vpack.c.bf16 %v130, %v129
    %v144 = vpack.c.bf16 %v132, %v131
    %v145 = vpack.c.bf16 %v134, %v133
    %v146 = vpack.c.bf16 %v136, %v135
    %v147 = vpack.c.bf16 %v138, %v137
    %v148 = vpack.c.bf16 %v140, %v139
    %s149 = scalar_lea.vmem [#allocation4], 64
    %v150 = vld [vmem:[%s149] sm:$0xf]
    %v151 = vld [vmem:[%s149 + $0x4] sm:$0xf]
    %v152 = vld [vmem:[%s149 + $0x8] sm:$0xf]
    %v153 = vld [vmem:[%s149 + $0xc] sm:$0xf]
    %v154 = vld [vmem:[%s149 + $0x10] sm:$0xf]
    %v155 = vld [vmem:[%s149 + $0x14] sm:$0xf]
    %v156 = vld [vmem:[%s149 + $0x18] sm:$0xf]
    %v157 = vld [vmem:[%s149 + $0x1c] sm:$0xf]
    %v158 = vld [vmem:[%s149 + $0x20] sm:$0xf]
    %v159 = vld [vmem:[%s149 + $0x24] sm:$0xf]
    %v160 = vld [vmem:[%s149 + $0x28] sm:$0xf]
    %v161 = vld [vmem:[%s149 + $0x2c] sm:$0xf]
    %v162 = vld [vmem:[%s149 + $0x30] sm:$0xf]
    %v163 = vld [vmem:[%s149 + $0x34] sm:$0xf]
    %v164 = vld [vmem:[%s149 + $0x38] sm:$0xf]
    %v165 = vld [vmem:[%s149 + $0x3c] sm:$0xf]
    %v182 = vunpack.c.l.b16 %v150
    %v183 = vunpack.c.l.b16 %v151
    %v184 = vunpack.c.l.b16 %v152
    %v185 = vunpack.c.l.b16 %v153
    %v186 = vunpack.c.l.b16 %v154
    %v187 = vunpack.c.l.b16 %v155
    %v188 = vunpack.c.l.b16 %v156
    %v189 = vunpack.c.l.b16 %v157
    %v190 = vunpack.c.l.b16 %v158
    %v191 = vunpack.c.l.b16 %v159
    %v192 = vunpack.c.l.b16 %v160
    %v193 = vunpack.c.l.b16 %v161
    %v194 = vunpack.c.l.b16 %v162
    %v195 = vunpack.c.l.b16 %v163
    %v196 = vunpack.c.l.b16 %v164
    %v197 = vunpack.c.l.b16 %v165
    %v198 = vpack.c.b16 %v183, %v182
    %v199 = vpack.c.b16 %v185, %v184
    %v200 = vpack.c.b16 %v187, %v186
    %v201 = vpack.c.b16 %v189, %v188
    %v202 = vpack.c.b16 %v191, %v190
    %v203 = vpack.c.b16 %v193, %v192
    %v204 = vpack.c.b16 %v195, %v194
    %v205 = vpack.c.b16 %v197, %v196
    %214 = vmatprep.subr.bf16.mxu0 0
    %215 = vmatpush1.bf16.msra.mxu0 %v198
    %216 = vmatprep.subr.bf16.mxu0 0
    %217 = vmatpush1.bf16.msra.mxu0 %v199
    %218 = vmatprep.subr.bf16.mxu0 0
    %219 = vmatpush1.bf16.msra.mxu0 %v200
    %220 = vmatprep.subr.bf16.mxu0 0
    %221 = vmatpush1.bf16.msra.mxu0 %v201
    %222 = vmatprep.subr.bf16.mxu0 0
    %223 = vmatpush1.bf16.msra.mxu0 %v202
    %224 = vmatprep.subr.bf16.mxu0 0
    %225 = vmatpush1.bf16.msra.mxu0 %v203
    %226 = vmatprep.subr.bf16.mxu0 0
    %227 = vmatpush1.bf16.msra.mxu0 %v204
    %228 = vmatprep.subr.bf16.mxu0 0
    %229 = vmatpush1.bf16.msra.mxu0 %v205
    %230 = vmatprep.subr.bf16.mxu0 0
    %231 = vmatpush1.bf16.msra.mxu0 0
    %232 = vmatprep.subr.bf16.mxu0 0
    %233 = vmatpush1.bf16.msra.mxu0 0
    %234 = vmatprep.subr.bf16.mxu0 0
    %235 = vmatpush1.bf16.msra.mxu0 0
    %236 = vmatprep.subr.bf16.mxu0 0
    %237 = vmatpush1.bf16.msra.mxu0 0
    %238 = vmatprep.subr.bf16.mxu0 0
    %239 = vmatpush1.bf16.msra.mxu0 0
    %240 = vmatprep.subr.bf16.mxu0 0
    %241 = vmatpush1.bf16.msra.mxu0 0
    %242 = vmatprep.subr.bf16.mxu0 0
    %243 = vmatpush1.bf16.msra.mxu0 0
    %244 = vmatprep.subr.bf16.mxu0 0
    %245 = vmatpush1.bf16.msra.mxu0 0
    %246 = vmatprep.mubr.bf16.mxu0 0
    %247 = vmatmul.mubr.bf16.gmra.mrb[0].mxu0 %v141
    %v248 = vpop.f32.mrb[0].mxu0
    %v249 = vadd.f32 0.0, %v248
    %v250 = vpop.f32.mrb[0].mxu0
    %v251 = vpop.f32.mrb[0].mxu0
    %v252 = vadd.f32 0.0, %v251
    %v253 = vpop.f32.mrb[0].mxu0
    %254 = vmatprep.mubr.bf16.mxu0 0
    %255 = vmatmul.mubr.bf16.gmra.mrb[0].mxu0 %v142
    %v256 = vpop.f32.mrb[0].mxu0
    %v257 = vadd.f32 0.0, %v256
    %v258 = vpop.f32.mrb[0].mxu0
    %v259 = vpop.f32.mrb[0].mxu0
    %v260 = vadd.f32 0.0, %v259
    %v261 = vpop.f32.mrb[0].mxu0
    %262 = vmatprep.mubr.bf16.mxu0 0
    %263 = vmatmul.mubr.bf16.gmra.mrb[0].mxu0 %v143
    %v264 = vpop.f32.mrb[0].mxu0
    %v265 = vadd.f32 0.0, %v264
    %v266 = vpop.f32.mrb[0].mxu0
    %v267 = vpop.f32.mrb[0].mxu0
    %v268 = vadd.f32 0.0, %v267
    %v269 = vpop.f32.mrb[0].mxu0
    %270 = vmatprep.mubr.bf16.mxu0 0
    %271 = vmatmul.mubr.bf16.gmra.mrb[0].mxu0 %v144
    %v272 = vpop.f32.mrb[0].mxu0
    %v273 = vadd.f32 0.0, %v272
    %v274 = vpop.f32.mrb[0].mxu0
    %v275 = vpop.f32.mrb[0].mxu0
    %v276 = vadd.f32 0.0, %v275
    %v277 = vpop.f32.mrb[0].mxu0
    %278 = vmatprep.mubr.bf16.mxu0 0
    %279 = vmatmul.mubr.bf16.gmra.mrb[0].mxu0 %v145
    %v280 = vpop.f32.mrb[0].mxu0
    %v281 = vadd.f32 0.0, %v280
    %v282 = vpop.f32.mrb[0].mxu0
    %v283 = vpop.f32.mrb[0].mxu0
    %v284 = vadd.f32 0.0, %v283
    %v285 = vpop.f32.mrb[0].mxu0
    %286 = vmatprep.mubr.bf16.mxu0 0
    %287 = vmatmul.mubr.bf16.gmra.mrb[0].mxu0 %v146
    %v288 = vpop.f32.mrb[0].mxu0
    %v289 = vadd.f32 0.0, %v288
    %v290 = vpop.f32.mrb[0].mxu0
    %v291 = vpop.f32.mrb[0].mxu0
    %v292 = vadd.f32 0.0, %v291
    %v293 = vpop.f32.mrb[0].mxu0
    %294 = vmatprep.mubr.bf16.mxu0 0
    %295 = vmatmul.mubr.bf16.gmra.mrb[0].mxu0 %v147
    %v296 = vpop.f32.mrb[0].mxu0
    %v297 = vadd.f32 0.0, %v296
    %v298 = vpop.f32.mrb[0].mxu0
    %v299 = vpop.f32.mrb[0].mxu0
    %v300 = vadd.f32 0.0, %v299
    %v301 = vpop.f32.mrb[0].mxu0
    %302 = vmatprep.mubr.bf16.mxu0 0
    %303 = vmatmul.mubr.bf16.gmra.mrb[0].mxu0 %v148
    %v304 = vpop.f32.mrb[0].mxu0
    %v305 = vadd.f32 0.0, %v304
    %v306 = vpop.f32.mrb[0].mxu0
    %v307 = vpop.f32.mrb[0].mxu0
    %v308 = vadd.f32 0.0, %v307
    %v309 = vpop.f32.mrb[0].mxu0
    %310 = vdwg.mxu0
    %v327 = vunpack.c.l.b16 %v109
    %v328 = vunpack.c.l.b16 %v110
    %v329 = vunpack.c.l.b16 %v111
    %v330 = vunpack.c.l.b16 %v112
    %v331 = vunpack.c.l.b16 %v113
    %v332 = vunpack.c.l.b16 %v114
    %v333 = vunpack.c.l.b16 %v115
    %v334 = vunpack.c.l.b16 %v116
    %v335 = vunpack.c.l.b16 %v117
    %v336 = vunpack.c.l.b16 %v118
    %v337 = vunpack.c.l.b16 %v119
    %v338 = vunpack.c.l.b16 %v120
    %v339 = vunpack.c.l.b16 %v121
    %v340 = vunpack.c.l.b16 %v122
    %v341 = vunpack.c.l.b16 %v123
    %v342 = vunpack.c.l.b16 %v124
    %v343 = vpack.c.b16 %v328, %v327
    %v344 = vpack.c.b16 %v330, %v329
    %v345 = vpack.c.b16 %v332, %v331
    %v346 = vpack.c.b16 %v334, %v333
    %v347 = vpack.c.b16 %v336, %v335
    %v348 = vpack.c.b16 %v338, %v337
    %v349 = vpack.c.b16 %v340, %v339
    %v350 = vpack.c.b16 %v342, %v341
    %359 = vmatprep.subr.bf16.mxu0 0
    %360 = vmatpush1.bf16.msra.mxu0 %v343
    %361 = vmatprep.subr.bf16.mxu0 0
    %362 = vmatpush1.bf16.msra.mxu0 %v344
    %363 = vmatprep.subr.bf16.mxu0 0
    %364 = vmatpush1.bf16.msra.mxu0 %v345
    %365 = vmatprep.subr.bf16.mxu0 0
    %366 = vmatpush1.bf16.msra.mxu0 %v346
    %367 = vmatprep.subr.bf16.mxu0 0
    %368 = vmatpush1.bf16.msra.mxu0 %v347
    %369 = vmatprep.subr.bf16.mxu0 0
    %370 = vmatpush1.bf16.msra.mxu0 %v348
    %371 = vmatprep.subr.bf16.mxu0 0
    %372 = vmatpush1.bf16.msra.mxu0 %v349
    %373 = vmatprep.subr.bf16.mxu0 0
    %374 = vmatpush1.bf16.msra.mxu0 %v350
    %375 = vmatprep.subr.bf16.mxu0 0
    %376 = vmatpush1.bf16.msra.mxu0 0
    %377 = vmatprep.subr.bf16.mxu0 0
    %378 = vmatpush1.bf16.msra.mxu0 0
    %379 = vmatprep.subr.bf16.mxu0 0
    %380 = vmatpush1.bf16.msra.mxu0 0
    %381 = vmatprep.subr.bf16.mxu0 0
    %382 = vmatpush1.bf16.msra.mxu0 0
    %383 = vmatprep.subr.bf16.mxu0 0
    %384 = vmatpush1.bf16.msra.mxu0 0
    %385 = vmatprep.subr.bf16.mxu0 0
    %386 = vmatpush1.bf16.msra.mxu0 0
    %387 = vmatprep.subr.bf16.mxu0 0
    %388 = vmatpush1.bf16.msra.mxu0 0
    %389 = vmatprep.subr.bf16.mxu0 0
    %390 = vmatpush1.bf16.msra.mxu0 0
    %391 = vmatprep.mubr.bf16.mxu0 0
    %392 = vmatmul.mubr.bf16.gmra.mrb[0].mxu0 %v101
    %v393 = vpop.f32.mrb[0].mxu0
    %v394 = vadd.f32 %v249, %v393
    %v395 = vpop.f32.mrb[0].mxu0
    %v396 = vpop.f32.mrb[0].mxu0
    %v397 = vadd.f32 %v252, %v396
    %v398 = vpop.f32.mrb[0].mxu0
    %399 = vmatprep.mubr.bf16.mxu0 0
    %400 = vmatmul.mubr.bf16.gmra.mrb[0].mxu0 %v102
    %v401 = vpop.f32.mrb[0].mxu0
    %v402 = vadd.f32 %v257, %v401
    %v403 = vpop.f32.mrb[0].mxu0
    %v404 = vpop.f32.mrb[0].mxu0
    %v405 = vadd.f32 %v260, %v404
    %v406 = vpop.f32.mrb[0].mxu0
    %407 = vmatprep.mubr.bf16.mxu0 0
    %408 = vmatmul.mubr.bf16.gmra.mrb[0].mxu0 %v103
    %v409 = vpop.f32.mrb[0].mxu0
    %v410 = vadd.f32 %v265, %v409
    %v411 = vpop.f32.mrb[0].mxu0
    %v412 = vpop.f32.mrb[0].mxu0
    %v413 = vadd.f32 %v268, %v412
    %v414 = vpop.f32.mrb[0].mxu0
    %415 = vmatprep.mubr.bf16.mxu0 0
    %416 = vmatmul.mubr.bf16.gmra.mrb[0].mxu0 %v104
    %v417 = vpop.f32.mrb[0].mxu0
    %v418 = vadd.f32 %v273, %v417
    %v419 = vpop.f32.mrb[0].mxu0
    %v420 = vpop.f32.mrb[0].mxu0
    %v421 = vadd.f32 %v276, %v420
    %v422 = vpop.f32.mrb[0].mxu0
    %423 = vmatprep.mubr.bf16.mxu0 0
    %424 = vmatmul.mubr.bf16.gmra.mrb[0].mxu0 %v105
    %v425 = vpop.f32.mrb[0].mxu0
    %v426 = vadd.f32 %v281, %v425
    %v427 = vpop.f32.mrb[0].mxu0
    %v428 = vpop.f32.mrb[0].mxu0
    %v429 = vadd.f32 %v284, %v428
    %v430 = vpop.f32.mrb[0].mxu0
    %431 = vmatprep.mubr.bf16.mxu0 0
    %432 = vmatmul.mubr.bf16.gmra.mrb[0].mxu0 %v106
    %v433 = vpop.f32.mrb[0].mxu0
    %v434 = vadd.f32 %v289, %v433
    %v435 = vpop.f32.mrb[0].mxu0
    %v436 = vpop.f32.mrb[0].mxu0
    %v437 = vadd.f32 %v292, %v436
    %v438 = vpop.f32.mrb[0].mxu0
    %439 = vmatprep.mubr.bf16.mxu0 0
    %440 = vmatmul.mubr.bf16.gmra.mrb[0].mxu0 %v107
    %v441 = vpop.f32.mrb[0].mxu0
    %v442 = vadd.f32 %v297, %v441
    %v443 = vpop.f32.mrb[0].mxu0
    %v444 = vpop.f32.mrb[0].mxu0
    %v445 = vadd.f32 %v300, %v444
    %v446 = vpop.f32.mrb[0].mxu0
    %447 = vmatprep.mubr.bf16.mxu0 0
    %448 = vmatmul.mubr.bf16.gmra.mrb[0].mxu0 %v108
    %v449 = vpop.f32.mrb[0].mxu0
    %v450 = vadd.f32 %v305, %v449
    %v451 = vpop.f32.mrb[0].mxu0
    %v452 = vpop.f32.mrb[0].mxu0
    %v453 = vadd.f32 %v308, %v452
    %v454 = vpop.f32.mrb[0].mxu0
    %455 = vdwg.mxu0
    %v456 = vld [vmem:[#allocation2 + $0x9] sm:$0xff]
    %v457 = vld [vmem:[#allocation2 + $0x11] sm:$0xff]
    %v458 = vld [vmem:[#allocation2 + $0x19] sm:$0xff]
    %v459 = vld [vmem:[#allocation2 + $0x21] sm:$0xff]
    %v460 = vld [vmem:[#allocation2 + $0x29] sm:$0xff]
    %v461 = vld [vmem:[#allocation2 + $0x31] sm:$0xff]
    %v462 = vld [vmem:[#allocation2 + $0x39] sm:$0xff]
    %v463 = vld [vmem:[#allocation2 + $0x41] sm:$0xff]
    %v464 = vld [vmem:[#allocation2 + $0x49] sm:$0xff]
    %v465 = vld [vmem:[#allocation2 + $0x51] sm:$0xff]
    %v466 = vld [vmem:[#allocation2 + $0x59] sm:$0xff]
    %v467 = vld [vmem:[#allocation2 + $0x61] sm:$0xff]
    %v468 = vld [vmem:[#allocation2 + $0x69] sm:$0xff]
    %v469 = vld [vmem:[#allocation2 + $0x71] sm:$0xff]
    %v470 = vld [vmem:[#allocation2 + $0x79] sm:$0xff]
    %v471 = vld [vmem:[#allocation2 + $0x81] sm:$0xff]
    %v472 = vpack.c.bf16 %v457, %v456
    %v473 = vpack.c.bf16 %v459, %v458
    %v474 = vpack.c.bf16 %v461, %v460
    %v475 = vpack.c.bf16 %v463, %v462
    %v476 = vpack.c.bf16 %v465, %v464
    %v477 = vpack.c.bf16 %v467, %v466
    %v478 = vpack.c.bf16 %v469, %v468
    %v479 = vpack.c.bf16 %v471, %v470
    %s480 = scalar_lea.vmem [#allocation4], 128
    %v481 = vld [vmem:[%s480] sm:$0xf]
    %v482 = vld [vmem:[%s480 + $0x4] sm:$0xf]
    %v483 = vld [vmem:[%s480 + $0x8] sm:$0xf]
    %v484 = vld [vmem:[%s480 + $0xc] sm:$0xf]
    %v485 = vld [vmem:[%s480 + $0x10] sm:$0xf]
    %v486 = vld [vmem:[%s480 + $0x14] sm:$0xf]
    %v487 = vld [vmem:[%s480 + $0x18] sm:$0xf]
    %v488 = vld [vmem:[%s480 + $0x1c] sm:$0xf]
    %v489 = vld [vmem:[%s480 + $0x20] sm:$0xf]
    %v490 = vld [vmem:[%s480 + $0x24] sm:$0xf]
    %v491 = vld [vmem:[%s480 + $0x28] sm:$0xf]
    %v492 = vld [vmem:[%s480 + $0x2c] sm:$0xf]
    %v493 = vld [vmem:[%s480 + $0x30] sm:$0xf]
    %v494 = vld [vmem:[%s480 + $0x34] sm:$0xf]
    %v495 = vld [vmem:[%s480 + $0x38] sm:$0xf]
    %v496 = vld [vmem:[%s480 + $0x3c] sm:$0xf]
    %v513 = vunpack.c.l.b16 %v481
    %v514 = vunpack.c.l.b16 %v482
    %v515 = vunpack.c.l.b16 %v483
    %v516 = vunpack.c.l.b16 %v484
    %v517 = vunpack.c.l.b16 %v485
    %v518 = vunpack.c.l.b16 %v486
    %v519 = vunpack.c.l.b16 %v487
    %v520 = vunpack.c.l.b16 %v488
    %v521 = vunpack.c.l.b16 %v489
    %v522 = vunpack.c.l.b16 %v490
    %v523 = vunpack.c.l.b16 %v491
    %v524 = vunpack.c.l.b16 %v492
    %v525 = vunpack.c.l.b16 %v493
    %v526 = vunpack.c.l.b16 %v494
    %v527 = vunpack.c.l.b16 %v495
    %v528 = vunpack.c.l.b16 %v496
    %v529 = vpack.c.b16 %v514, %v513
    %v530 = vpack.c.b16 %v516, %v515
    %v531 = vpack.c.b16 %v518, %v517
    %v532 = vpack.c.b16 %v520, %v519
    %v533 = vpack.c.b16 %v522, %v521
    %v534 = vpack.c.b16 %v524, %v523
    %v535 = vpack.c.b16 %v526, %v525
    %v536 = vpack.c.b16 %v528, %v527
    %545 = vmatprep.subr.bf16.mxu0 0
    %546 = vmatpush1.bf16.msra.mxu0 %v529
    %547 = vmatprep.subr.bf16.mxu0 0
    %548 = vmatpush1.bf16.msra.mxu0 %v530
    %549 = vmatprep.subr.bf16.mxu0 0
    %550 = vmatpush1.bf16.msra.mxu0 %v531
    %551 = vmatprep.subr.bf16.mxu0 0
    %552 = vmatpush1.bf16.msra.mxu0 %v532
    %553 = vmatprep.subr.bf16.mxu0 0
    %554 = vmatpush1.bf16.msra.mxu0 %v533
    %555 = vmatprep.subr.bf16.mxu0 0
    %556 = vmatpush1.bf16.msra.mxu0 %v534
    %557 = vmatprep.subr.bf16.mxu0 0
    %558 = vmatpush1.bf16.msra.mxu0 %v535
    %559 = vmatprep.subr.bf16.mxu0 0
    %560 = vmatpush1.bf16.msra.mxu0 %v536
    %561 = vmatprep.subr.bf16.mxu0 0
    %562 = vmatpush1.bf16.msra.mxu0 0
    %563 = vmatprep.subr.bf16.mxu0 0
    %564 = vmatpush1.bf16.msra.mxu0 0
    %565 = vmatprep.subr.bf16.mxu0 0
    %566 = vmatpush1.bf16.msra.mxu0 0
    %567 = vmatprep.subr.bf16.mxu0 0
    %568 = vmatpush1.bf16.msra.mxu0 0
    %569 = vmatprep.subr.bf16.mxu0 0
    %570 = vmatpush1.bf16.msra.mxu0 0
    %571 = vmatprep.subr.bf16.mxu0 0
    %572 = vmatpush1.bf16.msra.mxu0 0
    %573 = vmatprep.subr.bf16.mxu0 0
    %574 = vmatpush1.bf16.msra.mxu0 0
    %575 = vmatprep.subr.bf16.mxu0 0
    %576 = vmatpush1.bf16.msra.mxu0 0
    %577 = vmatprep.mubr.bf16.mxu0 0
    %578 = vmatmul.mubr.bf16.gmra.mrb[0].mxu0 %v472
    %v579 = vpop.f32.mrb[0].mxu0
    %v580 = vadd.f32 0.0, %v579
    %v581 = vpop.f32.mrb[0].mxu0
    %v582 = vpop.f32.mrb[0].mxu0
    %v583 = vadd.f32 0.0, %v582
    %v584 = vpop.f32.mrb[0].mxu0
    %585 = vmatprep.mubr.bf16.mxu0 0
    %586 = vmatmul.mubr.bf16.gmra.mrb[0].mxu0 %v473
    %v587 = vpop.f32.mrb[0].mxu0
    %v588 = vadd.f32 0.0, %v587
    %v589 = vpop.f32.mrb[0].mxu0
    %v590 = vpop.f32.mrb[0].mxu0
    %v591 = vadd.f32 0.0, %v590
    %v592 = vpop.f32.mrb[0].mxu0
    %593 = vmatprep.mubr.bf16.mxu0 0
    %594 = vmatmul.mubr.bf16.gmra.mrb[0].mxu0 %v474
    %v595 = vpop.f32.mrb[0].mxu0
    %v596 = vadd.f32 0.0, %v595
    %v597 = vpop.f32.mrb[0].mxu0
    %v598 = vpop.f32.mrb[0].mxu0
    %v599 = vadd.f32 0.0, %v598
    %v600 = vpop.f32.mrb[0].mxu0
    %601 = vmatprep.mubr.bf16.mxu0 0
    %602 = vmatmul.mubr.bf16.gmra.mrb[0].mxu0 %v475
    %v603 = vpop.f32.mrb[0].mxu0
    %v604 = vadd.f32 0.0, %v603
    %v605 = vpop.f32.mrb[0].mxu0
    %v606 = vpop.f32.mrb[0].mxu0
    %v607 = vadd.f32 0.0, %v606
    %v608 = vpop.f32.mrb[0].mxu0
    %609 = vmatprep.mubr.bf16.mxu0 0
    %610 = vmatmul.mubr.bf16.gmra.mrb[0].mxu0 %v476
    %v611 = vpop.f32.mrb[0].mxu0
    %v612 = vadd.f32 0.0, %v611
    %v613 = vpop.f32.mrb[0].mxu0
    %v614 = vpop.f32.mrb[0].mxu0
    %v615 = vadd.f32 0.0, %v614
    %v616 = vpop.f32.mrb[0].mxu0
    %617 = vmatprep.mubr.bf16.mxu0 0
    %618 = vmatmul.mubr.bf16.gmra.mrb[0].mxu0 %v477
    %v619 = vpop.f32.mrb[0].mxu0
    %v620 = vadd.f32 0.0, %v619
    %v621 = vpop.f32.mrb[0].mxu0
    %v622 = vpop.f32.mrb[0].mxu0
    %v623 = vadd.f32 0.0, %v622
    %v624 = vpop.f32.mrb[0].mxu0
    %625 = vmatprep.mubr.bf16.mxu0 0
    %626 = vmatmul.mubr.bf16.gmra.mrb[0].mxu0 %v478
    %v627 = vpop.f32.mrb[0].mxu0
    %v628 = vadd.f32 0.0, %v627
    %v629 = vpop.f32.mrb[0].mxu0
    %v630 = vpop.f32.mrb[0].mxu0
    %v631 = vadd.f32 0.0, %v630
    %v632 = vpop.f32.mrb[0].mxu0
    %633 = vmatprep.mubr.bf16.mxu0 0
    %634 = vmatmul.mubr.bf16.gmra.mrb[0].mxu0 %v479
    %v635 = vpop.f32.mrb[0].mxu0
    %v636 = vadd.f32 0.0, %v635
    %v637 = vpop.f32.mrb[0].mxu0
    %v638 = vpop.f32.mrb[0].mxu0
    %v639 = vadd.f32 0.0, %v638
    %v640 = vpop.f32.mrb[0].mxu0
    %641 = vdwg.mxu0
    %v642 = vadd.f32 %v394, %v580
    %v643 = vadd.f32 %v397, %v583
    %v644 = vadd.f32 %v402, %v588
    %v645 = vadd.f32 %v405, %v591
    %v646 = vadd.f32 %v410, %v596
    %v647 = vadd.f32 %v413, %v599
    %v648 = vadd.f32 %v418, %v604
    %v649 = vadd.f32 %v421, %v607
    %v650 = vadd.f32 %v426, %v612
    %v651 = vadd.f32 %v429, %v615
    %v652 = vadd.f32 %v434, %v620
    %v653 = vadd.f32 %v437, %v623
    %v654 = vadd.f32 %v442, %v628
    %v655 = vadd.f32 %v445, %v631
    %v656 = vadd.f32 %v450, %v636
    %v657 = vadd.f32 %v453, %v639
    %v658 = vld [vmem:[%s2] sm:$0x1]
    %v660 = vlaneseq
    %v661 = vshrl.u32 %v660, 7
    %v662 = vsub.s32 0, %v661
    %v663 = vrot.slane %v658, %v662
    %v665 = vmul.f32 %v642, %v663
    %v666 = vmul.f32 %v643, %v663
    %v667 = vmul.f32 %v644, %v663
    %v668 = vmul.f32 %v645, %v663
    %v669 = vmul.f32 %v646, %v663
    %v670 = vmul.f32 %v647, %v663
    %v671 = vmul.f32 %v648, %v663
    %v672 = vmul.f32 %v649, %v663
    %v673 = vmul.f32 %v650, %v663
    %v674 = vmul.f32 %v651, %v663
    %v675 = vmul.f32 %v652, %v663
    %v676 = vmul.f32 %v653, %v663
    %v677 = vmul.f32 %v654, %v663
    %v678 = vmul.f32 %v655, %v663
    %v679 = vmul.f32 %v656, %v663
    %v680 = vmul.f32 %v657, %v663
    %v681 = vld [vmem:[%s3] sm:$0x1]
    %v683 = vlaneseq
    %v684 = vshrl.u32 %v683, 7
    %v685 = vsub.s32 0, %v684
    %v686 = vrot.slane %v681, %v685
    %v688 = vadd.f32 %v665, %v686
    %v689 = vadd.f32 %v666, %v686
    %v690 = vadd.f32 %v667, %v686
    %v691 = vadd.f32 %v668, %v686
    %v692 = vadd.f32 %v669, %v686
    %v693 = vadd.f32 %v670, %v686
    %v694 = vadd.f32 %v671, %v686
    %v695 = vadd.f32 %v672, %v686
    %v696 = vadd.f32 %v673, %v686
    %v697 = vadd.f32 %v674, %v686
    %v698 = vadd.f32 %v675, %v686
    %v699 = vadd.f32 %v676, %v686
    %v700 = vadd.f32 %v677, %v686
    %v701 = vadd.f32 %v678, %v686
    %v702 = vadd.f32 %v679, %v686
    %v703 = vadd.f32 %v680, %v686
    %vm704 = vcmp.gt.f32.partialorder %v688, 0.0
    %vm705 = vcmp.gt.f32.partialorder %v689, 0.0
    %vm706 = vcmp.gt.f32.partialorder %v690, 0.0
    %vm707 = vcmp.gt.f32.partialorder %v691, 0.0
    %vm708 = vcmp.gt.f32.partialorder %v692, 0.0
    %vm709 = vcmp.gt.f32.partialorder %v693, 0.0
    %vm710 = vcmp.gt.f32.partialorder %v694, 0.0
    %vm711 = vcmp.gt.f32.partialorder %v695, 0.0
    %vm712 = vcmp.gt.f32.partialorder %v696, 0.0
    %vm713 = vcmp.gt.f32.partialorder %v697, 0.0
    %vm714 = vcmp.gt.f32.partialorder %v698, 0.0
    %vm715 = vcmp.gt.f32.partialorder %v699, 0.0
    %vm716 = vcmp.gt.f32.partialorder %v700, 0.0
    %vm717 = vcmp.gt.f32.partialorder %v701, 0.0
    %vm718 = vcmp.gt.f32.partialorder %v702, 0.0
    %vm719 = vcmp.gt.f32.partialorder %v703, 0.0
    %v720 = vmul.f32 %v688, 0.01
    %v721 = vmul.f32 %v689, 0.01
    %v722 = vmul.f32 %v690, 0.01
    %v723 = vmul.f32 %v691, 0.01
    %v724 = vmul.f32 %v692, 0.01
    %v725 = vmul.f32 %v693, 0.01
    %v726 = vmul.f32 %v694, 0.01
    %v727 = vmul.f32 %v695, 0.01
    %v728 = vmul.f32 %v696, 0.01
    %v729 = vmul.f32 %v697, 0.01
    %v730 = vmul.f32 %v698, 0.01
    %v731 = vmul.f32 %v699, 0.01
    %v732 = vmul.f32 %v700, 0.01
    %v733 = vmul.f32 %v701, 0.01
    %v734 = vmul.f32 %v702, 0.01
    %v735 = vmul.f32 %v703, 0.01
    %v736 = vsel %vm704, %v688, %v720
    %v737 = vsel %vm705, %v689, %v721
    %v738 = vsel %vm706, %v690, %v722
    %v739 = vsel %vm707, %v691, %v723
    %v740 = vsel %vm708, %v692, %v724
    %v741 = vsel %vm709, %v693, %v725
    %v742 = vsel %vm710, %v694, %v726
    %v743 = vsel %vm711, %v695, %v727
    %v744 = vsel %vm712, %v696, %v728
    %v745 = vsel %vm713, %v697, %v729
    %v746 = vsel %vm714, %v698, %v730
    %v747 = vsel %vm715, %v699, %v731
    %v748 = vsel %vm716, %v700, %v732
    %v749 = vsel %vm717, %v701, %v733
    %v750 = vsel %vm718, %v702, %v734
    %v751 = vsel %vm719, %v703, %v735
    %v752 = vlaneseq
    %v753 = vshrl.u32 %v752, 7
    %v754 = vadd.s32 %v753, 8
    %v755 = vadd.s32 %v753, 16
    %v756 = vadd.s32 %v753, 24
    %v757 = vadd.s32 %v753, 32
    %v758 = vadd.s32 %v753, 40
    %v759 = vadd.s32 %v753, 48
    %v760 = vadd.s32 %v753, 56
    %v761 = vadd.s32 %v753, 64
    %v762 = vadd.s32 %v753, 72
    %v763 = vadd.s32 %v753, 80
    %v764 = vadd.s32 %v753, 88
    %v765 = vadd.s32 %v753, 96
    %v766 = vadd.s32 %v753, 104
    %v767 = vadd.s32 %v753, 112
    %v768 = vadd.s32 %v753, 120
    %v769 = vand.u32 %v753, 63
    %v770 = vand.u32 %v754, 63
    %v771 = vand.u32 %v755, 63
    %v772 = vand.u32 %v756, 63
    %v773 = vand.u32 %v757, 63
    %v774 = vand.u32 %v758, 63
    %v775 = vand.u32 %v759, 63
    %v776 = vand.u32 %v760, 63
    %v777 = vand.u32 %v761, 63
    %v778 = vand.u32 %v762, 63
    %v779 = vand.u32 %v763, 63
    %v780 = vand.u32 %v764, 63
    %v781 = vand.u32 %v765, 63
    %v782 = vand.u32 %v766, 63
    %v783 = vand.u32 %v767, 63
    %v784 = vand.u32 %v768, 63
    %vm785 = vcmp.lt.s32.totalorder %v769, 32
    %vm786 = vcmp.lt.s32.totalorder %v770, 32
    %vm787 = vcmp.lt.s32.totalorder %v771, 32
    %vm788 = vcmp.lt.s32.totalorder %v772, 32
    %vm789 = vcmp.lt.s32.totalorder %v773, 32
    %vm790 = vcmp.lt.s32.totalorder %v774, 32
    %vm791 = vcmp.lt.s32.totalorder %v775, 32
    %vm792 = vcmp.lt.s32.totalorder %v776, 32
    %vm793 = vcmp.lt.s32.totalorder %v777, 32
    %vm794 = vcmp.lt.s32.totalorder %v778, 32
    %vm795 = vcmp.lt.s32.totalorder %v779, 32
    %vm796 = vcmp.lt.s32.totalorder %v780, 32
    %vm797 = vcmp.lt.s32.totalorder %v781, 32
    %vm798 = vcmp.lt.s32.totalorder %v782, 32
    %vm799 = vcmp.lt.s32.totalorder %v783, 32
    %vm800 = vcmp.lt.s32.totalorder %v784, 32
    %v801 = vsel %vm785, 1, 0
    %v802 = vsel %vm786, 1, 0
    %v803 = vsel %vm787, 1, 0
    %v804 = vsel %vm788, 1, 0
    %v805 = vsel %vm789, 1, 0
    %v806 = vsel %vm790, 1, 0
    %v807 = vsel %vm791, 1, 0
    %v808 = vsel %vm792, 1, 0
    %v809 = vsel %vm793, 1, 0
    %v810 = vsel %vm794, 1, 0
    %v811 = vsel %vm795, 1, 0
    %v812 = vsel %vm796, 1, 0
    %v813 = vsel %vm797, 1, 0
    %v814 = vsel %vm798, 1, 0
    %v815 = vsel %vm799, 1, 0
    %v816 = vsel %vm800, 1, 0
    %vm817 = vcmp.eq.s32.totalorder %v801, 1
    %vm818 = vcmp.eq.s32.totalorder %v802, 1
    %vm819 = vcmp.eq.s32.totalorder %v803, 1
    %vm820 = vcmp.eq.s32.totalorder %v804, 1
    %vm821 = vcmp.eq.s32.totalorder %v805, 1
    %vm822 = vcmp.eq.s32.totalorder %v806, 1
    %vm823 = vcmp.eq.s32.totalorder %v807, 1
    %vm824 = vcmp.eq.s32.totalorder %v808, 1
    %vm825 = vcmp.eq.s32.totalorder %v809, 1
    %vm826 = vcmp.eq.s32.totalorder %v810, 1
    %vm827 = vcmp.eq.s32.totalorder %v811, 1
    %vm828 = vcmp.eq.s32.totalorder %v812, 1
    %vm829 = vcmp.eq.s32.totalorder %v813, 1
    %vm830 = vcmp.eq.s32.totalorder %v814, 1
    %vm831 = vcmp.eq.s32.totalorder %v815, 1
    %vm832 = vcmp.eq.s32.totalorder %v816, 1
    %v833 = vsel %vm817, %v736, 0.0
    %v834 = vsel %vm818, %v737, 0.0
    %v835 = vsel %vm819, %v738, 0.0
    %v836 = vsel %vm820, %v739, 0.0
    %v837 = vsel %vm821, %v740, 0.0
    %v838 = vsel %vm822, %v741, 0.0
    %v839 = vsel %vm823, %v742, 0.0
    %v840 = vsel %vm824, %v743, 0.0
    %v841 = vsel %vm825, %v744, 0.0
    %v842 = vsel %vm826, %v745, 0.0
    %v843 = vsel %vm827, %v746, 0.0
    %v844 = vsel %vm828, %v747, 0.0
    %v845 = vsel %vm829, %v748, 0.0
    %v846 = vsel %vm830, %v749, 0.0
    %v847 = vsel %vm831, %v750, 0.0
    %v848 = vsel %vm832, %v751, 0.0
    %849 = vst [vmem:[#allocation2 + $0x8] sm:$0xff] %v833
    %850 = vst [vmem:[#allocation2 + $0x10] sm:$0xff] %v834
    %851 = vst [vmem:[#allocation2 + $0x18] sm:$0xff] %v835
    %852 = vst [vmem:[#allocation2 + $0x20] sm:$0xff] %v836
    %853 = vst [vmem:[#allocation2 + $0x28] sm:$0xff] %v837
    %854 = vst [vmem:[#allocation2 + $0x30] sm:$0xff] %v838
    %855 = vst [vmem:[#allocation2 + $0x38] sm:$0xff] %v839
    %856 = vst [vmem:[#allocation2 + $0x40] sm:$0xff] %v840
    %857 = vst [vmem:[#allocation2 + $0x48] sm:$0xff] %v841
    %858 = vst [vmem:[#allocation2 + $0x50] sm:$0xff] %v842
    %859 = vst [vmem:[#allocation2 + $0x58] sm:$0xff] %v843
    %860 = vst [vmem:[#allocation2 + $0x60] sm:$0xff] %v844
    %861 = vst [vmem:[#allocation2 + $0x68] sm:$0xff] %v845
    %862 = vst [vmem:[#allocation2 + $0x70] sm:$0xff] %v846
    %863 = vst [vmem:[#allocation2 + $0x78] sm:$0xff] %v847
    %864 = vst [vmem:[#allocation2 + $0x80] sm:$0xff] %v848
    %s865 = scalar_lea.vmem [#allocation2], 8
    %v866 = vld [vmem:[%s865] ss:$2 sm:$0xff]
    %s867 = scalar_lea.vmem [#allocation2], 24
    %v868 = vld [vmem:[%s867] ss:$2 sm:$0xff]
    %s869 = scalar_lea.vmem [#allocation2], 40
    %v870 = vld [vmem:[%s869] ss:$2 sm:$0xff]
    %s871 = scalar_lea.vmem [#allocation2], 56
    %v872 = vld [vmem:[%s871] ss:$2 sm:$0xff]
    %s873 = scalar_lea.vmem [#allocation2], 72
    %v874 = vld [vmem:[%s873] ss:$2 sm:$0xff]
    %s875 = scalar_lea.vmem [#allocation2], 88
    %v876 = vld [vmem:[%s875] ss:$2 sm:$0xff]
    %s877 = scalar_lea.vmem [#allocation2], 104
    %v878 = vld [vmem:[%s877] ss:$2 sm:$0xff]
    %s879 = scalar_lea.vmem [#allocation2], 120
    %v880 = vld [vmem:[%s879] ss:$2 sm:$0xff]
    %s881 = scalar_lea.vmem [#allocation2], 9
    %v882 = vld [vmem:[%s881] ss:$2 sm:$0xff]
    %s883 = scalar_lea.vmem [#allocation2], 25
    %v884 = vld [vmem:[%s883] ss:$2 sm:$0xff]
    %s885 = scalar_lea.vmem [#allocation2], 41
    %v886 = vld [vmem:[%s885] ss:$2 sm:$0xff]
    %s887 = scalar_lea.vmem [#allocation2], 57
    %v888 = vld [vmem:[%s887] ss:$2 sm:$0xff]
    %s889 = scalar_lea.vmem [#allocation2], 73
    %v890 = vld [vmem:[%s889] ss:$2 sm:$0xff]
    %s891 = scalar_lea.vmem [#allocation2], 89
    %v892 = vld [vmem:[%s891] ss:$2 sm:$0xff]
    %s893 = scalar_lea.vmem [#allocation2], 105
    %v894 = vld [vmem:[%s893] ss:$2 sm:$0xff]
    %s895 = scalar_lea.vmem [#allocation2], 121
    %v896 = vld [vmem:[%s895] ss:$2 sm:$0xff]
    %v897 = vmax.f32 %v866, %v882
    %v898 = vmax.f32 %v868, %v884
    %v899 = vmax.f32 %v870, %v886
    %v900 = vmax.f32 %v872, %v888
    %v901 = vmax.f32 %v874, %v890
    %v902 = vmax.f32 %v876, %v892
    %v903 = vmax.f32 %v878, %v894
    %v904 = vmax.f32 %v880, %v896
    %905 = vst [vmem:[#allocation2 + $0x8] sm:$0xff] %v897
    %906 = vst [vmem:[#allocation2 + $0x10] sm:$0xff] %v898
    %907 = vst [vmem:[#allocation2 + $0x18] sm:$0xff] %v899
    %908 = vst [vmem:[#allocation2 + $0x20] sm:$0xff] %v900
    %909 = vst [vmem:[#allocation2 + $0x28] sm:$0xff] %v901
    %910 = vst [vmem:[#allocation2 + $0x30] sm:$0xff] %v902
    %911 = vst [vmem:[#allocation2 + $0x38] sm:$0xff] %v903
    %912 = vst [vmem:[#allocation2 + $0x40] sm:$0xff] %v904
    %v913 = vld [vmem:[#allocation2 + $0x7] sm:$0xff]
    %v914 = vld [vmem:[#allocation2 + $0xf] sm:$0xff]
    %v915 = vld [vmem:[#allocation2 + $0x17] sm:$0xff]
    %v916 = vld [vmem:[#allocation2 + $0x1f] sm:$0xff]
    %v917 = vld [vmem:[#allocation2 + $0x27] sm:$0xff]
    %v918 = vld [vmem:[#allocation2 + $0x2f] sm:$0xff]
    %v919 = vld [vmem:[#allocation2 + $0x37] sm:$0xff]
    %v920 = vld [vmem:[#allocation2 + $0x3f] sm:$0xff]
    %v921 = vpack.c.bf16 %v914, %v913
    %v922 = vpack.c.bf16 %v916, %v915
    %v923 = vpack.c.bf16 %v918, %v917
    %v924 = vpack.c.bf16 %v920, %v919
    %s925 = scalar_lea.vmem [#allocation4], 192
    %v926 = vld [vmem:[%s925] sm:$0xf]
    %v927 = vld [vmem:[%s925 + $0x4] sm:$0xf]
    %v928 = vld [vmem:[%s925 + $0x8] sm:$0xf]
    %v929 = vld [vmem:[%s925 + $0xc] sm:$0xf]
    %v930 = vld [vmem:[%s925 + $0x10] sm:$0xf]
    %v931 = vld [vmem:[%s925 + $0x14] sm:$0xf]
    %v932 = vld [vmem:[%s925 + $0x18] sm:$0xf]
    %v933 = vld [vmem:[%s925 + $0x1c] sm:$0xf]
    %v934 = vld [vmem:[%s925 + $0x20] sm:$0xf]
    %v935 = vld [vmem:[%s925 + $0x24] sm:$0xf]
    %v936 = vld [vmem:[%s925 + $0x28] sm:$0xf]
    %v937 = vld [vmem:[%s925 + $0x2c] sm:$0xf]
    %v938 = vld [vmem:[%s925 + $0x30] sm:$0xf]
    %v939 = vld [vmem:[%s925 + $0x34] sm:$0xf]
    %v940 = vld [vmem:[%s925 + $0x38] sm:$0xf]
    %v941 = vld [vmem:[%s925 + $0x3c] sm:$0xf]
    %v942 = vld [vmem:[#allocation2 + $0x8] sm:$0xff]
    %v943 = vld [vmem:[#allocation2 + $0x10] sm:$0xff]
    %v944 = vld [vmem:[#allocation2 + $0x18] sm:$0xff]
    %v945 = vld [vmem:[#allocation2 + $0x20] sm:$0xff]
    %v946 = vld [vmem:[#allocation2 + $0x28] sm:$0xff]
    %v947 = vld [vmem:[#allocation2 + $0x30] sm:$0xff]
    %v948 = vld [vmem:[#allocation2 + $0x38] sm:$0xff]
    %v949 = vld [vmem:[#allocation2 + $0x40] sm:$0xff]
    %v950 = vpack.c.bf16 %v943, %v942
    %v951 = vpack.c.bf16 %v945, %v944
    %v952 = vpack.c.bf16 %v947, %v946
    %v953 = vpack.c.bf16 %v949, %v948
    %s954 = scalar_lea.vmem [#allocation4], 256
    %v955 = vld [vmem:[%s954] sm:$0xf]
    %v956 = vld [vmem:[%s954 + $0x4] sm:$0xf]
    %v957 = vld [vmem:[%s954 + $0x8] sm:$0xf]
    %v958 = vld [vmem:[%s954 + $0xc] sm:$0xf]
    %v959 = vld [vmem:[%s954 + $0x10] sm:$0xf]
    %v960 = vld [vmem:[%s954 + $0x14] sm:$0xf]
    %v961 = vld [vmem:[%s954 + $0x18] sm:$0xf]
    %v962 = vld [vmem:[%s954 + $0x1c] sm:$0xf]
    %v963 = vld [vmem:[%s954 + $0x20] sm:$0xf]
    %v964 = vld [vmem:[%s954 + $0x24] sm:$0xf]
    %v965 = vld [vmem:[%s954 + $0x28] sm:$0xf]
    %v966 = vld [vmem:[%s954 + $0x2c] sm:$0xf]
    %v967 = vld [vmem:[%s954 + $0x30] sm:$0xf]
    %v968 = vld [vmem:[%s954 + $0x34] sm:$0xf]
    %v969 = vld [vmem:[%s954 + $0x38] sm:$0xf]
    %v970 = vld [vmem:[%s954 + $0x3c] sm:$0xf]
    %v987 = vunpack.c.l.b16 %v955
    %v988 = vunpack.c.l.b16 %v956
    %v989 = vunpack.c.l.b16 %v957
    %v990 = vunpack.c.l.b16 %v958
    %v991 = vunpack.c.l.b16 %v959
    %v992 = vunpack.c.l.b16 %v960
    %v993 = vunpack.c.l.b16 %v961
    %v994 = vunpack.c.l.b16 %v962
    %v995 = vunpack.c.l.b16 %v963
    %v996 = vunpack.c.l.b16 %v964
    %v997 = vunpack.c.l.b16 %v965
    %v998 = vunpack.c.l.b16 %v966
    %v999 = vunpack.c.l.b16 %v967
    %v1000 = vunpack.c.l.b16 %v968
    %v1001 = vunpack.c.l.b16 %v969
    %v1002 = vunpack.c.l.b16 %v970
    %v1003 = vpack.c.b16 %v988, %v987
    %v1004 = vpack.c.b16 %v990, %v989
    %v1005 = vpack.c.b16 %v992, %v991
    %v1006 = vpack.c.b16 %v994, %v993
    %v1007 = vpack.c.b16 %v996, %v995
    %v1008 = vpack.c.b16 %v998, %v997
    %v1009 = vpack.c.b16 %v1000, %v999
    %v1010 = vpack.c.b16 %v1002, %v1001
    %1019 = vmatprep.subr.bf16.mxu0 0
    %1020 = vmatpush1.bf16.msra.mxu0 %v1003
    %1021 = vmatprep.subr.bf16.mxu0 0
    %1022 = vmatpush1.bf16.msra.mxu0 %v1004
    %1023 = vmatprep.subr.bf16.mxu0 0
    %1024 = vmatpush1.bf16.msra.mxu0 %v1005
    %1025 = vmatprep.subr.bf16.mxu0 0
    %1026 = vmatpush1.bf16.msra.mxu0 %v1006
    %1027 = vmatprep.subr.bf16.mxu0 0
    %1028 = vmatpush1.bf16.msra.mxu0 %v1007
    %1029 = vmatprep.subr.bf16.mxu0 0
    %1030 = vmatpush1.bf16.msra.mxu0 %v1008
    %1031 = vmatprep.subr.bf16.mxu0 0
    %1032 = vmatpush1.bf16.msra.mxu0 %v1009
    %1033 = vmatprep.subr.bf16.mxu0 0
    %1034 = vmatpush1.bf16.msra.mxu0 %v1010
    %1035 = vmatprep.subr.bf16.mxu0 0
    %1036 = vmatpush1.bf16.msra.mxu0 0
    %1037 = vmatprep.subr.bf16.mxu0 0
    %1038 = vmatpush1.bf16.msra.mxu0 0
    %1039 = vmatprep.subr.bf16.mxu0 0
    %1040 = vmatpush1.bf16.msra.mxu0 0
    %1041 = vmatprep.subr.bf16.mxu0 0
    %1042 = vmatpush1.bf16.msra.mxu0 0
    %1043 = vmatprep.subr.bf16.mxu0 0
    %1044 = vmatpush1.bf16.msra.mxu0 0
    %1045 = vmatprep.subr.bf16.mxu0 0
    %1046 = vmatpush1.bf16.msra.mxu0 0
    %1047 = vmatprep.subr.bf16.mxu0 0
    %1048 = vmatpush1.bf16.msra.mxu0 0
    %1049 = vmatprep.subr.bf16.mxu0 0
    %1050 = vmatpush1.bf16.msra.mxu0 0
    %1051 = vmatprep.mubr.bf16.mxu0 0
    %1052 = vmatmul.mubr.bf16.gmra.mrb[0].mxu0 %v950
    %v1053 = vpop.f32.mrb[0].mxu0
    %v1054 = vadd.f32 0.0, %v1053
    %v1055 = vpop.f32.mrb[0].mxu0
    %v1056 = vpop.f32.mrb[0].mxu0
    %v1057 = vadd.f32 0.0, %v1056
    %v1058 = vpop.f32.mrb[0].mxu0
    %1059 = vmatprep.mubr.bf16.mxu0 0
    %1060 = vmatmul.mubr.bf16.gmra.mrb[0].mxu0 %v951
    %v1061 = vpop.f32.mrb[0].mxu0
    %v1062 = vadd.f32 0.0, %v1061
    %v1063 = vpop.f32.mrb[0].mxu0
    %v1064 = vpop.f32.mrb[0].mxu0
    %v1065 = vadd.f32 0.0, %v1064
    %v1066 = vpop.f32.mrb[0].mxu0
    %1067 = vmatprep.mubr.bf16.mxu0 0
    %1068 = vmatmul.mubr.bf16.gmra.mrb[0].mxu0 %v952
    %v1069 = vpop.f32.mrb[0].mxu0
    %v1070 = vadd.f32 0.0, %v1069
    %v1071 = vpop.f32.mrb[0].mxu0
    %v1072 = vpop.f32.mrb[0].mxu0
    %v1073 = vadd.f32 0.0, %v1072
    %v1074 = vpop.f32.mrb[0].mxu0
    %1075 = vmatprep.mubr.bf16.mxu0 0
    %1076 = vmatmul.mubr.bf16.gmra.mrb[0].mxu0 %v953
    %v1077 = vpop.f32.mrb[0].mxu0
    %v1078 = vadd.f32 0.0, %v1077
    %v1079 = vpop.f32.mrb[0].mxu0
    %v1080 = vpop.f32.mrb[0].mxu0
    %v1081 = vadd.f32 0.0, %v1080
    %v1082 = vpop.f32.mrb[0].mxu0
    %1083 = vdwg.mxu0
    %v1100 = vunpack.c.l.b16 %v926
    %v1101 = vunpack.c.l.b16 %v927
    %v1102 = vunpack.c.l.b16 %v928
    %v1103 = vunpack.c.l.b16 %v929
    %v1104 = vunpack.c.l.b16 %v930
    %v1105 = vunpack.c.l.b16 %v931
    %v1106 = vunpack.c.l.b16 %v932
    %v1107 = vunpack.c.l.b16 %v933
    %v1108 = vunpack.c.l.b16 %v934
    %v1109 = vunpack.c.l.b16 %v935
    %v1110 = vunpack.c.l.b16 %v936
    %v1111 = vunpack.c.l.b16 %v937
    %v1112 = vunpack.c.l.b16 %v938
    %v1113 = vunpack.c.l.b16 %v939
    %v1114 = vunpack.c.l.b16 %v940
    %v1115 = vunpack.c.l.b16 %v941
    %v1116 = vpack.c.b16 %v1101, %v1100
    %v1117 = vpack.c.b16 %v1103, %v1102
    %v1118 = vpack.c.b16 %v1105, %v1104
    %v1119 = vpack.c.b16 %v1107, %v1106
    %v1120 = vpack.c.b16 %v1109, %v1108
    %v1121 = vpack.c.b16 %v1111, %v1110
    %v1122 = vpack.c.b16 %v1113, %v1112
    %v1123 = vpack.c.b16 %v1115, %v1114
    %1132 = vmatprep.subr.bf16.mxu0 0
    %1133 = vmatpush1.bf16.msra.mxu0 %v1116
    %1134 = vmatprep.subr.bf16.mxu0 0
    %1135 = vmatpush1.bf16.msra.mxu0 %v1117
    %1136 = vmatprep.subr.bf16.mxu0 0
    %1137 = vmatpush1.bf16.msra.mxu0 %v1118
    %1138 = vmatprep.subr.bf16.mxu0 0
    %1139 = vmatpush1.bf16.msra.mxu0 %v1119
    %1140 = vmatprep.subr.bf16.mxu0 0
    %1141 = vmatpush1.bf16.msra.mxu0 %v1120
    %1142 = vmatprep.subr.bf16.mxu0 0
    %1143 = vmatpush1.bf16.msra.mxu0 %v1121
    %1144 = vmatprep.subr.bf16.mxu0 0
    %1145 = vmatpush1.bf16.msra.mxu0 %v1122
    %1146 = vmatprep.subr.bf16.mxu0 0
    %1147 = vmatpush1.bf16.msra.mxu0 %v1123
    %1148 = vmatprep.subr.bf16.mxu0 0
    %1149 = vmatpush1.bf16.msra.mxu0 0
    %1150 = vmatprep.subr.bf16.mxu0 0
    %1151 = vmatpush1.bf16.msra.mxu0 0
    %1152 = vmatprep.subr.bf16.mxu0 0
    %1153 = vmatpush1.bf16.msra.mxu0 0
    %1154 = vmatprep.subr.bf16.mxu0 0
    %1155 = vmatpush1.bf16.msra.mxu0 0
    %1156 = vmatprep.subr.bf16.mxu0 0
    %1157 = vmatpush1.bf16.msra.mxu0 0
    %1158 = vmatprep.subr.bf16.mxu0 0
    %1159 = vmatpush1.bf16.msra.mxu0 0
    %1160 = vmatprep.subr.bf16.mxu0 0
    %1161 = vmatpush1.bf16.msra.mxu0 0
    %1162 = vmatprep.subr.bf16.mxu0 0
    %1163 = vmatpush1.bf16.msra.mxu0 0
    %1164 = vmatprep.mubr.bf16.mxu0 0
    %1165 = vmatmul.mubr.bf16.gmra.mrb[0].mxu0 %v921
    %v1166 = vpop.f32.mrb[0].mxu0
    %v1167 = vadd.f32 %v1054, %v1166
    %v1168 = vpop.f32.mrb[0].mxu0
    %v1169 = vpop.f32.mrb[0].mxu0
    %v1170 = vadd.f32 %v1057, %v1169
    %v1171 = vpop.f32.mrb[0].mxu0
    %1172 = vmatprep.mubr.bf16.mxu0 0
    %1173 = vmatmul.mubr.bf16.gmra.mrb[0].mxu0 %v922
    %v1174 = vpop.f32.mrb[0].mxu0
    %v1175 = vadd.f32 %v1062, %v1174
    %v1176 = vpop.f32.mrb[0].mxu0
    %v1177 = vpop.f32.mrb[0].mxu0
    %v1178 = vadd.f32 %v1065, %v1177
    %v1179 = vpop.f32.mrb[0].mxu0
    %1180 = vmatprep.mubr.bf16.mxu0 0
    %1181 = vmatmul.mubr.bf16.gmra.mrb[0].mxu0 %v923
    %v1182 = vpop.f32.mrb[0].mxu0
    %v1183 = vadd.f32 %v1070, %v1182
    %v1184 = vpop.f32.mrb[0].mxu0
    %v1185 = vpop.f32.mrb[0].mxu0
    %v1186 = vadd.f32 %v1073, %v1185
    %v1187 = vpop.f32.mrb[0].mxu0
    %1188 = vmatprep.mubr.bf16.mxu0 0
    %1189 = vmatmul.mubr.bf16.gmra.mrb[0].mxu0 %v924
    %v1190 = vpop.f32.mrb[0].mxu0
    %v1191 = vadd.f32 %v1078, %v1190
    %v1192 = vpop.f32.mrb[0].mxu0
    %v1193 = vpop.f32.mrb[0].mxu0
    %v1194 = vadd.f32 %v1081, %v1193
    %v1195 = vpop.f32.mrb[0].mxu0
    %1196 = vdwg.mxu0
    %v1197 = vld [vmem:[#allocation2 + $0x9] sm:$0xff]
    %v1198 = vld [vmem:[#allocation2 + $0x11] sm:$0xff]
    %v1199 = vld [vmem:[#allocation2 + $0x19] sm:$0xff]
    %v1200 = vld [vmem:[#allocation2 + $0x21] sm:$0xff]
    %v1201 = vld [vmem:[#allocation2 + $0x29] sm:$0xff]
    %v1202 = vld [vmem:[#allocation2 + $0x31] sm:$0xff]
    %v1203 = vld [vmem:[#allocation2 + $0x39] sm:$0xff]
    %v1204 = vld [vmem:[#allocation2 + $0x41] sm:$0xff]
    %v1205 = vpack.c.bf16 %v1198, %v1197
    %v1206 = vpack.c.bf16 %v1200, %v1199
    %v1207 = vpack.c.bf16 %v1202, %v1201
    %v1208 = vpack.c.bf16 %v1204, %v1203
    %s1209 = scalar_lea.vmem [#allocation4], 320
    %v1210 = vld [vmem:[%s1209] sm:$0xf]
    %v1211 = vld [vmem:[%s1209 + $0x4] sm:$0xf]
    %v1212 = vld [vmem:[%s1209 + $0x8] sm:$0xf]
    %v1213 = vld [vmem:[%s1209 + $0xc] sm:$0xf]
    %v1214 = vld [vmem:[%s1209 + $0x10] sm:$0xf]
    %v1215 = vld [vmem:[%s1209 + $0x14] sm:$0xf]
    %v1216 = vld [vmem:[%s1209 + $0x18] sm:$0xf]
    %v1217 = vld [vmem:[%s1209 + $0x1c] sm:$0xf]
    %v1218 = vld [vmem:[%s1209 + $0x20] sm:$0xf]
    %v1219 = vld [vmem:[%s1209 + $0x24] sm:$0xf]
    %v1220 = vld [vmem:[%s1209 + $0x28] sm:$0xf]
    %v1221 = vld [vmem:[%s1209 + $0x2c] sm:$0xf]
    %v1222 = vld [vmem:[%s1209 + $0x30] sm:$0xf]
    %v1223 = vld [vmem:[%s1209 + $0x34] sm:$0xf]
    %v1224 = vld [vmem:[%s1209 + $0x38] sm:$0xf]
    %v1225 = vld [vmem:[%s1209 + $0x3c] sm:$0xf]
    %v1242 = vunpack.c.l.b16 %v1210
    %v1243 = vunpack.c.l.b16 %v1211
    %v1244 = vunpack.c.l.b16 %v1212
    %v1245 = vunpack.c.l.b16 %v1213
    %v1246 = vunpack.c.l.b16 %v1214
    %v1247 = vunpack.c.l.b16 %v1215
    %v1248 = vunpack.c.l.b16 %v1216
    %v1249 = vunpack.c.l.b16 %v1217
    %v1250 = vunpack.c.l.b16 %v1218
    %v1251 = vunpack.c.l.b16 %v1219
    %v1252 = vunpack.c.l.b16 %v1220
    %v1253 = vunpack.c.l.b16 %v1221
    %v1254 = vunpack.c.l.b16 %v1222
    %v1255 = vunpack.c.l.b16 %v1223
    %v1256 = vunpack.c.l.b16 %v1224
    %v1257 = vunpack.c.l.b16 %v1225
    %v1258 = vpack.c.b16 %v1243, %v1242
    %v1259 = vpack.c.b16 %v1245, %v1244
    %v1260 = vpack.c.b16 %v1247, %v1246
    %v1261 = vpack.c.b16 %v1249, %v1248
    %v1262 = vpack.c.b16 %v1251, %v1250
    %v1263 = vpack.c.b16 %v1253, %v1252
    %v1264 = vpack.c.b16 %v1255, %v1254
    %v1265 = vpack.c.b16 %v1257, %v1256
    %1274 = vmatprep.subr.bf16.mxu0 0
    %1275 = vmatpush1.bf16.msra.mxu0 %v1258
    %1276 = vmatprep.subr.bf16.mxu0 0
    %1277 = vmatpush1.bf16.msra.mxu0 %v1259
    %1278 = vmatprep.subr.bf16.mxu0 0
    %1279 = vmatpush1.bf16.msra.mxu0 %v1260
    %1280 = vmatprep.subr.bf16.mxu0 0
    %1281 = vmatpush1.bf16.msra.mxu0 %v1261
    %1282 = vmatprep.subr.bf16.mxu0 0
    %1283 = vmatpush1.bf16.msra.mxu0 %v1262
    %1284 = vmatprep.subr.bf16.mxu0 0
    %1285 = vmatpush1.bf16.msra.mxu0 %v1263
    %1286 = vmatprep.subr.bf16.mxu0 0
    %1287 = vmatpush1.bf16.msra.mxu0 %v1264
    %1288 = vmatprep.subr.bf16.mxu0 0
    %1289 = vmatpush1.bf16.msra.mxu0 %v1265
    %1290 = vmatprep.subr.bf16.mxu0 0
    %1291 = vmatpush1.bf16.msra.mxu0 0
    %1292 = vmatprep.subr.bf16.mxu0 0
    %1293 = vmatpush1.bf16.msra.mxu0 0
    %1294 = vmatprep.subr.bf16.mxu0 0
    %1295 = vmatpush1.bf16.msra.mxu0 0
    %1296 = vmatprep.subr.bf16.mxu0 0
    %1297 = vmatpush1.bf16.msra.mxu0 0
    %1298 = vmatprep.subr.bf16.mxu0 0
    %1299 = vmatpush1.bf16.msra.mxu0 0
    %1300 = vmatprep.subr.bf16.mxu0 0
    %1301 = vmatpush1.bf16.msra.mxu0 0
    %1302 = vmatprep.subr.bf16.mxu0 0
    %1303 = vmatpush1.bf16.msra.mxu0 0
    %1304 = vmatprep.subr.bf16.mxu0 0
    %1305 = vmatpush1.bf16.msra.mxu0 0
    %1306 = vmatprep.mubr.bf16.mxu0 0
    %1307 = vmatmul.mubr.bf16.gmra.mrb[0].mxu0 %v1205
    %v1308 = vpop.f32.mrb[0].mxu0
    %v1309 = vadd.f32 0.0, %v1308
    %v1310 = vpop.f32.mrb[0].mxu0
    %v1311 = vpop.f32.mrb[0].mxu0
    %v1312 = vadd.f32 0.0, %v1311
    %v1313 = vpop.f32.mrb[0].mxu0
    %1314 = vmatprep.mubr.bf16.mxu0 0
    %1315 = vmatmul.mubr.bf16.gmra.mrb[0].mxu0 %v1206
    %v1316 = vpop.f32.mrb[0].mxu0
    %v1317 = vadd.f32 0.0, %v1316
    %v1318 = vpop.f32.mrb[0].mxu0
    %v1319 = vpop.f32.mrb[0].mxu0
    %v1320 = vadd.f32 0.0, %v1319
    %v1321 = vpop.f32.mrb[0].mxu0
    %1322 = vmatprep.mubr.bf16.mxu0 0
    %1323 = vmatmul.mubr.bf16.gmra.mrb[0].mxu0 %v1207
    %v1324 = vpop.f32.mrb[0].mxu0
    %v1325 = vadd.f32 0.0, %v1324
    %v1326 = vpop.f32.mrb[0].mxu0
    %v1327 = vpop.f32.mrb[0].mxu0
    %v1328 = vadd.f32 0.0, %v1327
    %v1329 = vpop.f32.mrb[0].mxu0
    %1330 = vmatprep.mubr.bf16.mxu0 0
    %1331 = vmatmul.mubr.bf16.gmra.mrb[0].mxu0 %v1208
    %v1332 = vpop.f32.mrb[0].mxu0
    %v1333 = vadd.f32 0.0, %v1332
    %v1334 = vpop.f32.mrb[0].mxu0
    %v1335 = vpop.f32.mrb[0].mxu0
    %v1336 = vadd.f32 0.0, %v1335
    %v1337 = vpop.f32.mrb[0].mxu0
    %1338 = vdwg.mxu0
    %v1339 = vadd.f32 %v1167, %v1309
    %v1340 = vadd.f32 %v1170, %v1312
    %v1341 = vadd.f32 %v1175, %v1317
    %v1342 = vadd.f32 %v1178, %v1320
    %v1343 = vadd.f32 %v1183, %v1325
    %v1344 = vadd.f32 %v1186, %v1328
    %v1345 = vadd.f32 %v1191, %v1333
    %v1346 = vadd.f32 %v1194, %v1336
    %s1347 = scalar_lea.vmem %s2, 1
    %v1348 = vld [vmem:[%s1347] sm:$0x1]
    %v1350 = vlaneseq
    %v1351 = vshrl.u32 %v1350, 7
    %v1352 = vsub.s32 0, %v1351
    %v1353 = vrot.slane %v1348, %v1352
    %v1355 = vmul.f32 %v1339, %v1353
    %v1356 = vmul.f32 %v1340, %v1353
    %v1357 = vmul.f32 %v1341, %v1353
    %v1358 = vmul.f32 %v1342, %v1353
    %v1359 = vmul.f32 %v1343, %v1353
    %v1360 = vmul.f32 %v1344, %v1353
    %v1361 = vmul.f32 %v1345, %v1353
    %v1362 = vmul.f32 %v1346, %v1353
    %s1363 = scalar_lea.vmem %s3, 1
    %v1364 = vld [vmem:[%s1363] sm:$0x1]
    %v1366 = vlaneseq
    %v1367 = vshrl.u32 %v1366, 7
    %v1368 = vsub.s32 0, %v1367
    %v1369 = vrot.slane %v1364, %v1368
    %v1371 = vadd.f32 %v1355, %v1369
    %v1372 = vadd.f32 %v1356, %v1369
    %v1373 = vadd.f32 %v1357, %v1369
    %v1374 = vadd.f32 %v1358, %v1369
    %v1375 = vadd.f32 %v1359, %v1369
    %v1376 = vadd.f32 %v1360, %v1369
    %v1377 = vadd.f32 %v1361, %v1369
    %v1378 = vadd.f32 %v1362, %v1369
    %vm1379 = vcmp.gt.f32.partialorder %v1371, 0.0
    %vm1380 = vcmp.gt.f32.partialorder %v1372, 0.0
    %vm1381 = vcmp.gt.f32.partialorder %v1373, 0.0
    %vm1382 = vcmp.gt.f32.partialorder %v1374, 0.0
    %vm1383 = vcmp.gt.f32.partialorder %v1375, 0.0
    %vm1384 = vcmp.gt.f32.partialorder %v1376, 0.0
    %vm1385 = vcmp.gt.f32.partialorder %v1377, 0.0
    %vm1386 = vcmp.gt.f32.partialorder %v1378, 0.0
    %v1387 = vmul.f32 %v1371, 0.01
    %v1388 = vmul.f32 %v1372, 0.01
    %v1389 = vmul.f32 %v1373, 0.01
    %v1390 = vmul.f32 %v1374, 0.01
    %v1391 = vmul.f32 %v1375, 0.01
    %v1392 = vmul.f32 %v1376, 0.01
    %v1393 = vmul.f32 %v1377, 0.01
    %v1394 = vmul.f32 %v1378, 0.01
    %v1395 = vsel %vm1379, %v1371, %v1387
    %v1396 = vsel %vm1380, %v1372, %v1388
    %v1397 = vsel %vm1381, %v1373, %v1389
    %v1398 = vsel %vm1382, %v1374, %v1390
    %v1399 = vsel %vm1383, %v1375, %v1391
    %v1400 = vsel %vm1384, %v1376, %v1392
    %v1401 = vsel %vm1385, %v1377, %v1393
    %v1402 = vsel %vm1386, %v1378, %v1394
    %v1403 = vand.u32 %v753, 31
    %v1404 = vand.u32 %v754, 31
    %v1405 = vand.u32 %v755, 31
    %v1406 = vand.u32 %v756, 31
    %v1407 = vand.u32 %v757, 31
    %v1408 = vand.u32 %v758, 31
    %v1409 = vand.u32 %v759, 31
    %v1410 = vand.u32 %v760, 31
    %vm1411 = vcmp.lt.s32.totalorder %v1403, 16
    %vm1412 = vcmp.lt.s32.totalorder %v1404, 16
    %vm1413 = vcmp.lt.s32.totalorder %v1405, 16
    %vm1414 = vcmp.lt.s32.totalorder %v1406, 16
    %vm1415 = vcmp.lt.s32.totalorder %v1407, 16
    %vm1416 = vcmp.lt.s32.totalorder %v1408, 16
    %vm1417 = vcmp.lt.s32.totalorder %v1409, 16
    %vm1418 = vcmp.lt.s32.totalorder %v1410, 16
    %v1419 = vsel %vm1411, 1, 0
    %v1420 = vsel %vm1412, 1, 0
    %v1421 = vsel %vm1413, 1, 0
    %v1422 = vsel %vm1414, 1, 0
    %v1423 = vsel %vm1415, 1, 0
    %v1424 = vsel %vm1416, 1, 0
    %v1425 = vsel %vm1417, 1, 0
    %v1426 = vsel %vm1418, 1, 0
    %vm1427 = vcmp.eq.s32.totalorder %v1419, 1
    %vm1428 = vcmp.eq.s32.totalorder %v1420, 1
    %vm1429 = vcmp.eq.s32.totalorder %v1421, 1
    %vm1430 = vcmp.eq.s32.totalorder %v1422, 1
    %vm1431 = vcmp.eq.s32.totalorder %v1423, 1
    %vm1432 = vcmp.eq.s32.totalorder %v1424, 1
    %vm1433 = vcmp.eq.s32.totalorder %v1425, 1
    %vm1434 = vcmp.eq.s32.totalorder %v1426, 1
    %v1435 = vsel %vm1427, %v1395, 0.0
    %v1436 = vsel %vm1428, %v1396, 0.0
    %v1437 = vsel %vm1429, %v1397, 0.0
    %v1438 = vsel %vm1430, %v1398, 0.0
    %v1439 = vsel %vm1431, %v1399, 0.0
    %v1440 = vsel %vm1432, %v1400, 0.0
    %v1441 = vsel %vm1433, %v1401, 0.0
    %v1442 = vsel %vm1434, %v1402, 0.0
    %1443 = vst [vmem:[#allocation2 + $0x8] sm:$0xff] %v1435
    %1444 = vst [vmem:[#allocation2 + $0x10] sm:$0xff] %v1436
    %1445 = vst [vmem:[#allocation2 + $0x18] sm:$0xff] %v1437
    %1446 = vst [vmem:[#allocation2 + $0x20] sm:$0xff] %v1438
    %1447 = vst [vmem:[#allocation2 + $0x28] sm:$0xff] %v1439
    %1448 = vst [vmem:[#allocation2 + $0x30] sm:$0xff] %v1440
    %1449 = vst [vmem:[#allocation2 + $0x38] sm:$0xff] %v1441
    %1450 = vst [vmem:[#allocation2 + $0x40] sm:$0xff] %v1442
    %v1451 = vld [vmem:[%s865] ss:$2 sm:$0xff]
    %v1452 = vld [vmem:[%s867] ss:$2 sm:$0xff]
    %v1453 = vld [vmem:[%s869] ss:$2 sm:$0xff]
    %v1454 = vld [vmem:[%s871] ss:$2 sm:$0xff]
    %v1455 = vld [vmem:[%s881] ss:$2 sm:$0xff]
    %v1456 = vld [vmem:[%s883] ss:$2 sm:$0xff]
    %v1457 = vld [vmem:[%s885] ss:$2 sm:$0xff]
    %v1458 = vld [vmem:[%s887] ss:$2 sm:$0xff]
    %v1459 = vmax.f32 %v1451, %v1455
    %v1460 = vmax.f32 %v1452, %v1456
    %v1461 = vmax.f32 %v1453, %v1457
    %v1462 = vmax.f32 %v1454, %v1458
    %1463 = vst [vmem:[#allocation2 + $0x8] sm:$0xff] %v1459
    %1464 = vst [vmem:[#allocation2 + $0x10] sm:$0xff] %v1460
    %1465 = vst [vmem:[#allocation2 + $0x18] sm:$0xff] %v1461
    %1466 = vst [vmem:[#allocation2 + $0x20] sm:$0xff] %v1462
    %v1467 = vld [vmem:[#allocation2 + $0x7] sm:$0xff]
    %v1468 = vld [vmem:[#allocation2 + $0xf] sm:$0xff]
    %v1469 = vld [vmem:[#allocation2 + $0x17] sm:$0xff]
    %v1470 = vld [vmem:[#allocation2 + $0x1f] sm:$0xff]
    %v1471 = vpack.c.bf16 %v1468, %v1467
    %v1472 = vpack.c.bf16 %v1470, %v1469
    %s1473 = scalar_lea.vmem [#allocation4], 384
    %v1474 = vld [vmem:[%s1473] sm:$0xf]
    %v1475 = vld [vmem:[%s1473 + $0x4] sm:$0xf]
    %v1476 = vld [vmem:[%s1473 + $0x8] sm:$0xf]
    %v1477 = vld [vmem:[%s1473 + $0xc] sm:$0xf]
    %v1478 = vld [vmem:[%s1473 + $0x10] sm:$0xf]
    %v1479 = vld [vmem:[%s1473 + $0x14] sm:$0xf]
    %v1480 = vld [vmem:[%s1473 + $0x18] sm:$0xf]
    %v1481 = vld [vmem:[%s1473 + $0x1c] sm:$0xf]
    %v1482 = vld [vmem:[%s1473 + $0x20] sm:$0xf]
    %v1483 = vld [vmem:[%s1473 + $0x24] sm:$0xf]
    %v1484 = vld [vmem:[%s1473 + $0x28] sm:$0xf]
    %v1485 = vld [vmem:[%s1473 + $0x2c] sm:$0xf]
    %v1486 = vld [vmem:[%s1473 + $0x30] sm:$0xf]
    %v1487 = vld [vmem:[%s1473 + $0x34] sm:$0xf]
    %v1488 = vld [vmem:[%s1473 + $0x38] sm:$0xf]
    %v1489 = vld [vmem:[%s1473 + $0x3c] sm:$0xf]
    %v1490 = vld [vmem:[#allocation2 + $0x8] sm:$0xff]
    %v1491 = vld [vmem:[#allocation2 + $0x10] sm:$0xff]
    %v1492 = vld [vmem:[#allocation2 + $0x18] sm:$0xff]
    %v1493 = vld [vmem:[#allocation2 + $0x20] sm:$0xff]
    %v1494 = vpack.c.bf16 %v1491, %v1490
    %v1495 = vpack.c.bf16 %v1493, %v1492
    %s1496 = scalar_lea.vmem [#allocation4], 448
    %v1497 = vld [vmem:[%s1496] sm:$0xf]
    %v1498 = vld [vmem:[%s1496 + $0x4] sm:$0xf]
    %v1499 = vld [vmem:[%s1496 + $0x8] sm:$0xf]
    %v1500 = vld [vmem:[%s1496 + $0xc] sm:$0xf]
    %v1501 = vld [vmem:[%s1496 + $0x10] sm:$0xf]
    %v1502 = vld [vmem:[%s1496 + $0x14] sm:$0xf]
    %v1503 = vld [vmem:[%s1496 + $0x18] sm:$0xf]
    %v1504 = vld [vmem:[%s1496 + $0x1c] sm:$0xf]
    %v1505 = vld [vmem:[%s1496 + $0x20] sm:$0xf]
    %v1506 = vld [vmem:[%s1496 + $0x24] sm:$0xf]
    %v1507 = vld [vmem:[%s1496 + $0x28] sm:$0xf]
    %v1508 = vld [vmem:[%s1496 + $0x2c] sm:$0xf]
    %v1509 = vld [vmem:[%s1496 + $0x30] sm:$0xf]
    %v1510 = vld [vmem:[%s1496 + $0x34] sm:$0xf]
    %v1511 = vld [vmem:[%s1496 + $0x38] sm:$0xf]
    %v1512 = vld [vmem:[%s1496 + $0x3c] sm:$0xf]
    %v1529 = vunpack.c.l.b16 %v1497
    %v1530 = vunpack.c.l.b16 %v1498
    %v1531 = vunpack.c.l.b16 %v1499
    %v1532 = vunpack.c.l.b16 %v1500
    %v1533 = vunpack.c.l.b16 %v1501
    %v1534 = vunpack.c.l.b16 %v1502
    %v1535 = vunpack.c.l.b16 %v1503
    %v1536 = vunpack.c.l.b16 %v1504
    %v1537 = vunpack.c.l.b16 %v1505
    %v1538 = vunpack.c.l.b16 %v1506
    %v1539 = vunpack.c.l.b16 %v1507
    %v1540 = vunpack.c.l.b16 %v1508
    %v1541 = vunpack.c.l.b16 %v1509
    %v1542 = vunpack.c.l.b16 %v1510
    %v1543 = vunpack.c.l.b16 %v1511
    %v1544 = vunpack.c.l.b16 %v1512
    %v1545 = vpack.c.b16 %v1530, %v1529
    %v1546 = vpack.c.b16 %v1532, %v1531
    %v1547 = vpack.c.b16 %v1534, %v1533
    %v1548 = vpack.c.b16 %v1536, %v1535
    %v1549 = vpack.c.b16 %v1538, %v1537
    %v1550 = vpack.c.b16 %v1540, %v1539
    %v1551 = vpack.c.b16 %v1542, %v1541
    %v1552 = vpack.c.b16 %v1544, %v1543
    %1561 = vmatprep.subr.bf16.mxu0 0
    %1562 = vmatpush1.bf16.msra.mxu0 %v1545
    %1563 = vmatprep.subr.bf16.mxu0 0
    %1564 = vmatpush1.bf16.msra.mxu0 %v1546
    %1565 = vmatprep.subr.bf16.mxu0 0
    %1566 = vmatpush1.bf16.msra.mxu0 %v1547
    %1567 = vmatprep.subr.bf16.mxu0 0
    %1568 = vmatpush1.bf16.msra.mxu0 %v1548
    %1569 = vmatprep.subr.bf16.mxu0 0
    %1570 = vmatpush1.bf16.msra.mxu0 %v1549
    %1571 = vmatprep.subr.bf16.mxu0 0
    %1572 = vmatpush1.bf16.msra.mxu0 %v1550
    %1573 = vmatprep.subr.bf16.mxu0 0
    %1574 = vmatpush1.bf16.msra.mxu0 %v1551
    %1575 = vmatprep.subr.bf16.mxu0 0
    %1576 = vmatpush1.bf16.msra.mxu0 %v1552
    %1577 = vmatprep.subr.bf16.mxu0 0
    %1578 = vmatpush1.bf16.msra.mxu0 0
    %1579 = vmatprep.subr.bf16.mxu0 0
    %1580 = vmatpush1.bf16.msra.mxu0 0
    %1581 = vmatprep.subr.bf16.mxu0 0
    %1582 = vmatpush1.bf16.msra.mxu0 0
    %1583 = vmatprep.subr.bf16.mxu0 0
    %1584 = vmatpush1.bf16.msra.mxu0 0
    %1585 = vmatprep.subr.bf16.mxu0 0
    %1586 = vmatpush1.bf16.msra.mxu0 0
    %1587 = vmatprep.subr.bf16.mxu0 0
    %1588 = vmatpush1.bf16.msra.mxu0 0
    %1589 = vmatprep.subr.bf16.mxu0 0
    %1590 = vmatpush1.bf16.msra.mxu0 0
    %1591 = vmatprep.subr.bf16.mxu0 0
    %1592 = vmatpush1.bf16.msra.mxu0 0
    %1593 = vmatprep.mubr.bf16.mxu0 0
    %1594 = vmatmul.mubr.bf16.gmra.mrb[0].mxu0 %v1494
    %v1595 = vpop.f32.mrb[0].mxu0
    %v1596 = vadd.f32 0.0, %v1595
    %v1597 = vpop.f32.mrb[0].mxu0
    %v1598 = vpop.f32.mrb[0].mxu0
    %v1599 = vadd.f32 0.0, %v1598
    %v1600 = vpop.f32.mrb[0].mxu0
    %1601 = vmatprep.mubr.bf16.mxu0 0
    %1602 = vmatmul.mubr.bf16.gmra.mrb[0].mxu0 %v1495
    %v1603 = vpop.f32.mrb[0].mxu0
    %v1604 = vadd.f32 0.0, %v1603
    %v1605 = vpop.f32.mrb[0].mxu0
    %v1606 = vpop.f32.mrb[0].mxu0
    %v1607 = vadd.f32 0.0, %v1606
    %v1608 = vpop.f32.mrb[0].mxu0
    %1609 = vdwg.mxu0
    %v1626 = vunpack.c.l.b16 %v1474
    %v1627 = vunpack.c.l.b16 %v1475
    %v1628 = vunpack.c.l.b16 %v1476
    %v1629 = vunpack.c.l.b16 %v1477
    %v1630 = vunpack.c.l.b16 %v1478
    %v1631 = vunpack.c.l.b16 %v1479
    %v1632 = vunpack.c.l.b16 %v1480
    %v1633 = vunpack.c.l.b16 %v1481
    %v1634 = vunpack.c.l.b16 %v1482
    %v1635 = vunpack.c.l.b16 %v1483
    %v1636 = vunpack.c.l.b16 %v1484
    %v1637 = vunpack.c.l.b16 %v1485
    %v1638 = vunpack.c.l.b16 %v1486
    %v1639 = vunpack.c.l.b16 %v1487
    %v1640 = vunpack.c.l.b16 %v1488
    %v1641 = vunpack.c.l.b16 %v1489
    %v1642 = vpack.c.b16 %v1627, %v1626
    %v1643 = vpack.c.b16 %v1629, %v1628
    %v1644 = vpack.c.b16 %v1631, %v1630
    %v1645 = vpack.c.b16 %v1633, %v1632
    %v1646 = vpack.c.b16 %v1635, %v1634
    %v1647 = vpack.c.b16 %v1637, %v1636
    %v1648 = vpack.c.b16 %v1639, %v1638
    %v1649 = vpack.c.b16 %v1641, %v1640
    %1658 = vmatprep.subr.bf16.mxu0 0
    %1659 = vmatpush1.bf16.msra.mxu0 %v1642
    %1660 = vmatprep.subr.bf16.mxu0 0
    %1661 = vmatpush1.bf16.msra.mxu0 %v1643
    %1662 = vmatprep.subr.bf16.mxu0 0
    %1663 = vmatpush1.bf16.msra.mxu0 %v1644
    %1664 = vmatprep.subr.bf16.mxu0 0
    %1665 = vmatpush1.bf16.msra.mxu0 %v1645
    %1666 = vmatprep.subr.bf16.mxu0 0
    %1667 = vmatpush1.bf16.msra.mxu0 %v1646
    %1668 = vmatprep.subr.bf16.mxu0 0
    %1669 = vmatpush1.bf16.msra.mxu0 %v1647
    %1670 = vmatprep.subr.bf16.mxu0 0
    %1671 = vmatpush1.bf16.msra.mxu0 %v1648
    %1672 = vmatprep.subr.bf16.mxu0 0
    %1673 = vmatpush1.bf16.msra.mxu0 %v1649
    %1674 = vmatprep.subr.bf16.mxu0 0
    %1675 = vmatpush1.bf16.msra.mxu0 0
    %1676 = vmatprep.subr.bf16.mxu0 0
    %1677 = vmatpush1.bf16.msra.mxu0 0
    %1678 = vmatprep.subr.bf16.mxu0 0
    %1679 = vmatpush1.bf16.msra.mxu0 0
    %1680 = vmatprep.subr.bf16.mxu0 0
    %1681 = vmatpush1.bf16.msra.mxu0 0
    %1682 = vmatprep.subr.bf16.mxu0 0
    %1683 = vmatpush1.bf16.msra.mxu0 0
    %1684 = vmatprep.subr.bf16.mxu0 0
    %1685 = vmatpush1.bf16.msra.mxu0 0
    %1686 = vmatprep.subr.bf16.mxu0 0
    %1687 = vmatpush1.bf16.msra.mxu0 0
    %1688 = vmatprep.subr.bf16.mxu0 0
    %1689 = vmatpush1.bf16.msra.mxu0 0
    %1690 = vmatprep.mubr.bf16.mxu0 0
    %1691 = vmatmul.mubr.bf16.gmra.mrb[0].mxu0 %v1471
    %v1692 = vpop.f32.mrb[0].mxu0
    %v1693 = vadd.f32 %v1596, %v1692
    %v1694 = vpop.f32.mrb[0].mxu0
    %v1695 = vpop.f32.mrb[0].mxu0
    %v1696 = vadd.f32 %v1599, %v1695
    %v1697 = vpop.f32.mrb[0].mxu0
    %1698 = vmatprep.mubr.bf16.mxu0 0
    %1699 = vmatmul.mubr.bf16.gmra.mrb[0].mxu0 %v1472
    %v1700 = vpop.f32.mrb[0].mxu0
    %v1701 = vadd.f32 %v1604, %v1700
    %v1702 = vpop.f32.mrb[0].mxu0
    %v1703 = vpop.f32.mrb[0].mxu0
    %v1704 = vadd.f32 %v1607, %v1703
    %v1705 = vpop.f32.mrb[0].mxu0
    %1706 = vdwg.mxu0
    %v1707 = vld [vmem:[#allocation2 + $0x9] sm:$0xff]
    %v1708 = vld [vmem:[#allocation2 + $0x11] sm:$0xff]
    %v1709 = vld [vmem:[#allocation2 + $0x19] sm:$0xff]
    %v1710 = vld [vmem:[#allocation2 + $0x21] sm:$0xff]
    %v1711 = vpack.c.bf16 %v1708, %v1707
    %v1712 = vpack.c.bf16 %v1710, %v1709
    %s1713 = scalar_lea.vmem [#allocation4], 512
    %v1714 = vld [vmem:[%s1713] sm:$0xf]
    %v1715 = vld [vmem:[%s1713 + $0x4] sm:$0xf]
    %v1716 = vld [vmem:[%s1713 + $0x8] sm:$0xf]
    %v1717 = vld [vmem:[%s1713 + $0xc] sm:$0xf]
    %v1718 = vld [vmem:[%s1713 + $0x10] sm:$0xf]
    %v1719 = vld [vmem:[%s1713 + $0x14] sm:$0xf]
    %v1720 = vld [vmem:[%s1713 + $0x18] sm:$0xf]
    %v1721 = vld [vmem:[%s1713 + $0x1c] sm:$0xf]
    %v1722 = vld [vmem:[%s1713 + $0x20] sm:$0xf]
    %v1723 = vld [vmem:[%s1713 + $0x24] sm:$0xf]
    %v1724 = vld [vmem:[%s1713 + $0x28] sm:$0xf]
    %v1725 = vld [vmem:[%s1713 + $0x2c] sm:$0xf]
    %v1726 = vld [vmem:[%s1713 + $0x30] sm:$0xf]
    %v1727 = vld [vmem:[%s1713 + $0x34] sm:$0xf]
    %v1728 = vld [vmem:[%s1713 + $0x38] sm:$0xf]
    %v1729 = vld [vmem:[%s1713 + $0x3c] sm:$0xf]
    %v1746 = vunpack.c.l.b16 %v1714
    %v1747 = vunpack.c.l.b16 %v1715
    %v1748 = vunpack.c.l.b16 %v1716
    %v1749 = vunpack.c.l.b16 %v1717
    %v1750 = vunpack.c.l.b16 %v1718
    %v1751 = vunpack.c.l.b16 %v1719
    %v1752 = vunpack.c.l.b16 %v1720
    %v1753 = vunpack.c.l.b16 %v1721
    %v1754 = vunpack.c.l.b16 %v1722
    %v1755 = vunpack.c.l.b16 %v1723
    %v1756 = vunpack.c.l.b16 %v1724
    %v1757 = vunpack.c.l.b16 %v1725
    %v1758 = vunpack.c.l.b16 %v1726
    %v1759 = vunpack.c.l.b16 %v1727
    %v1760 = vunpack.c.l.b16 %v1728
    %v1761 = vunpack.c.l.b16 %v1729
    %v1762 = vpack.c.b16 %v1747, %v1746
    %v1763 = vpack.c.b16 %v1749, %v1748
    %v1764 = vpack.c.b16 %v1751, %v1750
    %v1765 = vpack.c.b16 %v1753, %v1752
    %v1766 = vpack.c.b16 %v1755, %v1754
    %v1767 = vpack.c.b16 %v1757, %v1756
    %v1768 = vpack.c.b16 %v1759, %v1758
    %v1769 = vpack.c.b16 %v1761, %v1760
    %1778 = vmatprep.subr.bf16.mxu0 0
    %1779 = vmatpush1.bf16.msra.mxu0 %v1762
    %1780 = vmatprep.subr.bf16.mxu0 0
    %1781 = vmatpush1.bf16.msra.mxu0 %v1763
    %1782 = vmatprep.subr.bf16.mxu0 0
    %1783 = vmatpush1.bf16.msra.mxu0 %v1764
    %1784 = vmatprep.subr.bf16.mxu0 0
    %1785 = vmatpush1.bf16.msra.mxu0 %v1765
    %1786 = vmatprep.subr.bf16.mxu0 0
    %1787 = vmatpush1.bf16.msra.mxu0 %v1766
    %1788 = vmatprep.subr.bf16.mxu0 0
    %1789 = vmatpush1.bf16.msra.mxu0 %v1767
    %1790 = vmatprep.subr.bf16.mxu0 0
    %1791 = vmatpush1.bf16.msra.mxu0 %v1768
    %1792 = vmatprep.subr.bf16.mxu0 0
    %1793 = vmatpush1.bf16.msra.mxu0 %v1769
    %1794 = vmatprep.subr.bf16.mxu0 0
    %1795 = vmatpush1.bf16.msra.mxu0 0
    %1796 = vmatprep.subr.bf16.mxu0 0
    %1797 = vmatpush1.bf16.msra.mxu0 0
    %1798 = vmatprep.subr.bf16.mxu0 0
    %1799 = vmatpush1.bf16.msra.mxu0 0
    %1800 = vmatprep.subr.bf16.mxu0 0
    %1801 = vmatpush1.bf16.msra.mxu0 0
    %1802 = vmatprep.subr.bf16.mxu0 0
    %1803 = vmatpush1.bf16.msra.mxu0 0
    %1804 = vmatprep.subr.bf16.mxu0 0
    %1805 = vmatpush1.bf16.msra.mxu0 0
    %1806 = vmatprep.subr.bf16.mxu0 0
    %1807 = vmatpush1.bf16.msra.mxu0 0
    %1808 = vmatprep.subr.bf16.mxu0 0
    %1809 = vmatpush1.bf16.msra.mxu0 0
    %1810 = vmatprep.mubr.bf16.mxu0 0
    %1811 = vmatmul.mubr.bf16.gmra.mrb[0].mxu0 %v1711
    %v1812 = vpop.f32.mrb[0].mxu0
    %v1813 = vadd.f32 0.0, %v1812
    %v1814 = vpop.f32.mrb[0].mxu0
    %v1815 = vpop.f32.mrb[0].mxu0
    %v1816 = vadd.f32 0.0, %v1815
    %v1817 = vpop.f32.mrb[0].mxu0
    %1818 = vmatprep.mubr.bf16.mxu0 0
    %1819 = vmatmul.mubr.bf16.gmra.mrb[0].mxu0 %v1712
    %v1820 = vpop.f32.mrb[0].mxu0
    %v1821 = vadd.f32 0.0, %v1820
    %v1822 = vpop.f32.mrb[0].mxu0
    %v1823 = vpop.f32.mrb[0].mxu0
    %v1824 = vadd.f32 0.0, %v1823
    %v1825 = vpop.f32.mrb[0].mxu0
    %1826 = vdwg.mxu0
    %v1827 = vadd.f32 %v1693, %v1813
    %v1828 = vadd.f32 %v1696, %v1816
    %v1829 = vadd.f32 %v1701, %v1821
    %v1830 = vadd.f32 %v1704, %v1824
    %s1831 = scalar_lea.vmem %s2, 2
    %v1832 = vld [vmem:[%s1831] sm:$0x1]
    %v1834 = vlaneseq
    %v1835 = vshrl.u32 %v1834, 7
    %v1836 = vsub.s32 0, %v1835
    %v1837 = vrot.slane %v1832, %v1836
    %v1839 = vmul.f32 %v1827, %v1837
    %v1840 = vmul.f32 %v1828, %v1837
    %v1841 = vmul.f32 %v1829, %v1837
    %v1842 = vmul.f32 %v1830, %v1837
    %s1843 = scalar_lea.vmem %s3, 2
    %v1844 = vld [vmem:[%s1843] sm:$0x1]
    %v1846 = vlaneseq
    %v1847 = vshrl.u32 %v1846, 7
    %v1848 = vsub.s32 0, %v1847
    %v1849 = vrot.slane %v1844, %v1848
    %v1851 = vadd.f32 %v1839, %v1849
    %v1852 = vadd.f32 %v1840, %v1849
    %v1853 = vadd.f32 %v1841, %v1849
    %v1854 = vadd.f32 %v1842, %v1849
    %vm1855 = vcmp.gt.f32.partialorder %v1851, 0.0
    %vm1856 = vcmp.gt.f32.partialorder %v1852, 0.0
    %vm1857 = vcmp.gt.f32.partialorder %v1853, 0.0
    %vm1858 = vcmp.gt.f32.partialorder %v1854, 0.0
    %v1859 = vmul.f32 %v1851, 0.01
    %v1860 = vmul.f32 %v1852, 0.01
    %v1861 = vmul.f32 %v1853, 0.01
    %v1862 = vmul.f32 %v1854, 0.01
    %v1863 = vsel %vm1855, %v1851, %v1859
    %v1864 = vsel %vm1856, %v1852, %v1860
    %v1865 = vsel %vm1857, %v1853, %v1861
    %v1866 = vsel %vm1858, %v1854, %v1862
    %v1867 = vand.u32 %v753, 15
    %v1868 = vand.u32 %v754, 15
    %v1869 = vand.u32 %v755, 15
    %v1870 = vand.u32 %v756, 15
    %vm1871 = vcmp.lt.s32.totalorder %v1867, 8
    %vm1872 = vcmp.lt.s32.totalorder %v1868, 8
    %vm1873 = vcmp.lt.s32.totalorder %v1869, 8
    %vm1874 = vcmp.lt.s32.totalorder %v1870, 8
    %v1875 = vsel %vm1871, 1, 0
    %v1876 = vsel %vm1872, 1, 0
    %v1877 = vsel %vm1873, 1, 0
    %v1878 = vsel %vm1874, 1, 0
    %vm1879 = vcmp.eq.s32.totalorder %v1875, 1
    %vm1880 = vcmp.eq.s32.totalorder %v1876, 1
    %vm1881 = vcmp.eq.s32.totalorder %v1877, 1
    %vm1882 = vcmp.eq.s32.totalorder %v1878, 1
    %v1883 = vsel %vm1879, %v1863, 0.0
    %v1884 = vsel %vm1880, %v1864, 0.0
    %v1885 = vsel %vm1881, %v1865, 0.0
    %v1886 = vsel %vm1882, %v1866, 0.0
    %1887 = vst [vmem:[#allocation2 + $0x8] sm:$0xff] %v1883
    %1888 = vst [vmem:[#allocation2 + $0x10] sm:$0xff] %v1884
    %1889 = vst [vmem:[#allocation2 + $0x18] sm:$0xff] %v1885
    %1890 = vst [vmem:[#allocation2 + $0x20] sm:$0xff] %v1886
    %v1891 = vld [vmem:[%s865] ss:$2 sm:$0xff]
    %v1892 = vld [vmem:[%s867] ss:$2 sm:$0xff]
    %v1893 = vld [vmem:[%s881] ss:$2 sm:$0xff]
    %v1894 = vld [vmem:[%s883] ss:$2 sm:$0xff]
    %v1895 = vmax.f32 %v1891, %v1893
    %v1896 = vmax.f32 %v1892, %v1894
    %1897 = vst [vmem:[#allocation2 + $0x8] sm:$0xff] %v1895
    %1898 = vst [vmem:[#allocation2 + $0x10] sm:$0xff] %v1896
    %v1899 = vld [vmem:[#allocation2 + $0x7] sm:$0xff]
    %v1900 = vld [vmem:[#allocation2 + $0xf] sm:$0xff]
    %v1901 = vpack.c.bf16 %v1900, %v1899
    %s1902 = scalar_lea.vmem [#allocation4], 576
    %v1903 = vld [vmem:[%s1902] sm:$0xf]
    %v1904 = vld [vmem:[%s1902 + $0x4] sm:$0xf]
    %v1905 = vld [vmem:[%s1902 + $0x8] sm:$0xf]
    %v1906 = vld [vmem:[%s1902 + $0xc] sm:$0xf]
    %v1907 = vld [vmem:[%s1902 + $0x10] sm:$0xf]
    %v1908 = vld [vmem:[%s1902 + $0x14] sm:$0xf]
    %v1909 = vld [vmem:[%s1902 + $0x18] sm:$0xf]
    %v1910 = vld [vmem:[%s1902 + $0x1c] sm:$0xf]
    %v1911 = vld [vmem:[%s1902 + $0x20] sm:$0xf]
    %v1912 = vld [vmem:[%s1902 + $0x24] sm:$0xf]
    %v1913 = vld [vmem:[%s1902 + $0x28] sm:$0xf]
    %v1914 = vld [vmem:[%s1902 + $0x2c] sm:$0xf]
    %v1915 = vld [vmem:[%s1902 + $0x30] sm:$0xf]
    %v1916 = vld [vmem:[%s1902 + $0x34] sm:$0xf]
    %v1917 = vld [vmem:[%s1902 + $0x38] sm:$0xf]
    %v1918 = vld [vmem:[%s1902 + $0x3c] sm:$0xf]
    %v1919 = vld [vmem:[#allocation2 + $0x8] sm:$0xff]
    %v1920 = vld [vmem:[#allocation2 + $0x10] sm:$0xff]
    %v1921 = vpack.c.bf16 %v1920, %v1919
    %s1922 = scalar_lea.vmem [#allocation4], 640
    %v1923 = vld [vmem:[%s1922] sm:$0xf]
    %v1924 = vld [vmem:[%s1922 + $0x4] sm:$0xf]
    %v1925 = vld [vmem:[%s1922 + $0x8] sm:$0xf]
    %v1926 = vld [vmem:[%s1922 + $0xc] sm:$0xf]
    %v1927 = vld [vmem:[%s1922 + $0x10] sm:$0xf]
    %v1928 = vld [vmem:[%s1922 + $0x14] sm:$0xf]
    %v1929 = vld [vmem:[%s1922 + $0x18] sm:$0xf]
    %v1930 = vld [vmem:[%s1922 + $0x1c] sm:$0xf]
    %v1931 = vld [vmem:[%s1922 + $0x20] sm:$0xf]
    %v1932 = vld [vmem:[%s1922 + $0x24] sm:$0xf]
    %v1933 = vld [vmem:[%s1922 + $0x28] sm:$0xf]
    %v1934 = vld [vmem:[%s1922 + $0x2c] sm:$0xf]
    %v1935 = vld [vmem:[%s1922 + $0x30] sm:$0xf]
    %v1936 = vld [vmem:[%s1922 + $0x34] sm:$0xf]
    %v1937 = vld [vmem:[%s1922 + $0x38] sm:$0xf]
    %v1938 = vld [vmem:[%s1922 + $0x3c] sm:$0xf]
    %v1955 = vunpack.c.l.b16 %v1923
    %v1956 = vunpack.c.l.b16 %v1924
    %v1957 = vunpack.c.l.b16 %v1925
    %v1958 = vunpack.c.l.b16 %v1926
    %v1959 = vunpack.c.l.b16 %v1927
    %v1960 = vunpack.c.l.b16 %v1928
    %v1961 = vunpack.c.l.b16 %v1929
    %v1962 = vunpack.c.l.b16 %v1930
    %v1963 = vunpack.c.l.b16 %v1931
    %v1964 = vunpack.c.l.b16 %v1932
    %v1965 = vunpack.c.l.b16 %v1933
    %v1966 = vunpack.c.l.b16 %v1934
    %v1967 = vunpack.c.l.b16 %v1935
    %v1968 = vunpack.c.l.b16 %v1936
    %v1969 = vunpack.c.l.b16 %v1937
    %v1970 = vunpack.c.l.b16 %v1938
    %v1971 = vpack.c.b16 %v1956, %v1955
    %v1972 = vpack.c.b16 %v1958, %v1957
    %v1973 = vpack.c.b16 %v1960, %v1959
    %v1974 = vpack.c.b16 %v1962, %v1961
    %v1975 = vpack.c.b16 %v1964, %v1963
    %v1976 = vpack.c.b16 %v1966, %v1965
    %v1977 = vpack.c.b16 %v1968, %v1967
    %v1978 = vpack.c.b16 %v1970, %v1969
    %1987 = vmatprep.subr.bf16.mxu0 0
    %1988 = vmatpush1.bf16.msra.mxu0 %v1971
    %1989 = vmatprep.subr.bf16.mxu0 0
    %1990 = vmatpush1.bf16.msra.mxu0 %v1972
    %1991 = vmatprep.subr.bf16.mxu0 0
    %1992 = vmatpush1.bf16.msra.mxu0 %v1973
    %1993 = vmatprep.subr.bf16.mxu0 0
    %1994 = vmatpush1.bf16.msra.mxu0 %v1974
    %1995 = vmatprep.subr.bf16.mxu0 0
    %1996 = vmatpush1.bf16.msra.mxu0 %v1975
    %1997 = vmatprep.subr.bf16.mxu0 0
    %1998 = vmatpush1.bf16.msra.mxu0 %v1976
    %1999 = vmatprep.subr.bf16.mxu0 0
    %2000 = vmatpush1.bf16.msra.mxu0 %v1977
    %2001 = vmatprep.subr.bf16.mxu0 0
    %2002 = vmatpush1.bf16.msra.mxu0 %v1978
    %2003 = vmatprep.subr.bf16.mxu0 0
    %2004 = vmatpush1.bf16.msra.mxu0 0
    %2005 = vmatprep.subr.bf16.mxu0 0
    %2006 = vmatpush1.bf16.msra.mxu0 0
    %2007 = vmatprep.subr.bf16.mxu0 0
    %2008 = vmatpush1.bf16.msra.mxu0 0
    %2009 = vmatprep.subr.bf16.mxu0 0
    %2010 = vmatpush1.bf16.msra.mxu0 0
    %2011 = vmatprep.subr.bf16.mxu0 0
    %2012 = vmatpush1.bf16.msra.mxu0 0
    %2013 = vmatprep.subr.bf16.mxu0 0
    %2014 = vmatpush1.bf16.msra.mxu0 0
    %2015 = vmatprep.subr.bf16.mxu0 0
    %2016 = vmatpush1.bf16.msra.mxu0 0
    %2017 = vmatprep.subr.bf16.mxu0 0
    %2018 = vmatpush1.bf16.msra.mxu0 0
    %2019 = vmatprep.mubr.bf16.mxu0 0
    %2020 = vmatmul.mubr.bf16.gmra.mrb[0].mxu0 %v1921
    %v2021 = vpop.f32.mrb[0].mxu0
    %v2022 = vadd.f32 0.0, %v2021
    %v2023 = vpop.f32.mrb[0].mxu0
    %v2024 = vpop.f32.mrb[0].mxu0
    %v2025 = vadd.f32 0.0, %v2024
    %v2026 = vpop.f32.mrb[0].mxu0
    %2027 = vdwg.mxu0
    %v2044 = vunpack.c.l.b16 %v1903
    %v2045 = vunpack.c.l.b16 %v1904
    %v2046 = vunpack.c.l.b16 %v1905
    %v2047 = vunpack.c.l.b16 %v1906
    %v2048 = vunpack.c.l.b16 %v1907
    %v2049 = vunpack.c.l.b16 %v1908
    %v2050 = vunpack.c.l.b16 %v1909
    %v2051 = vunpack.c.l.b16 %v1910
    %v2052 = vunpack.c.l.b16 %v1911
    %v2053 = vunpack.c.l.b16 %v1912
    %v2054 = vunpack.c.l.b16 %v1913
    %v2055 = vunpack.c.l.b16 %v1914
    %v2056 = vunpack.c.l.b16 %v1915
    %v2057 = vunpack.c.l.b16 %v1916
    %v2058 = vunpack.c.l.b16 %v1917
    %v2059 = vunpack.c.l.b16 %v1918
    %v2060 = vpack.c.b16 %v2045, %v2044
    %v2061 = vpack.c.b16 %v2047, %v2046
    %v2062 = vpack.c.b16 %v2049, %v2048
    %v2063 = vpack.c.b16 %v2051, %v2050
    %v2064 = vpack.c.b16 %v2053, %v2052
    %v2065 = vpack.c.b16 %v2055, %v2054
    %v2066 = vpack.c.b16 %v2057, %v2056
    %v2067 = vpack.c.b16 %v2059, %v2058
    %2076 = vmatprep.subr.bf16.mxu0 0
    %2077 = vmatpush1.bf16.msra.mxu0 %v2060
    %2078 = vmatprep.subr.bf16.mxu0 0
    %2079 = vmatpush1.bf16.msra.mxu0 %v2061
    %2080 = vmatprep.subr.bf16.mxu0 0
    %2081 = vmatpush1.bf16.msra.mxu0 %v2062
    %2082 = vmatprep.subr.bf16.mxu0 0
    %2083 = vmatpush1.bf16.msra.mxu0 %v2063
    %2084 = vmatprep.subr.bf16.mxu0 0
    %2085 = vmatpush1.bf16.msra.mxu0 %v2064
    %2086 = vmatprep.subr.bf16.mxu0 0
    %2087 = vmatpush1.bf16.msra.mxu0 %v2065
    %2088 = vmatprep.subr.bf16.mxu0 0
    %2089 = vmatpush1.bf16.msra.mxu0 %v2066
    %2090 = vmatprep.subr.bf16.mxu0 0
    %2091 = vmatpush1.bf16.msra.mxu0 %v2067
    %2092 = vmatprep.subr.bf16.mxu0 0
    %2093 = vmatpush1.bf16.msra.mxu0 0
    %2094 = vmatprep.subr.bf16.mxu0 0
    %2095 = vmatpush1.bf16.msra.mxu0 0
    %2096 = vmatprep.subr.bf16.mxu0 0
    %2097 = vmatpush1.bf16.msra.mxu0 0
    %2098 = vmatprep.subr.bf16.mxu0 0
    %2099 = vmatpush1.bf16.msra.mxu0 0
    %2100 = vmatprep.subr.bf16.mxu0 0
    %2101 = vmatpush1.bf16.msra.mxu0 0
    %2102 = vmatprep.subr.bf16.mxu0 0
    %2103 = vmatpush1.bf16.msra.mxu0 0
    %2104 = vmatprep.subr.bf16.mxu0 0
    %2105 = vmatpush1.bf16.msra.mxu0 0
    %2106 = vmatprep.subr.bf16.mxu0 0
    %2107 = vmatpush1.bf16.msra.mxu0 0
    %2108 = vmatprep.mubr.bf16.mxu0 0
    %2109 = vmatmul.mubr.bf16.gmra.mrb[0].mxu0 %v1901
    %v2110 = vpop.f32.mrb[0].mxu0
    %v2111 = vadd.f32 %v2022, %v2110
    %v2112 = vpop.f32.mrb[0].mxu0
    %v2113 = vpop.f32.mrb[0].mxu0
    %v2114 = vadd.f32 %v2025, %v2113
    %v2115 = vpop.f32.mrb[0].mxu0
    %2116 = vdwg.mxu0
    %v2117 = vld [vmem:[#allocation2 + $0x9] sm:$0xff]
    %v2118 = vld [vmem:[#allocation2 + $0x11] sm:$0xff]
    %v2119 = vpack.c.bf16 %v2118, %v2117
    %s2120 = scalar_lea.vmem [#allocation4], 704
    %v2121 = vld [vmem:[%s2120] sm:$0xf]
    %v2122 = vld [vmem:[%s2120 + $0x4] sm:$0xf]
    %v2123 = vld [vmem:[%s2120 + $0x8] sm:$0xf]
    %v2124 = vld [vmem:[%s2120 + $0xc] sm:$0xf]
    %v2125 = vld [vmem:[%s2120 + $0x10] sm:$0xf]
    %v2126 = vld [vmem:[%s2120 + $0x14] sm:$0xf]
    %v2127 = vld [vmem:[%s2120 + $0x18] sm:$0xf]
    %v2128 = vld [vmem:[%s2120 + $0x1c] sm:$0xf]
    %v2129 = vld [vmem:[%s2120 + $0x20] sm:$0xf]
    %v2130 = vld [vmem:[%s2120 + $0x24] sm:$0xf]
    %v2131 = vld [vmem:[%s2120 + $0x28] sm:$0xf]
    %v2132 = vld [vmem:[%s2120 + $0x2c] sm:$0xf]
    %v2133 = vld [vmem:[%s2120 + $0x30] sm:$0xf]
    %v2134 = vld [vmem:[%s2120 + $0x34] sm:$0xf]
    %v2135 = vld [vmem:[%s2120 + $0x38] sm:$0xf]
    %v2136 = vld [vmem:[%s2120 + $0x3c] sm:$0xf]
    %v2153 = vunpack.c.l.b16 %v2121
    %v2154 = vunpack.c.l.b16 %v2122
    %v2155 = vunpack.c.l.b16 %v2123
    %v2156 = vunpack.c.l.b16 %v2124
    %v2157 = vunpack.c.l.b16 %v2125
    %v2158 = vunpack.c.l.b16 %v2126
    %v2159 = vunpack.c.l.b16 %v2127
    %v2160 = vunpack.c.l.b16 %v2128
    %v2161 = vunpack.c.l.b16 %v2129
    %v2162 = vunpack.c.l.b16 %v2130
    %v2163 = vunpack.c.l.b16 %v2131
    %v2164 = vunpack.c.l.b16 %v2132
    %v2165 = vunpack.c.l.b16 %v2133
    %v2166 = vunpack.c.l.b16 %v2134
    %v2167 = vunpack.c.l.b16 %v2135
    %v2168 = vunpack.c.l.b16 %v2136
    %v2169 = vpack.c.b16 %v2154, %v2153
    %v2170 = vpack.c.b16 %v2156, %v2155
    %v2171 = vpack.c.b16 %v2158, %v2157
    %v2172 = vpack.c.b16 %v2160, %v2159
    %v2173 = vpack.c.b16 %v2162, %v2161
    %v2174 = vpack.c.b16 %v2164, %v2163
    %v2175 = vpack.c.b16 %v2166, %v2165
    %v2176 = vpack.c.b16 %v2168, %v2167
    %2185 = vmatprep.subr.bf16.mxu0 0
    %2186 = vmatpush1.bf16.msra.mxu0 %v2169
    %2187 = vmatprep.subr.bf16.mxu0 0
    %2188 = vmatpush1.bf16.msra.mxu0 %v2170
    %2189 = vmatprep.subr.bf16.mxu0 0
    %2190 = vmatpush1.bf16.msra.mxu0 %v2171
    %2191 = vmatprep.subr.bf16.mxu0 0
    %2192 = vmatpush1.bf16.msra.mxu0 %v2172
    %2193 = vmatprep.subr.bf16.mxu0 0
    %2194 = vmatpush1.bf16.msra.mxu0 %v2173
    %2195 = vmatprep.subr.bf16.mxu0 0
    %2196 = vmatpush1.bf16.msra.mxu0 %v2174
    %2197 = vmatprep.subr.bf16.mxu0 0
    %2198 = vmatpush1.bf16.msra.mxu0 %v2175
    %2199 = vmatprep.subr.bf16.mxu0 0
    %2200 = vmatpush1.bf16.msra.mxu0 %v2176
    %2201 = vmatprep.subr.bf16.mxu0 0
    %2202 = vmatpush1.bf16.msra.mxu0 0
    %2203 = vmatprep.subr.bf16.mxu0 0
    %2204 = vmatpush1.bf16.msra.mxu0 0
    %2205 = vmatprep.subr.bf16.mxu0 0
    %2206 = vmatpush1.bf16.msra.mxu0 0
    %2207 = vmatprep.subr.bf16.mxu0 0
    %2208 = vmatpush1.bf16.msra.mxu0 0
    %2209 = vmatprep.subr.bf16.mxu0 0
    %2210 = vmatpush1.bf16.msra.mxu0 0
    %2211 = vmatprep.subr.bf16.mxu0 0
    %2212 = vmatpush1.bf16.msra.mxu0 0
    %2213 = vmatprep.subr.bf16.mxu0 0
    %2214 = vmatpush1.bf16.msra.mxu0 0
    %2215 = vmatprep.subr.bf16.mxu0 0
    %2216 = vmatpush1.bf16.msra.mxu0 0
    %2217 = vmatprep.mubr.bf16.mxu0 0
    %2218 = vmatmul.mubr.bf16.gmra.mrb[0].mxu0 %v2119
    %v2219 = vpop.f32.mrb[0].mxu0
    %v2220 = vadd.f32 0.0, %v2219
    %v2221 = vpop.f32.mrb[0].mxu0
    %v2222 = vpop.f32.mrb[0].mxu0
    %v2223 = vadd.f32 0.0, %v2222
    %v2224 = vpop.f32.mrb[0].mxu0
    %2225 = vdwg.mxu0
    %v2226 = vadd.f32 %v2111, %v2220
    %v2227 = vadd.f32 %v2114, %v2223
    %s2228 = scalar_lea.vmem %s2, 3
    %v2229 = vld [vmem:[%s2228] sm:$0x1]
    %v2231 = vlaneseq
    %v2232 = vshrl.u32 %v2231, 7
    %v2233 = vsub.s32 0, %v2232
    %v2234 = vrot.slane %v2229, %v2233
    %v2236 = vmul.f32 %v2226, %v2234
    %v2237 = vmul.f32 %v2227, %v2234
    %s2238 = scalar_lea.vmem %s3, 3
    %v2239 = vld [vmem:[%s2238] sm:$0x1]
    %v2241 = vlaneseq
    %v2242 = vshrl.u32 %v2241, 7
    %v2243 = vsub.s32 0, %v2242
    %v2244 = vrot.slane %v2239, %v2243
    %v2246 = vadd.f32 %v2236, %v2244
    %v2247 = vadd.f32 %v2237, %v2244
    %vm2248 = vcmp.gt.f32.partialorder %v2246, 0.0
    %vm2249 = vcmp.gt.f32.partialorder %v2247, 0.0
    %v2250 = vmul.f32 %v2246, 0.01
    %v2251 = vmul.f32 %v2247, 0.01
    %v2252 = vsel %vm2248, %v2246, %v2250
    %v2253 = vsel %vm2249, %v2247, %v2251
    %v2254 = vand.u32 %v753, 7
    %v2255 = vand.u32 %v754, 7
    %vm2256 = vcmp.lt.s32.totalorder %v2254, 4
    %vm2257 = vcmp.lt.s32.totalorder %v2255, 4
    %v2258 = vsel %vm2256, 1, 0
    %v2259 = vsel %vm2257, 1, 0
    %vm2260 = vcmp.eq.s32.totalorder %v2258, 1
    %vm2261 = vcmp.eq.s32.totalorder %v2259, 1
    %v2262 = vsel %vm2260, %v2252, 0.0
    %v2263 = vsel %vm2261, %v2253, 0.0
    %2264 = vst [vmem:[#allocation2 + $0x8] sm:$0xff] %v2262
    %2265 = vst [vmem:[#allocation2 + $0x10] sm:$0xff] %v2263
    %v2266 = vld [vmem:[#allocation2 + $0x7] sm:$0xff]
    %v2267 = vld [vmem:[#allocation2 + $0xf] sm:$0xff]
    %v2268 = vpack.c.bf16 %v2267, %v2266
    %s2269 = scalar_lea.vmem [#allocation4], 768
    %v2270 = vld [vmem:[%s2269] sm:$0xf]
    %v2271 = vld [vmem:[%s2269 + $0x4] sm:$0xf]
    %v2272 = vld [vmem:[%s2269 + $0x8] sm:$0xf]
    %v2273 = vld [vmem:[%s2269 + $0xc] sm:$0xf]
    %v2274 = vld [vmem:[%s2269 + $0x10] sm:$0xf]
    %v2275 = vld [vmem:[%s2269 + $0x14] sm:$0xf]
    %v2276 = vld [vmem:[%s2269 + $0x18] sm:$0xf]
    %v2277 = vld [vmem:[%s2269 + $0x1c] sm:$0xf]
    %v2278 = vld [vmem:[%s2269 + $0x20] sm:$0xf]
    %v2279 = vld [vmem:[%s2269 + $0x24] sm:$0xf]
    %v2280 = vld [vmem:[%s2269 + $0x28] sm:$0xf]
    %v2281 = vld [vmem:[%s2269 + $0x2c] sm:$0xf]
    %v2282 = vld [vmem:[%s2269 + $0x30] sm:$0xf]
    %v2283 = vld [vmem:[%s2269 + $0x34] sm:$0xf]
    %v2284 = vld [vmem:[%s2269 + $0x38] sm:$0xf]
    %v2285 = vld [vmem:[%s2269 + $0x3c] sm:$0xf]
    %v2286 = vld [vmem:[#allocation2 + $0x8] sm:$0xff]
    %v2287 = vld [vmem:[#allocation2 + $0x10] sm:$0xff]
    %v2288 = vpack.c.bf16 %v2287, %v2286
    %s2289 = scalar_lea.vmem [#allocation4], 832
    %v2290 = vld [vmem:[%s2289] sm:$0xf]
    %v2291 = vld [vmem:[%s2289 + $0x4] sm:$0xf]
    %v2292 = vld [vmem:[%s2289 + $0x8] sm:$0xf]
    %v2293 = vld [vmem:[%s2289 + $0xc] sm:$0xf]
    %v2294 = vld [vmem:[%s2289 + $0x10] sm:$0xf]
    %v2295 = vld [vmem:[%s2289 + $0x14] sm:$0xf]
    %v2296 = vld [vmem:[%s2289 + $0x18] sm:$0xf]
    %v2297 = vld [vmem:[%s2289 + $0x1c] sm:$0xf]
    %v2298 = vld [vmem:[%s2289 + $0x20] sm:$0xf]
    %v2299 = vld [vmem:[%s2289 + $0x24] sm:$0xf]
    %v2300 = vld [vmem:[%s2289 + $0x28] sm:$0xf]
    %v2301 = vld [vmem:[%s2289 + $0x2c] sm:$0xf]
    %v2302 = vld [vmem:[%s2289 + $0x30] sm:$0xf]
    %v2303 = vld [vmem:[%s2289 + $0x34] sm:$0xf]
    %v2304 = vld [vmem:[%s2289 + $0x38] sm:$0xf]
    %v2305 = vld [vmem:[%s2289 + $0x3c] sm:$0xf]
    %v2322 = vunpack.c.l.b16 %v2290
    %v2323 = vunpack.c.l.b16 %v2291
    %v2324 = vunpack.c.l.b16 %v2292
    %v2325 = vunpack.c.l.b16 %v2293
    %v2326 = vunpack.c.l.b16 %v2294
    %v2327 = vunpack.c.l.b16 %v2295
    %v2328 = vunpack.c.l.b16 %v2296
    %v2329 = vunpack.c.l.b16 %v2297
    %v2330 = vunpack.c.l.b16 %v2298
    %v2331 = vunpack.c.l.b16 %v2299
    %v2332 = vunpack.c.l.b16 %v2300
    %v2333 = vunpack.c.l.b16 %v2301
    %v2334 = vunpack.c.l.b16 %v2302
    %v2335 = vunpack.c.l.b16 %v2303
    %v2336 = vunpack.c.l.b16 %v2304
    %v2337 = vunpack.c.l.b16 %v2305
    %v2338 = vpack.c.b16 %v2323, %v2322
    %v2339 = vpack.c.b16 %v2325, %v2324
    %v2340 = vpack.c.b16 %v2327, %v2326
    %v2341 = vpack.c.b16 %v2329, %v2328
    %v2342 = vpack.c.b16 %v2331, %v2330
    %v2343 = vpack.c.b16 %v2333, %v2332
    %v2344 = vpack.c.b16 %v2335, %v2334
    %v2345 = vpack.c.b16 %v2337, %v2336
    %2354 = vmatprep.subr.bf16.mxu0 0
    %2355 = vmatpush1.bf16.msra.mxu0 %v2338
    %2356 = vmatprep.subr.bf16.mxu0 0
    %2357 = vmatpush1.bf16.msra.mxu0 %v2339
    %2358 = vmatprep.subr.bf16.mxu0 0
    %2359 = vmatpush1.bf16.msra.mxu0 %v2340
    %2360 = vmatprep.subr.bf16.mxu0 0
    %2361 = vmatpush1.bf16.msra.mxu0 %v2341
    %2362 = vmatprep.subr.bf16.mxu0 0
    %2363 = vmatpush1.bf16.msra.mxu0 %v2342
    %2364 = vmatprep.subr.bf16.mxu0 0
    %2365 = vmatpush1.bf16.msra.mxu0 %v2343
    %2366 = vmatprep.subr.bf16.mxu0 0
    %2367 = vmatpush1.bf16.msra.mxu0 %v2344
    %2368 = vmatprep.subr.bf16.mxu0 0
    %2369 = vmatpush1.bf16.msra.mxu0 %v2345
    %2370 = vmatprep.subr.bf16.mxu0 0
    %2371 = vmatpush1.bf16.msra.mxu0 0
    %2372 = vmatprep.subr.bf16.mxu0 0
    %2373 = vmatpush1.bf16.msra.mxu0 0
    %2374 = vmatprep.subr.bf16.mxu0 0
    %2375 = vmatpush1.bf16.msra.mxu0 0
    %2376 = vmatprep.subr.bf16.mxu0 0
    %2377 = vmatpush1.bf16.msra.mxu0 0
    %2378 = vmatprep.subr.bf16.mxu0 0
    %2379 = vmatpush1.bf16.msra.mxu0 0
    %2380 = vmatprep.subr.bf16.mxu0 0
    %2381 = vmatpush1.bf16.msra.mxu0 0
    %2382 = vmatprep.subr.bf16.mxu0 0
    %2383 = vmatpush1.bf16.msra.mxu0 0
    %2384 = vmatprep.subr.bf16.mxu0 0
    %2385 = vmatpush1.bf16.msra.mxu0 0
    %2386 = vmatprep.mubr.bf16.mxu0 0
    %2387 = vmatmul.mubr.bf16.gmra.mrb[0].mxu0 %v2288
    %v2388 = vpop.f32.mrb[0].mxu0
    %v2389 = vadd.f32 0.0, %v2388
    %v2390 = vpop.f32.mrb[0].mxu0
    %v2391 = vpop.f32.mrb[0].mxu0
    %v2392 = vadd.f32 0.0, %v2391
    %v2393 = vpop.f32.mrb[0].mxu0
    %2394 = vdwg.mxu0
    %v2411 = vunpack.c.l.b16 %v2270
    %v2412 = vunpack.c.l.b16 %v2271
    %v2413 = vunpack.c.l.b16 %v2272
    %v2414 = vunpack.c.l.b16 %v2273
    %v2415 = vunpack.c.l.b16 %v2274
    %v2416 = vunpack.c.l.b16 %v2275
    %v2417 = vunpack.c.l.b16 %v2276
    %v2418 = vunpack.c.l.b16 %v2277
    %v2419 = vunpack.c.l.b16 %v2278
    %v2420 = vunpack.c.l.b16 %v2279
    %v2421 = vunpack.c.l.b16 %v2280
    %v2422 = vunpack.c.l.b16 %v2281
    %v2423 = vunpack.c.l.b16 %v2282
    %v2424 = vunpack.c.l.b16 %v2283
    %v2425 = vunpack.c.l.b16 %v2284
    %v2426 = vunpack.c.l.b16 %v2285
    %v2427 = vpack.c.b16 %v2412, %v2411
    %v2428 = vpack.c.b16 %v2414, %v2413
    %v2429 = vpack.c.b16 %v2416, %v2415
    %v2430 = vpack.c.b16 %v2418, %v2417
    %v2431 = vpack.c.b16 %v2420, %v2419
    %v2432 = vpack.c.b16 %v2422, %v2421
    %v2433 = vpack.c.b16 %v2424, %v2423
    %v2434 = vpack.c.b16 %v2426, %v2425
    %2443 = vmatprep.subr.bf16.mxu0 0
    %2444 = vmatpush1.bf16.msra.mxu0 %v2427
    %2445 = vmatprep.subr.bf16.mxu0 0
    %2446 = vmatpush1.bf16.msra.mxu0 %v2428
    %2447 = vmatprep.subr.bf16.mxu0 0
    %2448 = vmatpush1.bf16.msra.mxu0 %v2429
    %2449 = vmatprep.subr.bf16.mxu0 0
    %2450 = vmatpush1.bf16.msra.mxu0 %v2430
    %2451 = vmatprep.subr.bf16.mxu0 0
    %2452 = vmatpush1.bf16.msra.mxu0 %v2431
    %2453 = vmatprep.subr.bf16.mxu0 0
    %2454 = vmatpush1.bf16.msra.mxu0 %v2432
    %2455 = vmatprep.subr.bf16.mxu0 0
    %2456 = vmatpush1.bf16.msra.mxu0 %v2433
    %2457 = vmatprep.subr.bf16.mxu0 0
    %2458 = vmatpush1.bf16.msra.mxu0 %v2434
    %2459 = vmatprep.subr.bf16.mxu0 0
    %2460 = vmatpush1.bf16.msra.mxu0 0
    %2461 = vmatprep.subr.bf16.mxu0 0
    %2462 = vmatpush1.bf16.msra.mxu0 0
    %2463 = vmatprep.subr.bf16.mxu0 0
    %2464 = vmatpush1.bf16.msra.mxu0 0
    %2465 = vmatprep.subr.bf16.mxu0 0
    %2466 = vmatpush1.bf16.msra.mxu0 0
    %2467 = vmatprep.subr.bf16.mxu0 0
    %2468 = vmatpush1.bf16.msra.mxu0 0
    %2469 = vmatprep.subr.bf16.mxu0 0
    %2470 = vmatpush1.bf16.msra.mxu0 0
    %2471 = vmatprep.subr.bf16.mxu0 0
    %2472 = vmatpush1.bf16.msra.mxu0 0
    %2473 = vmatprep.subr.bf16.mxu0 0
    %2474 = vmatpush1.bf16.msra.mxu0 0
    %2475 = vmatprep.mubr.bf16.mxu0 0
    %2476 = vmatmul.mubr.bf16.gmra.mrb[0].mxu0 %v2268
    %v2477 = vpop.f32.mrb[0].mxu0
    %v2478 = vadd.f32 %v2389, %v2477
    %v2479 = vpop.f32.mrb[0].mxu0
    %v2480 = vpop.f32.mrb[0].mxu0
    %v2481 = vadd.f32 %v2392, %v2480
    %v2482 = vpop.f32.mrb[0].mxu0
    %2483 = vdwg.mxu0
    %v2484 = vld [vmem:[#allocation2 + $0x9] sm:$0xff]
    %v2485 = vld [vmem:[#allocation2 + $0x11] sm:$0xff]
    %v2486 = vpack.c.bf16 %v2485, %v2484
    %s2487 = scalar_lea.vmem [#allocation4], 896
    %v2488 = vld [vmem:[%s2487] sm:$0xf]
    %v2489 = vld [vmem:[%s2487 + $0x4] sm:$0xf]
    %v2490 = vld [vmem:[%s2487 + $0x8] sm:$0xf]
    %v2491 = vld [vmem:[%s2487 + $0xc] sm:$0xf]
    %v2492 = vld [vmem:[%s2487 + $0x10] sm:$0xf]
    %v2493 = vld [vmem:[%s2487 + $0x14] sm:$0xf]
    %v2494 = vld [vmem:[%s2487 + $0x18] sm:$0xf]
    %v2495 = vld [vmem:[%s2487 + $0x1c] sm:$0xf]
    %v2496 = vld [vmem:[%s2487 + $0x20] sm:$0xf]
    %v2497 = vld [vmem:[%s2487 + $0x24] sm:$0xf]
    %v2498 = vld [vmem:[%s2487 + $0x28] sm:$0xf]
    %v2499 = vld [vmem:[%s2487 + $0x2c] sm:$0xf]
    %v2500 = vld [vmem:[%s2487 + $0x30] sm:$0xf]
    %v2501 = vld [vmem:[%s2487 + $0x34] sm:$0xf]
    %v2502 = vld [vmem:[%s2487 + $0x38] sm:$0xf]
    %v2503 = vld [vmem:[%s2487 + $0x3c] sm:$0xf]
    %v2520 = vunpack.c.l.b16 %v2488
    %v2521 = vunpack.c.l.b16 %v2489
    %v2522 = vunpack.c.l.b16 %v2490
    %v2523 = vunpack.c.l.b16 %v2491
    %v2524 = vunpack.c.l.b16 %v2492
    %v2525 = vunpack.c.l.b16 %v2493
    %v2526 = vunpack.c.l.b16 %v2494
    %v2527 = vunpack.c.l.b16 %v2495
    %v2528 = vunpack.c.l.b16 %v2496
    %v2529 = vunpack.c.l.b16 %v2497
    %v2530 = vunpack.c.l.b16 %v2498
    %v2531 = vunpack.c.l.b16 %v2499
    %v2532 = vunpack.c.l.b16 %v2500
    %v2533 = vunpack.c.l.b16 %v2501
    %v2534 = vunpack.c.l.b16 %v2502
    %v2535 = vunpack.c.l.b16 %v2503
    %v2536 = vpack.c.b16 %v2521, %v2520
    %v2537 = vpack.c.b16 %v2523, %v2522
    %v2538 = vpack.c.b16 %v2525, %v2524
    %v2539 = vpack.c.b16 %v2527, %v2526
    %v2540 = vpack.c.b16 %v2529, %v2528
    %v2541 = vpack.c.b16 %v2531, %v2530
    %v2542 = vpack.c.b16 %v2533, %v2532
    %v2543 = vpack.c.b16 %v2535, %v2534
    %2552 = vmatprep.subr.bf16.mxu0 0
    %2553 = vmatpush1.bf16.msra.mxu0 %v2536
    %2554 = vmatprep.subr.bf16.mxu0 0
    %2555 = vmatpush1.bf16.msra.mxu0 %v2537
    %2556 = vmatprep.subr.bf16.mxu0 0
    %2557 = vmatpush1.bf16.msra.mxu0 %v2538
    %2558 = vmatprep.subr.bf16.mxu0 0
    %2559 = vmatpush1.bf16.msra.mxu0 %v2539
    %2560 = vmatprep.subr.bf16.mxu0 0
    %2561 = vmatpush1.bf16.msra.mxu0 %v2540
    %2562 = vmatprep.subr.bf16.mxu0 0
    %2563 = vmatpush1.bf16.msra.mxu0 %v2541
    %2564 = vmatprep.subr.bf16.mxu0 0
    %2565 = vmatpush1.bf16.msra.mxu0 %v2542
    %2566 = vmatprep.subr.bf16.mxu0 0
    %2567 = vmatpush1.bf16.msra.mxu0 %v2543
    %2568 = vmatprep.subr.bf16.mxu0 0
    %2569 = vmatpush1.bf16.msra.mxu0 0
    %2570 = vmatprep.subr.bf16.mxu0 0
    %2571 = vmatpush1.bf16.msra.mxu0 0
    %2572 = vmatprep.subr.bf16.mxu0 0
    %2573 = vmatpush1.bf16.msra.mxu0 0
    %2574 = vmatprep.subr.bf16.mxu0 0
    %2575 = vmatpush1.bf16.msra.mxu0 0
    %2576 = vmatprep.subr.bf16.mxu0 0
    %2577 = vmatpush1.bf16.msra.mxu0 0
    %2578 = vmatprep.subr.bf16.mxu0 0
    %2579 = vmatpush1.bf16.msra.mxu0 0
    %2580 = vmatprep.subr.bf16.mxu0 0
    %2581 = vmatpush1.bf16.msra.mxu0 0
    %2582 = vmatprep.subr.bf16.mxu0 0
    %2583 = vmatpush1.bf16.msra.mxu0 0
    %2584 = vmatprep.mubr.bf16.mxu0 0
    %2585 = vmatmul.mubr.bf16.gmra.mrb[0].mxu0 %v2486
    %v2586 = vpop.f32.mrb[0].mxu0
    %v2587 = vadd.f32 0.0, %v2586
    %v2588 = vpop.f32.mrb[0].mxu0
    %v2589 = vpop.f32.mrb[0].mxu0
    %v2590 = vadd.f32 0.0, %v2589
    %v2591 = vpop.f32.mrb[0].mxu0
    %2592 = vdwg.mxu0
    %v2593 = vadd.f32 %v2478, %v2587
    %v2594 = vadd.f32 %v2481, %v2590
    %s2595 = scalar_lea.vmem %s2, 4
    %v2596 = vld [vmem:[%s2595] sm:$0x1]
    %v2598 = vlaneseq
    %v2599 = vshrl.u32 %v2598, 7
    %v2600 = vsub.s32 0, %v2599
    %v2601 = vrot.slane %v2596, %v2600
    %v2603 = vmul.f32 %v2593, %v2601
    %v2604 = vmul.f32 %v2594, %v2601
    %s2605 = scalar_lea.vmem %s3, 4
    %v2606 = vld [vmem:[%s2605] sm:$0x1]
    %v2608 = vlaneseq
    %v2609 = vshrl.u32 %v2608, 7
    %v2610 = vsub.s32 0, %v2609
    %v2611 = vrot.slane %v2606, %v2610
    %v2613 = vadd.f32 %v2603, %v2611
    %v2614 = vadd.f32 %v2604, %v2611
    %vm2615 = vcmp.gt.f32.partialorder %v2613, 0.0
    %vm2616 = vcmp.gt.f32.partialorder %v2614, 0.0
    %v2617 = vmul.f32 %v2613, 0.01
    %v2618 = vmul.f32 %v2614, 0.01
    %v2619 = vsel %vm2615, %v2613, %v2617
    %v2620 = vsel %vm2616, %v2614, %v2618
    %v2621 = vsel %vm2260, %v2619, 0.0
    %v2622 = vsel %vm2261, %v2620, 0.0
    %2623 = vst [vmem:[#allocation2 + $0x8] sm:$0xff] %v2621
    %2624 = vst [vmem:[#allocation2 + $0x10] sm:$0xff] %v2622
    %v2625 = vld [vmem:[%s865] ss:$2 sm:$0xff]
    %v2626 = vld [vmem:[%s881] ss:$2 sm:$0xff]
    %v2627 = vmax.f32 %v2625, %v2626
    %2628 = vst [vmem:[#allocation2 + $0x8] sm:$0xff] %v2627
    %v2629 = vld [vmem:[#allocation2 + $0x7] sm:$0xff]
    %v2630 = vpack.c.bf16 %v2629, %v2629
    %s2631 = scalar_lea.vmem [#allocation4], 960
    %v2632 = vld [vmem:[%s2631] sm:$0xf]
    %v2633 = vld [vmem:[%s2631 + $0x4] sm:$0xf]
    %v2634 = vld [vmem:[%s2631 + $0x8] sm:$0xf]
    %v2635 = vld [vmem:[%s2631 + $0xc] sm:$0xf]
    %v2636 = vld [vmem:[%s2631 + $0x10] sm:$0xf]
    %v2637 = vld [vmem:[%s2631 + $0x14] sm:$0xf]
    %v2638 = vld [vmem:[%s2631 + $0x18] sm:$0xf]
    %v2639 = vld [vmem:[%s2631 + $0x1c] sm:$0xf]
    %v2640 = vld [vmem:[%s2631 + $0x20] sm:$0xf]
    %v2641 = vld [vmem:[%s2631 + $0x24] sm:$0xf]
    %v2642 = vld [vmem:[%s2631 + $0x28] sm:$0xf]
    %v2643 = vld [vmem:[%s2631 + $0x2c] sm:$0xf]
    %v2644 = vld [vmem:[%s2631 + $0x30] sm:$0xf]
    %v2645 = vld [vmem:[%s2631 + $0x34] sm:$0xf]
    %v2646 = vld [vmem:[%s2631 + $0x38] sm:$0xf]
    %v2647 = vld [vmem:[%s2631 + $0x3c] sm:$0xf]
    %v2648 = vld [vmem:[#allocation2 + $0x8] sm:$0xff]
    %v2649 = vpack.c.bf16 %v2648, %v2648
    %s2650 = scalar_lea.vmem [#allocation4], 1024
    %v2651 = vld [vmem:[%s2650] sm:$0xf]
    %v2652 = vld [vmem:[%s2650 + $0x4] sm:$0xf]
    %v2653 = vld [vmem:[%s2650 + $0x8] sm:$0xf]
    %v2654 = vld [vmem:[%s2650 + $0xc] sm:$0xf]
    %v2655 = vld [vmem:[%s2650 + $0x10] sm:$0xf]
    %v2656 = vld [vmem:[%s2650 + $0x14] sm:$0xf]
    %v2657 = vld [vmem:[%s2650 + $0x18] sm:$0xf]
    %v2658 = vld [vmem:[%s2650 + $0x1c] sm:$0xf]
    %v2659 = vld [vmem:[%s2650 + $0x20] sm:$0xf]
    %v2660 = vld [vmem:[%s2650 + $0x24] sm:$0xf]
    %v2661 = vld [vmem:[%s2650 + $0x28] sm:$0xf]
    %v2662 = vld [vmem:[%s2650 + $0x2c] sm:$0xf]
    %v2663 = vld [vmem:[%s2650 + $0x30] sm:$0xf]
    %v2664 = vld [vmem:[%s2650 + $0x34] sm:$0xf]
    %v2665 = vld [vmem:[%s2650 + $0x38] sm:$0xf]
    %v2666 = vld [vmem:[%s2650 + $0x3c] sm:$0xf]
    %v2683 = vunpack.c.l.b16 %v2651
    %v2684 = vunpack.c.l.b16 %v2652
    %v2685 = vunpack.c.l.b16 %v2653
    %v2686 = vunpack.c.l.b16 %v2654
    %v2687 = vunpack.c.l.b16 %v2655
    %v2688 = vunpack.c.l.b16 %v2656
    %v2689 = vunpack.c.l.b16 %v2657
    %v2690 = vunpack.c.l.b16 %v2658
    %v2691 = vunpack.c.l.b16 %v2659
    %v2692 = vunpack.c.l.b16 %v2660
    %v2693 = vunpack.c.l.b16 %v2661
    %v2694 = vunpack.c.l.b16 %v2662
    %v2695 = vunpack.c.l.b16 %v2663
    %v2696 = vunpack.c.l.b16 %v2664
    %v2697 = vunpack.c.l.b16 %v2665
    %v2698 = vunpack.c.l.b16 %v2666
    %v2699 = vpack.c.b16 %v2684, %v2683
    %v2700 = vpack.c.b16 %v2686, %v2685
    %v2701 = vpack.c.b16 %v2688, %v2687
    %v2702 = vpack.c.b16 %v2690, %v2689
    %v2703 = vpack.c.b16 %v2692, %v2691
    %v2704 = vpack.c.b16 %v2694, %v2693
    %v2705 = vpack.c.b16 %v2696, %v2695
    %v2706 = vpack.c.b16 %v2698, %v2697
    %2715 = vmatprep.subr.bf16.mxu0 0
    %2716 = vmatpush1.bf16.msra.mxu0 %v2699
    %2717 = vmatprep.subr.bf16.mxu0 0
    %2718 = vmatpush1.bf16.msra.mxu0 %v2700
    %2719 = vmatprep.subr.bf16.mxu0 0
    %2720 = vmatpush1.bf16.msra.mxu0 %v2701
    %2721 = vmatprep.subr.bf16.mxu0 0
    %2722 = vmatpush1.bf16.msra.mxu0 %v2702
    %2723 = vmatprep.subr.bf16.mxu0 0
    %2724 = vmatpush1.bf16.msra.mxu0 %v2703
    %2725 = vmatprep.subr.bf16.mxu0 0
    %2726 = vmatpush1.bf16.msra.mxu0 %v2704
    %2727 = vmatprep.subr.bf16.mxu0 0
    %2728 = vmatpush1.bf16.msra.mxu0 %v2705
    %2729 = vmatprep.subr.bf16.mxu0 0
    %2730 = vmatpush1.bf16.msra.mxu0 %v2706
    %2731 = vmatprep.subr.bf16.mxu0 0
    %2732 = vmatpush1.bf16.msra.mxu0 0
    %2733 = vmatprep.subr.bf16.mxu0 0
    %2734 = vmatpush1.bf16.msra.mxu0 0
    %2735 = vmatprep.subr.bf16.mxu0 0
    %2736 = vmatpush1.bf16.msra.mxu0 0
    %2737 = vmatprep.subr.bf16.mxu0 0
    %2738 = vmatpush1.bf16.msra.mxu0 0
    %2739 = vmatprep.subr.bf16.mxu0 0
    %2740 = vmatpush1.bf16.msra.mxu0 0
    %2741 = vmatprep.subr.bf16.mxu0 0
    %2742 = vmatpush1.bf16.msra.mxu0 0
    %2743 = vmatprep.subr.bf16.mxu0 0
    %2744 = vmatpush1.bf16.msra.mxu0 0
    %2745 = vmatprep.subr.bf16.mxu0 0
    %2746 = vmatpush1.bf16.msra.mxu0 0
    %2747 = vmatprep.mubr.bf16.mxu0 0
    %2748 = vmatmul.mubr.bf16.gmra.mrb[0].mxu0 %v2649
    %v2749 = vpop.f32.mrb[0].mxu0
    %v2750 = vadd.f32 0.0, %v2749
    %v2751 = vpop.f32.mrb[0].mxu0
    %v2752 = vpop.f32.mrb[0].mxu0
    %v2753 = vpop.f32.mrb[0].mxu0
    %2754 = vdwg.mxu0
    %v2771 = vunpack.c.l.b16 %v2632
    %v2772 = vunpack.c.l.b16 %v2633
    %v2773 = vunpack.c.l.b16 %v2634
    %v2774 = vunpack.c.l.b16 %v2635
    %v2775 = vunpack.c.l.b16 %v2636
    %v2776 = vunpack.c.l.b16 %v2637
    %v2777 = vunpack.c.l.b16 %v2638
    %v2778 = vunpack.c.l.b16 %v2639
    %v2779 = vunpack.c.l.b16 %v2640
    %v2780 = vunpack.c.l.b16 %v2641
    %v2781 = vunpack.c.l.b16 %v2642
    %v2782 = vunpack.c.l.b16 %v2643
    %v2783 = vunpack.c.l.b16 %v2644
    %v2784 = vunpack.c.l.b16 %v2645
    %v2785 = vunpack.c.l.b16 %v2646
    %v2786 = vunpack.c.l.b16 %v2647
    %v2787 = vpack.c.b16 %v2772, %v2771
    %v2788 = vpack.c.b16 %v2774, %v2773
    %v2789 = vpack.c.b16 %v2776, %v2775
    %v2790 = vpack.c.b16 %v2778, %v2777
    %v2791 = vpack.c.b16 %v2780, %v2779
    %v2792 = vpack.c.b16 %v2782, %v2781
    %v2793 = vpack.c.b16 %v2784, %v2783
    %v2794 = vpack.c.b16 %v2786, %v2785
    %2803 = vmatprep.subr.bf16.mxu0 0
    %2804 = vmatpush1.bf16.msra.mxu0 %v2787
    %2805 = vmatprep.subr.bf16.mxu0 0
    %2806 = vmatpush1.bf16.msra.mxu0 %v2788
    %2807 = vmatprep.subr.bf16.mxu0 0
    %2808 = vmatpush1.bf16.msra.mxu0 %v2789
    %2809 = vmatprep.subr.bf16.mxu0 0
    %2810 = vmatpush1.bf16.msra.mxu0 %v2790
    %2811 = vmatprep.subr.bf16.mxu0 0
    %2812 = vmatpush1.bf16.msra.mxu0 %v2791
    %2813 = vmatprep.subr.bf16.mxu0 0
    %2814 = vmatpush1.bf16.msra.mxu0 %v2792
    %2815 = vmatprep.subr.bf16.mxu0 0
    %2816 = vmatpush1.bf16.msra.mxu0 %v2793
    %2817 = vmatprep.subr.bf16.mxu0 0
    %2818 = vmatpush1.bf16.msra.mxu0 %v2794
    %2819 = vmatprep.subr.bf16.mxu0 0
    %2820 = vmatpush1.bf16.msra.mxu0 0
    %2821 = vmatprep.subr.bf16.mxu0 0
    %2822 = vmatpush1.bf16.msra.mxu0 0
    %2823 = vmatprep.subr.bf16.mxu0 0
    %2824 = vmatpush1.bf16.msra.mxu0 0
    %2825 = vmatprep.subr.bf16.mxu0 0
    %2826 = vmatpush1.bf16.msra.mxu0 0
    %2827 = vmatprep.subr.bf16.mxu0 0
    %2828 = vmatpush1.bf16.msra.mxu0 0
    %2829 = vmatprep.subr.bf16.mxu0 0
    %2830 = vmatpush1.bf16.msra.mxu0 0
    %2831 = vmatprep.subr.bf16.mxu0 0
    %2832 = vmatpush1.bf16.msra.mxu0 0
    %2833 = vmatprep.subr.bf16.mxu0 0
    %2834 = vmatpush1.bf16.msra.mxu0 0
    %2835 = vmatprep.mubr.bf16.mxu0 0
    %2836 = vmatmul.mubr.bf16.gmra.mrb[0].mxu0 %v2630
    %v2837 = vpop.f32.mrb[0].mxu0
    %v2838 = vadd.f32 %v2750, %v2837
    %v2839 = vpop.f32.mrb[0].mxu0
    %v2840 = vpop.f32.mrb[0].mxu0
    %v2841 = vpop.f32.mrb[0].mxu0
    %2842 = vdwg.mxu0
    %v2843 = vld [vmem:[#allocation2 + $0x9] sm:$0xff]
    %v2844 = vpack.c.bf16 %v2843, %v2843
    %s2845 = scalar_lea.vmem [#allocation4], 1088
    %v2846 = vld [vmem:[%s2845] sm:$0xf]
    %v2847 = vld [vmem:[%s2845 + $0x4] sm:$0xf]
    %v2848 = vld [vmem:[%s2845 + $0x8] sm:$0xf]
    %v2849 = vld [vmem:[%s2845 + $0xc] sm:$0xf]
    %v2850 = vld [vmem:[%s2845 + $0x10] sm:$0xf]
    %v2851 = vld [vmem:[%s2845 + $0x14] sm:$0xf]
    %v2852 = vld [vmem:[%s2845 + $0x18] sm:$0xf]
    %v2853 = vld [vmem:[%s2845 + $0x1c] sm:$0xf]
    %v2854 = vld [vmem:[%s2845 + $0x20] sm:$0xf]
    %v2855 = vld [vmem:[%s2845 + $0x24] sm:$0xf]
    %v2856 = vld [vmem:[%s2845 + $0x28] sm:$0xf]
    %v2857 = vld [vmem:[%s2845 + $0x2c] sm:$0xf]
    %v2858 = vld [vmem:[%s2845 + $0x30] sm:$0xf]
    %v2859 = vld [vmem:[%s2845 + $0x34] sm:$0xf]
    %v2860 = vld [vmem:[%s2845 + $0x38] sm:$0xf]
    %v2861 = vld [vmem:[%s2845 + $0x3c] sm:$0xf]
    %v2878 = vunpack.c.l.b16 %v2846
    %v2879 = vunpack.c.l.b16 %v2847
    %v2880 = vunpack.c.l.b16 %v2848
    %v2881 = vunpack.c.l.b16 %v2849
    %v2882 = vunpack.c.l.b16 %v2850
    %v2883 = vunpack.c.l.b16 %v2851
    %v2884 = vunpack.c.l.b16 %v2852
    %v2885 = vunpack.c.l.b16 %v2853
    %v2886 = vunpack.c.l.b16 %v2854
    %v2887 = vunpack.c.l.b16 %v2855
    %v2888 = vunpack.c.l.b16 %v2856
    %v2889 = vunpack.c.l.b16 %v2857
    %v2890 = vunpack.c.l.b16 %v2858
    %v2891 = vunpack.c.l.b16 %v2859
    %v2892 = vunpack.c.l.b16 %v2860
    %v2893 = vunpack.c.l.b16 %v2861
    %v2894 = vpack.c.b16 %v2879, %v2878
    %v2895 = vpack.c.b16 %v2881, %v2880
    %v2896 = vpack.c.b16 %v2883, %v2882
    %v2897 = vpack.c.b16 %v2885, %v2884
    %v2898 = vpack.c.b16 %v2887, %v2886
    %v2899 = vpack.c.b16 %v2889, %v2888
    %v2900 = vpack.c.b16 %v2891, %v2890
    %v2901 = vpack.c.b16 %v2893, %v2892
    %2910 = vmatprep.subr.bf16.mxu0 0
    %2911 = vmatpush1.bf16.msra.mxu0 %v2894
    %2912 = vmatprep.subr.bf16.mxu0 0
    %2913 = vmatpush1.bf16.msra.mxu0 %v2895
    %2914 = vmatprep.subr.bf16.mxu0 0
    %2915 = vmatpush1.bf16.msra.mxu0 %v2896
    %2916 = vmatprep.subr.bf16.mxu0 0
    %2917 = vmatpush1.bf16.msra.mxu0 %v2897
    %2918 = vmatprep.subr.bf16.mxu0 0
    %2919 = vmatpush1.bf16.msra.mxu0 %v2898
    %2920 = vmatprep.subr.bf16.mxu0 0
    %2921 = vmatpush1.bf16.msra.mxu0 %v2899
    %2922 = vmatprep.subr.bf16.mxu0 0
    %2923 = vmatpush1.bf16.msra.mxu0 %v2900
    %2924 = vmatprep.subr.bf16.mxu0 0
    %2925 = vmatpush1.bf16.msra.mxu0 %v2901
    %2926 = vmatprep.subr.bf16.mxu0 0
    %2927 = vmatpush1.bf16.msra.mxu0 0
    %2928 = vmatprep.subr.bf16.mxu0 0
    %2929 = vmatpush1.bf16.msra.mxu0 0
    %2930 = vmatprep.subr.bf16.mxu0 0
    %2931 = vmatpush1.bf16.msra.mxu0 0
    %2932 = vmatprep.subr.bf16.mxu0 0
    %2933 = vmatpush1.bf16.msra.mxu0 0
    %2934 = vmatprep.subr.bf16.mxu0 0
    %2935 = vmatpush1.bf16.msra.mxu0 0
    %2936 = vmatprep.subr.bf16.mxu0 0
    %2937 = vmatpush1.bf16.msra.mxu0 0
    %2938 = vmatprep.subr.bf16.mxu0 0
    %2939 = vmatpush1.bf16.msra.mxu0 0
    %2940 = vmatprep.subr.bf16.mxu0 0
    %2941 = vmatpush1.bf16.msra.mxu0 0
    %2942 = vmatprep.mubr.bf16.mxu0 0
    %2943 = vmatmul.mubr.bf16.gmra.mrb[0].mxu0 %v2844
    %v2944 = vpop.f32.mrb[0].mxu0
    %v2945 = vadd.f32 0.0, %v2944
    %v2946 = vpop.f32.mrb[0].mxu0
    %v2947 = vpop.f32.mrb[0].mxu0
    %v2948 = vpop.f32.mrb[0].mxu0
    %2949 = vdwg.mxu0
    %v2950 = vadd.f32 %v2838, %v2945
    %s2951 = scalar_lea.vmem %s2, 5
    %v2952 = vld [vmem:[%s2951] sm:$0x1]
    %v2954 = vlaneseq
    %v2955 = vshrl.u32 %v2954, 7
    %v2956 = vsub.s32 0, %v2955
    %v2957 = vrot.slane %v2952, %v2956
    %v2959 = vmul.f32 %v2950, %v2957
    %s2960 = scalar_lea.vmem %s3, 5
    %v2961 = vld [vmem:[%s2960] sm:$0x1]
    %v2963 = vlaneseq
    %v2964 = vshrl.u32 %v2963, 7
    %v2965 = vsub.s32 0, %v2964
    %v2966 = vrot.slane %v2961, %v2965
    %v2968 = vadd.f32 %v2959, %v2966
    %vm2969 = vcmp.gt.f32.partialorder %v2968, 0.0
    %v2970 = vmul.f32 %v2968, 0.01
    %v2971 = vsel %vm2969, %v2968, %v2970
    %v2972 = vand.u32 %v753, 3
    %vm2973 = vcmp.lt.s32.totalorder %v2972, 2
    %v2974 = vsel %vm2973, 1, 0
    %vm2975 = vcmp.eq.s32.totalorder %v2974, 1
    %v2976 = vsel %vm2975, %v2971, 0.0
    %2977 = vst [vmem:[#allocation2 + $0x8] sm:$0xff] %v2976
    %v2978 = vld [vmem:[#allocation2 + $0x7] sm:$0xff]
    %v2979 = vpack.c.bf16 %v2978, %v2978
    %s2980 = scalar_lea.vmem [#allocation4], 1152
    %v2981 = vld [vmem:[%s2980] sm:$0xf]
    %v2982 = vld [vmem:[%s2980 + $0x4] sm:$0xf]
    %v2983 = vld [vmem:[%s2980 + $0x8] sm:$0xf]
    %v2984 = vld [vmem:[%s2980 + $0xc] sm:$0xf]
    %v2985 = vld [vmem:[%s2980 + $0x10] sm:$0xf]
    %v2986 = vld [vmem:[%s2980 + $0x14] sm:$0xf]
    %v2987 = vld [vmem:[%s2980 + $0x18] sm:$0xf]
    %v2988 = vld [vmem:[%s2980 + $0x1c] sm:$0xf]
    %v2989 = vld [vmem:[%s2980 + $0x20] sm:$0xf]
    %v2990 = vld [vmem:[%s2980 + $0x24] sm:$0xf]
    %v2991 = vld [vmem:[%s2980 + $0x28] sm:$0xf]
    %v2992 = vld [vmem:[%s2980 + $0x2c] sm:$0xf]
    %v2993 = vld [vmem:[%s2980 + $0x30] sm:$0xf]
    %v2994 = vld [vmem:[%s2980 + $0x34] sm:$0xf]
    %v2995 = vld [vmem:[%s2980 + $0x38] sm:$0xf]
    %v2996 = vld [vmem:[%s2980 + $0x3c] sm:$0xf]
    %v2997 = vld [vmem:[#allocation2 + $0x8] sm:$0xff]
    %v2998 = vpack.c.bf16 %v2997, %v2997
    %s2999 = scalar_lea.vmem [#allocation4], 1216
    %v3000 = vld [vmem:[%s2999] sm:$0xf]
    %v3001 = vld [vmem:[%s2999 + $0x4] sm:$0xf]
    %v3002 = vld [vmem:[%s2999 + $0x8] sm:$0xf]
    %v3003 = vld [vmem:[%s2999 + $0xc] sm:$0xf]
    %v3004 = vld [vmem:[%s2999 + $0x10] sm:$0xf]
    %v3005 = vld [vmem:[%s2999 + $0x14] sm:$0xf]
    %v3006 = vld [vmem:[%s2999 + $0x18] sm:$0xf]
    %v3007 = vld [vmem:[%s2999 + $0x1c] sm:$0xf]
    %v3008 = vld [vmem:[%s2999 + $0x20] sm:$0xf]
    %v3009 = vld [vmem:[%s2999 + $0x24] sm:$0xf]
    %v3010 = vld [vmem:[%s2999 + $0x28] sm:$0xf]
    %v3011 = vld [vmem:[%s2999 + $0x2c] sm:$0xf]
    %v3012 = vld [vmem:[%s2999 + $0x30] sm:$0xf]
    %v3013 = vld [vmem:[%s2999 + $0x34] sm:$0xf]
    %v3014 = vld [vmem:[%s2999 + $0x38] sm:$0xf]
    %v3015 = vld [vmem:[%s2999 + $0x3c] sm:$0xf]
    %v3032 = vunpack.c.l.b16 %v3000
    %v3033 = vunpack.c.l.b16 %v3001
    %v3034 = vunpack.c.l.b16 %v3002
    %v3035 = vunpack.c.l.b16 %v3003
    %v3036 = vunpack.c.l.b16 %v3004
    %v3037 = vunpack.c.l.b16 %v3005
    %v3038 = vunpack.c.l.b16 %v3006
    %v3039 = vunpack.c.l.b16 %v3007
    %v3040 = vunpack.c.l.b16 %v3008
    %v3041 = vunpack.c.l.b16 %v3009
    %v3042 = vunpack.c.l.b16 %v3010
    %v3043 = vunpack.c.l.b16 %v3011
    %v3044 = vunpack.c.l.b16 %v3012
    %v3045 = vunpack.c.l.b16 %v3013
    %v3046 = vunpack.c.l.b16 %v3014
    %v3047 = vunpack.c.l.b16 %v3015
    %v3048 = vpack.c.b16 %v3033, %v3032
    %v3049 = vpack.c.b16 %v3035, %v3034
    %v3050 = vpack.c.b16 %v3037, %v3036
    %v3051 = vpack.c.b16 %v3039, %v3038
    %v3052 = vpack.c.b16 %v3041, %v3040
    %v3053 = vpack.c.b16 %v3043, %v3042
    %v3054 = vpack.c.b16 %v3045, %v3044
    %v3055 = vpack.c.b16 %v3047, %v3046
    %3064 = vmatprep.subr.bf16.mxu0 0
    %3065 = vmatpush1.bf16.msra.mxu0 %v3048
    %3066 = vmatprep.subr.bf16.mxu0 0
    %3067 = vmatpush1.bf16.msra.mxu0 %v3049
    %3068 = vmatprep.subr.bf16.mxu0 0
    %3069 = vmatpush1.bf16.msra.mxu0 %v3050
    %3070 = vmatprep.subr.bf16.mxu0 0
    %3071 = vmatpush1.bf16.msra.mxu0 %v3051
    %3072 = vmatprep.subr.bf16.mxu0 0
    %3073 = vmatpush1.bf16.msra.mxu0 %v3052
    %3074 = vmatprep.subr.bf16.mxu0 0
    %3075 = vmatpush1.bf16.msra.mxu0 %v3053
    %3076 = vmatprep.subr.bf16.mxu0 0
    %3077 = vmatpush1.bf16.msra.mxu0 %v3054
    %3078 = vmatprep.subr.bf16.mxu0 0
    %3079 = vmatpush1.bf16.msra.mxu0 %v3055
    %3080 = vmatprep.subr.bf16.mxu0 0
    %3081 = vmatpush1.bf16.msra.mxu0 0
    %3082 = vmatprep.subr.bf16.mxu0 0
    %3083 = vmatpush1.bf16.msra.mxu0 0
    %3084 = vmatprep.subr.bf16.mxu0 0
    %3085 = vmatpush1.bf16.msra.mxu0 0
    %3086 = vmatprep.subr.bf16.mxu0 0
    %3087 = vmatpush1.bf16.msra.mxu0 0
    %3088 = vmatprep.subr.bf16.mxu0 0
    %3089 = vmatpush1.bf16.msra.mxu0 0
    %3090 = vmatprep.subr.bf16.mxu0 0
    %3091 = vmatpush1.bf16.msra.mxu0 0
    %3092 = vmatprep.subr.bf16.mxu0 0
    %3093 = vmatpush1.bf16.msra.mxu0 0
    %3094 = vmatprep.subr.bf16.mxu0 0
    %3095 = vmatpush1.bf16.msra.mxu0 0
    %3096 = vmatprep.mubr.bf16.mxu0 0
    %3097 = vmatmul.mubr.bf16.gmra.mrb[0].mxu0 %v2998
    %v3098 = vpop.f32.mrb[0].mxu0
    %v3099 = vadd.f32 0.0, %v3098
    %v3100 = vpop.f32.mrb[0].mxu0
    %v3101 = vpop.f32.mrb[0].mxu0
    %v3102 = vpop.f32.mrb[0].mxu0
    %3103 = vdwg.mxu0
    %v3120 = vunpack.c.l.b16 %v2981
    %v3121 = vunpack.c.l.b16 %v2982
    %v3122 = vunpack.c.l.b16 %v2983
    %v3123 = vunpack.c.l.b16 %v2984
    %v3124 = vunpack.c.l.b16 %v2985
    %v3125 = vunpack.c.l.b16 %v2986
    %v3126 = vunpack.c.l.b16 %v2987
    %v3127 = vunpack.c.l.b16 %v2988
    %v3128 = vunpack.c.l.b16 %v2989
    %v3129 = vunpack.c.l.b16 %v2990
    %v3130 = vunpack.c.l.b16 %v2991
    %v3131 = vunpack.c.l.b16 %v2992
    %v3132 = vunpack.c.l.b16 %v2993
    %v3133 = vunpack.c.l.b16 %v2994
    %v3134 = vunpack.c.l.b16 %v2995
    %v3135 = vunpack.c.l.b16 %v2996
    %v3136 = vpack.c.b16 %v3121, %v3120
    %v3137 = vpack.c.b16 %v3123, %v3122
    %v3138 = vpack.c.b16 %v3125, %v3124
    %v3139 = vpack.c.b16 %v3127, %v3126
    %v3140 = vpack.c.b16 %v3129, %v3128
    %v3141 = vpack.c.b16 %v3131, %v3130
    %v3142 = vpack.c.b16 %v3133, %v3132
    %v3143 = vpack.c.b16 %v3135, %v3134
    %3152 = vmatprep.subr.bf16.mxu0 0
    %3153 = vmatpush1.bf16.msra.mxu0 %v3136
    %3154 = vmatprep.subr.bf16.mxu0 0
    %3155 = vmatpush1.bf16.msra.mxu0 %v3137
    %3156 = vmatprep.subr.bf16.mxu0 0
    %3157 = vmatpush1.bf16.msra.mxu0 %v3138
    %3158 = vmatprep.subr.bf16.mxu0 0
    %3159 = vmatpush1.bf16.msra.mxu0 %v3139
    %3160 = vmatprep.subr.bf16.mxu0 0
    %3161 = vmatpush1.bf16.msra.mxu0 %v3140
    %3162 = vmatprep.subr.bf16.mxu0 0
    %3163 = vmatpush1.bf16.msra.mxu0 %v3141
    %3164 = vmatprep.subr.bf16.mxu0 0
    %3165 = vmatpush1.bf16.msra.mxu0 %v3142
    %3166 = vmatprep.subr.bf16.mxu0 0
    %3167 = vmatpush1.bf16.msra.mxu0 %v3143
    %3168 = vmatprep.subr.bf16.mxu0 0
    %3169 = vmatpush1.bf16.msra.mxu0 0
    %3170 = vmatprep.subr.bf16.mxu0 0
    %3171 = vmatpush1.bf16.msra.mxu0 0
    %3172 = vmatprep.subr.bf16.mxu0 0
    %3173 = vmatpush1.bf16.msra.mxu0 0
    %3174 = vmatprep.subr.bf16.mxu0 0
    %3175 = vmatpush1.bf16.msra.mxu0 0
    %3176 = vmatprep.subr.bf16.mxu0 0
    %3177 = vmatpush1.bf16.msra.mxu0 0
    %3178 = vmatprep.subr.bf16.mxu0 0
    %3179 = vmatpush1.bf16.msra.mxu0 0
    %3180 = vmatprep.subr.bf16.mxu0 0
    %3181 = vmatpush1.bf16.msra.mxu0 0
    %3182 = vmatprep.subr.bf16.mxu0 0
    %3183 = vmatpush1.bf16.msra.mxu0 0
    %3184 = vmatprep.mubr.bf16.mxu0 0
    %3185 = vmatmul.mubr.bf16.gmra.mrb[0].mxu0 %v2979
    %v3186 = vpop.f32.mrb[0].mxu0
    %v3187 = vadd.f32 %v3099, %v3186
    %v3188 = vpop.f32.mrb[0].mxu0
    %v3189 = vpop.f32.mrb[0].mxu0
    %v3190 = vpop.f32.mrb[0].mxu0
    %3191 = vdwg.mxu0
    %v3192 = vld [vmem:[#allocation2 + $0x9] sm:$0xff]
    %v3193 = vpack.c.bf16 %v3192, %v3192
    %s3194 = scalar_lea.vmem [#allocation4], 1280
    %v3195 = vld [vmem:[%s3194] sm:$0xf]
    %v3196 = vld [vmem:[%s3194 + $0x4] sm:$0xf]
    %v3197 = vld [vmem:[%s3194 + $0x8] sm:$0xf]
    %v3198 = vld [vmem:[%s3194 + $0xc] sm:$0xf]
    %v3199 = vld [vmem:[%s3194 + $0x10] sm:$0xf]
    %v3200 = vld [vmem:[%s3194 + $0x14] sm:$0xf]
    %v3201 = vld [vmem:[%s3194 + $0x18] sm:$0xf]
    %v3202 = vld [vmem:[%s3194 + $0x1c] sm:$0xf]
    %v3203 = vld [vmem:[%s3194 + $0x20] sm:$0xf]
    %v3204 = vld [vmem:[%s3194 + $0x24] sm:$0xf]
    %v3205 = vld [vmem:[%s3194 + $0x28] sm:$0xf]
    %v3206 = vld [vmem:[%s3194 + $0x2c] sm:$0xf]
    %v3207 = vld [vmem:[%s3194 + $0x30] sm:$0xf]
    %v3208 = vld [vmem:[%s3194 + $0x34] sm:$0xf]
    %v3209 = vld [vmem:[%s3194 + $0x38] sm:$0xf]
    %v3210 = vld [vmem:[%s3194 + $0x3c] sm:$0xf]
    %v3227 = vunpack.c.l.b16 %v3195
    %v3228 = vunpack.c.l.b16 %v3196
    %v3229 = vunpack.c.l.b16 %v3197
    %v3230 = vunpack.c.l.b16 %v3198
    %v3231 = vunpack.c.l.b16 %v3199
    %v3232 = vunpack.c.l.b16 %v3200
    %v3233 = vunpack.c.l.b16 %v3201
    %v3234 = vunpack.c.l.b16 %v3202
    %v3235 = vunpack.c.l.b16 %v3203
    %v3236 = vunpack.c.l.b16 %v3204
    %v3237 = vunpack.c.l.b16 %v3205
    %v3238 = vunpack.c.l.b16 %v3206
    %v3239 = vunpack.c.l.b16 %v3207
    %v3240 = vunpack.c.l.b16 %v3208
    %v3241 = vunpack.c.l.b16 %v3209
    %v3242 = vunpack.c.l.b16 %v3210
    %v3243 = vpack.c.b16 %v3228, %v3227
    %v3244 = vpack.c.b16 %v3230, %v3229
    %v3245 = vpack.c.b16 %v3232, %v3231
    %v3246 = vpack.c.b16 %v3234, %v3233
    %v3247 = vpack.c.b16 %v3236, %v3235
    %v3248 = vpack.c.b16 %v3238, %v3237
    %v3249 = vpack.c.b16 %v3240, %v3239
    %v3250 = vpack.c.b16 %v3242, %v3241
    %3259 = vmatprep.subr.bf16.mxu0 0
    %3260 = vmatpush1.bf16.msra.mxu0 %v3243
    %3261 = vmatprep.subr.bf16.mxu0 0
    %3262 = vmatpush1.bf16.msra.mxu0 %v3244
    %3263 = vmatprep.subr.bf16.mxu0 0
    %3264 = vmatpush1.bf16.msra.mxu0 %v3245
    %3265 = vmatprep.subr.bf16.mxu0 0
    %3266 = vmatpush1.bf16.msra.mxu0 %v3246
    %3267 = vmatprep.subr.bf16.mxu0 0
    %3268 = vmatpush1.bf16.msra.mxu0 %v3247
    %3269 = vmatprep.subr.bf16.mxu0 0
    %3270 = vmatpush1.bf16.msra.mxu0 %v3248
    %3271 = vmatprep.subr.bf16.mxu0 0
    %3272 = vmatpush1.bf16.msra.mxu0 %v3249
    %3273 = vmatprep.subr.bf16.mxu0 0
    %3274 = vmatpush1.bf16.msra.mxu0 %v3250
    %3275 = vmatprep.subr.bf16.mxu0 0
    %3276 = vmatpush1.bf16.msra.mxu0 0
    %3277 = vmatprep.subr.bf16.mxu0 0
    %3278 = vmatpush1.bf16.msra.mxu0 0
    %3279 = vmatprep.subr.bf16.mxu0 0
    %3280 = vmatpush1.bf16.msra.mxu0 0
    %3281 = vmatprep.subr.bf16.mxu0 0
    %3282 = vmatpush1.bf16.msra.mxu0 0
    %3283 = vmatprep.subr.bf16.mxu0 0
    %3284 = vmatpush1.bf16.msra.mxu0 0
    %3285 = vmatprep.subr.bf16.mxu0 0
    %3286 = vmatpush1.bf16.msra.mxu0 0
    %3287 = vmatprep.subr.bf16.mxu0 0
    %3288 = vmatpush1.bf16.msra.mxu0 0
    %3289 = vmatprep.subr.bf16.mxu0 0
    %3290 = vmatpush1.bf16.msra.mxu0 0
    %3291 = vmatprep.mubr.bf16.mxu0 0
    %3292 = vmatmul.mubr.bf16.gmra.mrb[0].mxu0 %v3193
    %v3293 = vpop.f32.mrb[0].mxu0
    %v3294 = vadd.f32 0.0, %v3293
    %v3295 = vpop.f32.mrb[0].mxu0
    %v3296 = vpop.f32.mrb[0].mxu0
    %v3297 = vpop.f32.mrb[0].mxu0
    %3298 = vdwg.mxu0
    %v3299 = vadd.f32 %v3187, %v3294
    %s3300 = scalar_lea.vmem %s2, 6
    %v3301 = vld [vmem:[%s3300] sm:$0x1]
    %v3303 = vlaneseq
    %v3304 = vshrl.u32 %v3303, 7
    %v3305 = vsub.s32 0, %v3304
    %v3306 = vrot.slane %v3301, %v3305
    %v3308 = vmul.f32 %v3299, %v3306
    %s3309 = scalar_lea.vmem %s3, 6
    %v3310 = vld [vmem:[%s3309] sm:$0x1]
    %v3312 = vlaneseq
    %v3313 = vshrl.u32 %v3312, 7
    %v3314 = vsub.s32 0, %v3313
    %v3315 = vrot.slane %v3310, %v3314
    %v3317 = vadd.f32 %v3308, %v3315
    %vm3318 = vcmp.gt.f32.partialorder %v3317, 0.0
    %v3319 = vmul.f32 %v3317, 0.01
    %v3320 = vsel %vm3318, %v3317, %v3319
    %v3321 = vsel %vm2975, %v3320, 0.0
    %3322 = vst [vmem:[#allocation2 + $0x8] sm:$0xff] %v3321
    %v3323 = vld [vmem:[%s865] ss:$2 sm:$0xf]
    %v3324 = vld [vmem:[%s881] ss:$2 sm:$0xf]
    %v3325 = vmax.f32 %v3323, %v3324
    %3326 = vst [vmem:[#allocation2 + $0x8] sm:$0xf] %v3325
    %v3327 = vld [vmem:[%s865] ss:$2 sm:$0x3]
    %v3328 = vpack.c.bf16 %v3327, %v3327
    %v3329 = vld [vmem:[%s4] sm:$0xf]
    %v3330 = vld [vmem:[%s4 + $0x4] sm:$0xf]
    %v3331 = vld [vmem:[%s4 + $0x8] sm:$0xf]
    %v3332 = vld [vmem:[%s4 + $0xc] sm:$0xf]
    %v3333 = vld [vmem:[%s4 + $0x10] sm:$0xf]
    %v3334 = vld [vmem:[%s4 + $0x14] sm:$0xf]
    %v3335 = vld [vmem:[%s4 + $0x18] sm:$0xf]
    %v3336 = vld [vmem:[%s4 + $0x1c] sm:$0xf]
    %v3337 = vld [vmem:[%s4 + $0x20] sm:$0xf]
    %v3338 = vld [vmem:[%s4 + $0x24] sm:$0xf]
    %v3339 = vld [vmem:[%s4 + $0x28] sm:$0xf]
    %v3340 = vld [vmem:[%s4 + $0x2c] sm:$0xf]
    %v3341 = vld [vmem:[%s4 + $0x30] sm:$0xf]
    %v3342 = vld [vmem:[%s4 + $0x34] sm:$0xf]
    %v3343 = vld [vmem:[%s4 + $0x38] sm:$0xf]
    %v3344 = vld [vmem:[%s4 + $0x3c] sm:$0xf]
    %v3361 = vunpack.c.l.b16 %v3329
    %v3362 = vunpack.c.l.b16 %v3330
    %v3363 = vunpack.c.l.b16 %v3331
    %v3364 = vunpack.c.l.b16 %v3332
    %v3365 = vunpack.c.l.b16 %v3333
    %v3366 = vunpack.c.l.b16 %v3334
    %v3367 = vunpack.c.l.b16 %v3335
    %v3368 = vunpack.c.l.b16 %v3336
    %v3369 = vunpack.c.l.b16 %v3337
    %v3370 = vunpack.c.l.b16 %v3338
    %v3371 = vunpack.c.l.b16 %v3339
    %v3372 = vunpack.c.l.b16 %v3340
    %v3373 = vunpack.c.l.b16 %v3341
    %v3374 = vunpack.c.l.b16 %v3342
    %v3375 = vunpack.c.l.b16 %v3343
    %v3376 = vunpack.c.l.b16 %v3344
    %v3377 = vpack.c.b16 %v3362, %v3361
    %v3378 = vpack.c.b16 %v3364, %v3363
    %v3379 = vpack.c.b16 %v3366, %v3365
    %v3380 = vpack.c.b16 %v3368, %v3367
    %v3381 = vpack.c.b16 %v3370, %v3369
    %v3382 = vpack.c.b16 %v3372, %v3371
    %v3383 = vpack.c.b16 %v3374, %v3373
    %v3384 = vpack.c.b16 %v3376, %v3375
    %3393 = vmatprep.subr.bf16.mxu0 0
    %3394 = vmatpush1.bf16.msra.mxu0 %v3377
    %3395 = vmatprep.subr.bf16.mxu0 0
    %3396 = vmatpush1.bf16.msra.mxu0 %v3378
    %3397 = vmatprep.subr.bf16.mxu0 0
    %3398 = vmatpush1.bf16.msra.mxu0 %v3379
    %3399 = vmatprep.subr.bf16.mxu0 0
    %3400 = vmatpush1.bf16.msra.mxu0 %v3380
    %3401 = vmatprep.subr.bf16.mxu0 0
    %3402 = vmatpush1.bf16.msra.mxu0 %v3381
    %3403 = vmatprep.subr.bf16.mxu0 0
    %3404 = vmatpush1.bf16.msra.mxu0 %v3382
    %3405 = vmatprep.subr.bf16.mxu0 0
    %3406 = vmatpush1.bf16.msra.mxu0 %v3383
    %3407 = vmatprep.subr.bf16.mxu0 0
    %3408 = vmatpush1.bf16.msra.mxu0 %v3384
    %3409 = vmatprep.subr.bf16.mxu0 0
    %3410 = vmatpush1.bf16.msra.mxu0 0
    %3411 = vmatprep.subr.bf16.mxu0 0
    %3412 = vmatpush1.bf16.msra.mxu0 0
    %3413 = vmatprep.subr.bf16.mxu0 0
    %3414 = vmatpush1.bf16.msra.mxu0 0
    %3415 = vmatprep.subr.bf16.mxu0 0
    %3416 = vmatpush1.bf16.msra.mxu0 0
    %3417 = vmatprep.subr.bf16.mxu0 0
    %3418 = vmatpush1.bf16.msra.mxu0 0
    %3419 = vmatprep.subr.bf16.mxu0 0
    %3420 = vmatpush1.bf16.msra.mxu0 0
    %3421 = vmatprep.subr.bf16.mxu0 0
    %3422 = vmatpush1.bf16.msra.mxu0 0
    %3423 = vmatprep.subr.bf16.mxu0 0
    %3424 = vmatpush1.bf16.msra.mxu0 0
    %3425 = vmatprep.mubr.bf16.mxu0 0
    %3426 = vmatmul.mubr.bf16.gmra.mrb[0].mxu0 %v3328
    %v3427 = vpop.f32.mrb[0].mxu0
    %v3428 = vadd.f32 0.0, %v3427
    %v3429 = vpop.f32.mrb[0].mxu0
    %v3430 = vpop.f32.mrb[0].mxu0
    %v3431 = vpop.f32.mrb[0].mxu0
    %3432 = vdwg.mxu0
    %v3433 = vld [vmem:[%s5] sm:$0x1]
    %v3435 = vlaneseq
    %v3436 = vshrl.u32 %v3435, 7
    %v3437 = vsub.s32 0, %v3436
    %v3438 = vrot.slane %v3433, %v3437
    %v3440 = vmul.f32 %v3428, %v3438
    %v3441 = vld [vmem:[%s6] sm:$0x1]
    %v3443 = vlaneseq
    %v3444 = vshrl.u32 %v3443, 7
    %v3445 = vsub.s32 0, %v3444
    %v3446 = vrot.slane %v3441, %v3445
    %v3448 = vadd.f32 %v3440, %v3446
    %vm3449 = vcmp.gt.f32.partialorder %v3448, 0.0
    %v3450 = vmul.f32 %v3448, 0.01
    %v3451 = vsel %vm3449, %v3448, %v3450
    %v3452 = vld [vmem:[%s7] sm:$0x1]
    %v3454 = vlaneseq
    %v3455 = vshrl.u32 %v3454, 7
    %v3456 = vsub.s32 0, %v3455
    %v3457 = vrot.slane %v3452, %v3456
    %v3459 = vmul.f32 %v3451, %v3457
    %vm3460 = vcmask 1041408
    %v3461 = vsel %vm3460, %v3459, 0.0
    %3462 = vadd.xlane.f32.xlu0 %v3461
    %v3463 = vpop.xlane.xlu0 %3462
    %v3464 = vld [vmem:[#allocation3] sm:$0x1]
    %v3466 = vlaneseq
    %v3467 = vshrl.u32 %v3466, 7
    %v3468 = vsub.s32 0, %v3467
    %v3469 = vrot.slane %v3464, %v3468
    %v3471 = vadd.f32 %v3463, %v3469
    %3473 = vset.pattern.permute.xlu0 0
    %3474 = vperm.xlu0 %3473, %v3471
    %v3475 = vpop.permute.xlu0 %3474
    %3477 = vst [vmem:[%s9] sm:$0x3] %v3475
    // Predicated region
    $region42: #{cnn8_forward.1} parent=1 // pred_check
      _
    $region43: #{cnn8_forward.1} parent=1 // pred_check_branch
      %3479 = sbr.rel (0) target = $region45
    $region44: #{cnn8_forward.1} parent=1 // pred_region
      _
    $region45: #{cnn8_forward.1} parent=1 // pred_fallthru
      _
    // Predicated region
    $region46: #{cnn8_forward.1} parent=1 // pred_check
      _
    $region47: #{cnn8_forward.1} parent=1 // pred_check_branch
      %3481 = sbr.rel (0) target = $region49
    $region48: #{cnn8_forward.1} parent=1 // pred_region
      _
    $region49: #{cnn8_forward.1} parent=1 // pred_fallthru
      _
    %3482 = vsyncpa [#allocation5], 1

</llo_original>
